<compile_context>
chip_gen: v5e
topology: v5e:2x2
jax: 0.10.0
libtpu: 0.0.40
codegen_flags: <defaults>
</compile_context>

<pallas_src>
import functools

import numpy as np
import jax
import jax.numpy as jnp
from jax.experimental import pallas as pl
from jax.experimental.pallas import tpu as pltpu


# ----------------------------------------------------------------------------
# Fused kernel
# ----------------------------------------------------------------------------
def _lenet5_kernel(x_ref, w1_ref, b1_ref, w2_ref, b2_ref, wf1_ref, bf1_ref,
                   wf2_ref, bf2_ref, wf3_ref, bf3_ref, out_ref,
                   c1_ref, p1_ref, y2_ref, p2_ref, *, batch):
    f32 = jnp.float32
    R = batch * 32                      # physical rows of every activation tile

    def pool_lanes(a):
        # out[:, l] = max(a[:, l], a[:, l+1]); valid values land on even-w lanes.
        shifted = jnp.concatenate([a[:, 1:], a[:, -1:]], axis=1)
        return jnp.maximum(a, shifted)

    # Zero scratch so shifted row reads into the over-allocated tails are
    # well-defined (they only ever feed garbage rows, but keep them finite).
    c1_ref[...] = jnp.zeros(c1_ref.shape, f32)
    p1_ref[...] = jnp.zeros(p1_ref.shape, f32)
    y2_ref[...] = jnp.zeros(y2_ref.shape, f32)
    p2_ref[...] = jnp.zeros(p2_ref.shape, f32)

    # ---- conv1 (3->6, 5x5) + bias + ReLU ---------------------------------
    # input lanes: c*32 + w     output lanes: oc*28 + ow     row shift: i
    acc = jnp.zeros((R, 168), f32)
    for i in range(5):
        acc = acc + jnp.dot(x_ref[pl.ds(i, R), :], w1_ref[i],
                            preferred_element_type=f32)
    c1_ref[pl.ds(0, R), :] = jnp.maximum(acc + b1_ref[...], 0.0)

    # ---- maxpool 2x2: valid at rows b*32 + 2*oh, lanes oc*28 + 2*ow -------
    rmax = jnp.maximum(c1_ref[pl.ds(0, R), :], c1_ref[pl.ds(1, R), :])
    p1_ref[pl.ds(0, R), :] = pool_lanes(rmax)

    # ---- conv2 (6->16, 5x5) + bias + ReLU --------------------------------
    # input lanes: ic*28 + 2*w  output lanes: oc*10 + ow      row shift: 2*i
    acc = jnp.zeros((R, 160), f32)
    for i in range(5):
        acc = acc + jnp.dot(p1_ref[pl.ds(2 * i, R), :], w2_ref[i],
                            preferred_element_type=f32)
    y2_ref[pl.ds(0, R), :] = jnp.maximum(acc + b2_ref[...], 0.0)

    # ---- maxpool 2x2: valid at rows b*32 + 4*r, lanes oc*10 + 2*w ---------
    rmax = jnp.maximum(y2_ref[pl.ds(0, R), :], y2_ref[pl.ds(2, R), :])
    p2_ref[pl.ds(0, R), :] = pool_lanes(rmax)

    # ---- fc1: a 5x5 "conv" down to 120 features (row shift 4*i) + ReLU ----
    acc = jnp.zeros((R, 120), f32)
    for i in range(5):
        acc = acc + jnp.dot(p2_ref[pl.ds(4 * i, R), :], wf1_ref[i],
                            preferred_element_type=f32)
    y = jnp.maximum(acc + bf1_ref[...], 0.0)

    # ---- fc2 + ReLU, fc3 (no ReLU); row-wise, garbage rows ride along -----
    y = jnp.maximum(jnp.dot(y, wf2_ref[...], preferred_element_type=f32)
                    + bf2_ref[...], 0.0)
    y = jnp.dot(y, wf3_ref[...], preferred_element_type=f32) + bf3_ref[...]

    # Batch b's result lives at physical row b*32; output is 128-lane dense.
    for b in range(batch):
        out_ref[pl.ds(b, 1), :] = y[b * 32:b * 32 + 1, :]


# ----------------------------------------------------------------------------
# Wrapper
# ----------------------------------------------------------------------------
def lenet5_forward(x, wp):
    """x: (B, 3, 32, 32) float32; wp: packed params from prepare_params."""
    B = x.shape[0]
    assert x.shape[1:] == (3, 32, 32), x.shape
    R = B * 32
    # Input layout prep: rows = (b, h), lanes = c*32 + w, zero-pad to (R+8, 128).
    x0 = jnp.transpose(x.astype(jnp.float32), (0, 2, 1, 3)).reshape(R, 96)
    x0 = jnp.pad(x0, ((0, 8), (0, 32)))

    out = pl.pallas_call(
        functools.partial(_lenet5_kernel, batch=B),
        out_shape=jax.ShapeDtypeStruct((B, 128), jnp.float32),
        grid=(1,),
        in_specs=[
            pl.BlockSpec((R + 8, 128), lambda i: (0, 0)),       # x (packed)
            pl.BlockSpec((5, 128, 168), lambda i: (0, 0, 0)),   # conv1 W_i
            pl.BlockSpec((1, 168), lambda i: (0, 0)),           # conv1 bias
            pl.BlockSpec((5, 168, 160), lambda i: (0, 0, 0)),   # conv2 W_i
            pl.BlockSpec((1, 160), lambda i: (0, 0)),           # conv2 bias
            pl.BlockSpec((5, 160, 120), lambda i: (0, 0, 0)),   # fc1 W_i
            pl.BlockSpec((1, 120), lambda i: (0, 0)),           # fc1 bias
            pl.BlockSpec((120, 84), lambda i: (0, 0)),          # fc2 W
            pl.BlockSpec((1, 84), lambda i: (0, 0)),            # fc2 bias
            pl.BlockSpec((84, 128), lambda i: (0, 0)),          # fc3 W (padded)
            pl.BlockSpec((1, 128), lambda i: (0, 0)),           # fc3 bias (padded)
        ],
        out_specs=pl.BlockSpec((B, 128), lambda i: (0, 0)),
        scratch_shapes=[
            pltpu.VMEM((R + 8, 168), jnp.float32),   # conv1 output
            pltpu.VMEM((R + 8, 168), jnp.float32),   # pool1 output
            pltpu.VMEM((R + 8, 160), jnp.float32),   # conv2 output
            pltpu.VMEM((R + 16, 160), jnp.float32),  # pool2 output
        ],
    )(x0, wp["W1"], wp["b1"], wp["W2"], wp["b2"], wp["Wf1"], wp["bf1"],
      wp["Wf2"], wp["bf2"], wp["Wf3"], wp["bf3"])
    return out[:, :10]


# ----------------------------------------------------------------------------
# Parameters (deterministic, PyTorch-default-style init) + one-time packing
# ----------------------------------------------------------------------------
def init_params(key):
    ks = jax.random.split(key, 10)

    def u(k, shape, fan_in):
        bound = 1.0 / (fan_in ** 0.5)
        return jax.random.uniform(k, shape, jnp.float32, -bound, bound)

    return {
        "conv1_w": u(ks[0], (6, 3, 5, 5), 3 * 25),
        "conv1_b": u(ks[1], (6,), 3 * 25),
        "conv2_w": u(ks[2], (16, 6, 5, 5), 6 * 25),
        "conv2_b": u(ks[3], (16,), 6 * 25),
        "fc1_w": u(ks[4], (120, 400), 400),
        "fc1_b": u(ks[5], (120,), 400),
        "fc2_w": u(ks[6], (84, 120), 120),
        "fc2_b": u(ks[7], (84,), 120),
        "fc3_w": u(ks[8], (10, 84), 84),
        "fc3_b": u(ks[9], (10,), 84),
    }


def prepare_params(p):
    """Pack PyTorch-layout LeNet-5 params into the fused kernel's weight slabs.

    Each conv (and fc1, a 5x5 conv over the 16x5x5 map) becomes five
    (L_in, L_out) matrices -- one per kernel row i -- such that
        out = sum_i act[rows + shift*i, :] @ W[i]
    reproduces the convolution in the packed (channel, width) lane layout,
    including the "pooled values sit on even width positions" indexing.
    """
    f32 = jnp.float32
    conv1_w = p["conv1_w"].astype(f32)
    conv2_w = p["conv2_w"].astype(f32)
    fc1_w = p["fc1_w"].astype(f32)

    # conv1: W1[i, c*32 + (ow+j), oc*28 + ow] = conv1_w[oc, c, i, j]
    oc, c, i, j, ow = np.meshgrid(np.arange(6), np.arange(3), np.arange(5),
                                  np.arange(5), np.arange(28), indexing="ij")
    vals = conv1_w[oc.ravel(), c.ravel(), i.ravel(), j.ravel()]
    W1 = jnp.zeros((5, 128, 168), f32).at[
        i.ravel(), (c * 32 + ow + j).ravel(), (oc * 28 + ow).ravel()].set(vals)
    b1 = jnp.repeat(p["conv1_b"].astype(f32), 28).reshape(1, 168)

    # conv2: W2[i, ic*28 + 2*(ow+j), oc*10 + ow] = conv2_w[oc, ic, i, j]
    oc, ic, i, j, ow = np.meshgrid(np.arange(16), np.arange(6), np.arange(5),
                                   np.arange(5), np.arange(10), indexing="ij")
    vals = conv2_w[oc.ravel(), ic.ravel(), i.ravel(), j.ravel()]
    W2 = jnp.zeros((5, 168, 160), f32).at[
        i.ravel(), (ic * 28 + 2 * (ow + j)).ravel(),
        (oc * 10 + ow).ravel()].set(vals)
    b2 = jnp.repeat(p["conv2_b"].astype(f32), 10).reshape(1, 160)

    # fc1 as a 5x5 conv: Wf1[i, ic*10 + 2*w, n] = fc1_w[n, ic*25 + i*5 + w]
    n, ic, i, w = np.meshgrid(np.arange(120), np.arange(16), np.arange(5),
                              np.arange(5), indexing="ij")
    vals = fc1_w[n.ravel(), (ic * 25 + i * 5 + w).ravel()]
    Wf1 = jnp.zeros((5, 160, 120), f32).at[
        i.ravel(), (ic * 10 + 2 * w).ravel(), n.ravel()].set(vals)
    bf1 = p["fc1_b"].astype(f32).reshape(1, 120)

    Wf2 = p["fc2_w"].astype(f32).T                       # (120, 84), pre-transposed
    bf2 = p["fc2_b"].astype(f32).reshape(1, 84)

    # fc3 padded to 128 output lanes (lane-dense HBM store); extra lanes are 0.
    Wf3 = jnp.zeros((84, 128), f32).at[:, :10].set(p["fc3_w"].astype(f32).T)
    bf3 = jnp.zeros((1, 128), f32).at[:, :10].set(p["fc3_b"].astype(f32)[None, :])

    return {"W1": W1, "b1": b1, "W2": W2, "b2": b2,
            "Wf1": Wf1, "bf1": bf1, "Wf2": Wf2, "bf2": bf2,
            "Wf3": Wf3, "bf3": bf3}


# ----------------------------------------------------------------------------
# Plain-JAX reference (mirrors LeNet5.forward) for a correctness check
# ----------------------------------------------------------------------------
def lenet5_reference(x, p):
    hp = jax.lax.Precision.HIGHEST
    y = jax.lax.conv_general_dilated(
        x, p["conv1_w"], (1, 1), "VALID",
        dimension_numbers=("NCHW", "OIHW", "NCHW"), precision=hp)
    y = jnp.maximum(y + p["conv1_b"][None, :, None, None], 0.0)
    y = jax.lax.reduce_window(y, -jnp.inf, jax.lax.max,
                              (1, 1, 2, 2), (1, 1, 2, 2), "VALID")
    y = jax.lax.conv_general_dilated(
        y, p["conv2_w"], (1, 1), "VALID",
        dimension_numbers=("NCHW", "OIHW", "NCHW"), precision=hp)
    y = jnp.maximum(y + p["conv2_b"][None, :, None, None], 0.0)
    y = jax.lax.reduce_window(y, -jnp.inf, jax.lax.max,
                              (1, 1, 2, 2), (1, 1, 2, 2), "VALID")
    y = y.reshape(y.shape[0], 400)
    y = jnp.maximum(jnp.dot(y, p["fc1_w"].T, precision=hp) + p["fc1_b"], 0.0)
    y = jnp.maximum(jnp.dot(y, p["fc2_w"].T, precision=hp) + p["fc2_b"], 0.0)
    return jnp.dot(y, p["fc3_w"].T, precision=hp) + p["fc3_b"]


if __name__ == "__main__":
    key = jax.random.PRNGKey(0)
    k_x, k_p = jax.random.split(key)
    # LeNet-5 requires 32x32 inputs so that fc1 sees 16*5*5 features.
    x = jax.random.normal(k_x, (2, 3, 32, 32), dtype=jnp.float32)

    params = init_params(k_p)
    packed = prepare_params(params)      # one-time weight packing (not per step)

    fwd = jax.jit(lenet5_forward)
    out = jax.block_until_ready(fwd(x, packed))
    assert out.shape == (2, 10), out.shape

    ref = jax.block_until_ready(lenet5_reference(x, params))
    np.testing.assert_allclose(np.asarray(out), np.asarray(ref),
                               rtol=5e-2, atol=5e-2)
    print("KERNEL_OK")
</pallas_src>

<mosaic_0001>
module attributes {stable_mosaic.version = 11 : i64} {
  func.func @_lenet5_kernel(%arg0: i32, %arg1: memref<72x128xf32, #tpu.memory_space<vmem>>, %arg2: memref<5x128x168xf32, #tpu.memory_space<vmem>>, %arg3: memref<1x168xf32, #tpu.memory_space<vmem>>, %arg4: memref<5x168x160xf32, #tpu.memory_space<vmem>>, %arg5: memref<1x160xf32, #tpu.memory_space<vmem>>, %arg6: memref<5x160x120xf32, #tpu.memory_space<vmem>>, %arg7: memref<1x120xf32, #tpu.memory_space<vmem>>, %arg8: memref<120x84xf32, #tpu.memory_space<vmem>>, %arg9: memref<1x84xf32, #tpu.memory_space<vmem>>, %arg10: memref<84x128xf32, #tpu.memory_space<vmem>>, %arg11: memref<1x128xf32, #tpu.memory_space<vmem>>, %arg12: memref<2x128xf32, #tpu.memory_space<vmem>>, %arg13: memref<72x168xf32, #tpu.memory_space<vmem>>, %arg14: memref<72x168xf32, #tpu.memory_space<vmem>>, %arg15: memref<72x160xf32, #tpu.memory_space<vmem>>, %arg16: memref<80x160xf32, #tpu.memory_space<vmem>>) attributes {dimension_semantics = [#tpu.dimension_semantics<arbitrary>], iteration_bounds = array<i64: 1>, scalar_prefetch = 0 : i64, scratch_operands = 4 : i64, tpu.core_type = #tpu.core_type<tc>, window_params = [{pipeline_mode = #tpu.pipeline_mode<synchronous>, transform_indices = @transform_0, window_bounds = array<i64: 72, 128>}, {pipeline_mode = #tpu.pipeline_mode<synchronous>, transform_indices = @transform_1, window_bounds = array<i64: 5, 128, 168>}, {pipeline_mode = #tpu.pipeline_mode<synchronous>, transform_indices = @transform_2, window_bounds = array<i64: 1, 168>}, {pipeline_mode = #tpu.pipeline_mode<synchronous>, transform_indices = @transform_3, window_bounds = array<i64: 5, 168, 160>}, {pipeline_mode = #tpu.pipeline_mode<synchronous>, transform_indices = @transform_4, window_bounds = array<i64: 1, 160>}, {pipeline_mode = #tpu.pipeline_mode<synchronous>, transform_indices = @transform_5, window_bounds = array<i64: 5, 160, 120>}, {pipeline_mode = #tpu.pipeline_mode<synchronous>, transform_indices = @transform_6, window_bounds = array<i64: 1, 120>}, {pipeline_mode = #tpu.pipeline_mode<synchronous>, transform_indices = @transform_7, window_bounds = array<i64: 120, 84>}, {pipeline_mode = #tpu.pipeline_mode<synchronous>, transform_indices = @transform_8, window_bounds = array<i64: 1, 84>}, {pipeline_mode = #tpu.pipeline_mode<synchronous>, transform_indices = @transform_9, window_bounds = array<i64: 84, 128>}, {pipeline_mode = #tpu.pipeline_mode<synchronous>, transform_indices = @transform_10, window_bounds = array<i64: 1, 128>}, {pipeline_mode = #tpu.pipeline_mode<synchronous>, transform_indices = @transform_11, window_bounds = array<i64: 2, 128>}]} {
    %cst = arith.constant 0.000000e+00 : f32
    %0 = vector.broadcast %cst : f32 to vector<72x168xf32>
    %c0 = arith.constant 0 : index
    %c0_0 = arith.constant 0 : index
    %1 = vector.load %arg13[%c0, %c0_0] : memref<72x168xf32, #tpu.memory_space<vmem>>, vector<72x168xf32>
    tpu.vector_store %arg13[%c0, %c0_0], %0 {strides = array<i32>} : memref<72x168xf32, #tpu.memory_space<vmem>>, vector<72x168xf32>,
    %cst_1 = arith.constant 0.000000e+00 : f32
    %2 = vector.broadcast %cst_1 : f32 to vector<72x168xf32>
    %c0_2 = arith.constant 0 : index
    %c0_3 = arith.constant 0 : index
    %3 = vector.load %arg14[%c0_2, %c0_3] : memref<72x168xf32, #tpu.memory_space<vmem>>, vector<72x168xf32>
    tpu.vector_store %arg14[%c0_2, %c0_3], %2 {strides = array<i32>} : memref<72x168xf32, #tpu.memory_space<vmem>>, vector<72x168xf32>,
    %cst_4 = arith.constant 0.000000e+00 : f32
    %4 = vector.broadcast %cst_4 : f32 to vector<72x160xf32>
    %c0_5 = arith.constant 0 : index
    %c0_6 = arith.constant 0 : index
    %5 = vector.load %arg15[%c0_5, %c0_6] : memref<72x160xf32, #tpu.memory_space<vmem>>, vector<72x160xf32>
    tpu.vector_store %arg15[%c0_5, %c0_6], %4 {strides = array<i32>} : memref<72x160xf32, #tpu.memory_space<vmem>>, vector<72x160xf32>,
    %cst_7 = arith.constant 0.000000e+00 : f32
    %6 = vector.broadcast %cst_7 : f32 to vector<80x160xf32>
    %c0_8 = arith.constant 0 : index
    %c0_9 = arith.constant 0 : index
    %7 = vector.load %arg16[%c0_8, %c0_9] : memref<80x160xf32, #tpu.memory_space<vmem>>, vector<80x160xf32>
    tpu.vector_store %arg16[%c0_8, %c0_9], %6 {strides = array<i32>} : memref<80x160xf32, #tpu.memory_space<vmem>>, vector<80x160xf32>,
    %cst_10 = arith.constant 0.000000e+00 : f32
    %8 = vector.broadcast %cst_10 : f32 to vector<64x168xf32>
    %c0_11 = arith.constant 0 : index
    %c0_12 = arith.constant 0 : index
    %9 = vector.load %arg1[%c0_11, %c0_12] : memref<72x128xf32, #tpu.memory_space<vmem>>, vector<64x128xf32>
    %c0_13 = arith.constant 0 : index
    %c0_14 = arith.constant 0 : index
    %c0_15 = arith.constant 0 : index
    %10 = vector.load %arg2[%c0_13, %c0_14, %c0_15] : memref<5x128x168xf32, #tpu.memory_space<vmem>>, vector<1x128x168xf32>
    %11 = vector.shape_cast %10 : vector<1x128x168xf32> to vector<128x168xf32>
    %cst_16 = arith.constant dense<0.000000e+00> : vector<64x168xf32>
    %12 = tpu.matmul %9, %11, %cst_16 {dimension_numbers = #tpu.dot_dimension_numbers<[1], [0], [0], [1], [0, 0, 1, 1], [], []>} : vector<64x128xf32>, vector<128x168xf32>, vector<64x168xf32> -> vector<64x168xf32>
    %13 = arith.addf %8, %12 : vector<64x168xf32>
    %c1 = arith.constant 1 : index
    %c0_17 = arith.constant 0 : index
    %14 = vector.load %arg1[%c1, %c0_17] : memref<72x128xf32, #tpu.memory_space<vmem>>, vector<64x128xf32>
    %c1_18 = arith.constant 1 : index
    %c0_19 = arith.constant 0 : index
    %c0_20 = arith.constant 0 : index
    %15 = vector.load %arg2[%c1_18, %c0_19, %c0_20] : memref<5x128x168xf32, #tpu.memory_space<vmem>>, vector<1x128x168xf32>
    %16 = vector.shape_cast %15 : vector<1x128x168xf32> to vector<128x168xf32>
    %cst_21 = arith.constant dense<0.000000e+00> : vector<64x168xf32>
    %17 = tpu.matmul %14, %16, %cst_21 {dimension_numbers = #tpu.dot_dimension_numbers<[1], [0], [0], [1], [0, 0, 1, 1], [], []>} : vector<64x128xf32>, vector<128x168xf32>, vector<64x168xf32> -> vector<64x168xf32>
    %18 = arith.addf %13, %17 : vector<64x168xf32>
    %c2 = arith.constant 2 : index
    %c0_22 = arith.constant 0 : index
    %19 = vector.load %arg1[%c2, %c0_22] : memref<72x128xf32, #tpu.memory_space<vmem>>, vector<64x128xf32>
    %c2_23 = arith.constant 2 : index
    %c0_24 = arith.constant 0 : index
    %c0_25 = arith.constant 0 : index
    %20 = vector.load %arg2[%c2_23, %c0_24, %c0_25] : memref<5x128x168xf32, #tpu.memory_space<vmem>>, vector<1x128x168xf32>
    %21 = vector.shape_cast %20 : vector<1x128x168xf32> to vector<128x168xf32>
    %cst_26 = arith.constant dense<0.000000e+00> : vector<64x168xf32>
    %22 = tpu.matmul %19, %21, %cst_26 {dimension_numbers = #tpu.dot_dimension_numbers<[1], [0], [0], [1], [0, 0, 1, 1], [], []>} : vector<64x128xf32>, vector<128x168xf32>, vector<64x168xf32> -> vector<64x168xf32>
    %23 = arith.addf %18, %22 : vector<64x168xf32>
    %c3 = arith.constant 3 : index
    %c0_27 = arith.constant 0 : index
    %24 = vector.load %arg1[%c3, %c0_27] : memref<72x128xf32, #tpu.memory_space<vmem>>, vector<64x128xf32>
    %c3_28 = arith.constant 3 : index
    %c0_29 = arith.constant 0 : index
    %c0_30 = arith.constant 0 : index
    %25 = vector.load %arg2[%c3_28, %c0_29, %c0_30] : memref<5x128x168xf32, #tpu.memory_space<vmem>>, vector<1x128x168xf32>
    %26 = vector.shape_cast %25 : vector<1x128x168xf32> to vector<128x168xf32>
    %cst_31 = arith.constant dense<0.000000e+00> : vector<64x168xf32>
    %27 = tpu.matmul %24, %26, %cst_31 {dimension_numbers = #tpu.dot_dimension_numbers<[1], [0], [0], [1], [0, 0, 1, 1], [], []>} : vector<64x128xf32>, vector<128x168xf32>, vector<64x168xf32> -> vector<64x168xf32>
    %28 = arith.addf %23, %27 : vector<64x168xf32>
    %c4 = arith.constant 4 : index
    %c0_32 = arith.constant 0 : index
    %29 = vector.load %arg1[%c4, %c0_32] : memref<72x128xf32, #tpu.memory_space<vmem>>, vector<64x128xf32>
    %c4_33 = arith.constant 4 : index
    %c0_34 = arith.constant 0 : index
    %c0_35 = arith.constant 0 : index
    %30 = vector.load %arg2[%c4_33, %c0_34, %c0_35] : memref<5x128x168xf32, #tpu.memory_space<vmem>>, vector<1x128x168xf32>
    %31 = vector.shape_cast %30 : vector<1x128x168xf32> to vector<128x168xf32>
    %cst_36 = arith.constant dense<0.000000e+00> : vector<64x168xf32>
    %32 = tpu.matmul %29, %31, %cst_36 {dimension_numbers = #tpu.dot_dimension_numbers<[1], [0], [0], [1], [0, 0, 1, 1], [], []>} : vector<64x128xf32>, vector<128x168xf32>, vector<64x168xf32> -> vector<64x168xf32>
    %33 = arith.addf %28, %32 : vector<64x168xf32>
    %c0_37 = arith.constant 0 : index
    %c0_38 = arith.constant 0 : index
    %34 = vector.load %arg3[%c0_37, %c0_38] : memref<1x168xf32, #tpu.memory_space<vmem>>, vector<1x168xf32>
    %35 = vector.broadcast %34 : vector<1x168xf32> to vector<64x168xf32>
    %36 = arith.addf %33, %35 : vector<64x168xf32>
    %cst_39 = arith.constant 0.000000e+00 : f32
    %37 = vector.broadcast %cst_39 : f32 to vector<64x168xf32>
    %38 = arith.maximumf %36, %37 : vector<64x168xf32>
    %c0_40 = arith.constant 0 : index
    %c0_41 = arith.constant 0 : index
    %39 = vector.load %arg13[%c0_40, %c0_41] : memref<72x168xf32, #tpu.memory_space<vmem>>, vector<64x168xf32>
    tpu.vector_store %arg13[%c0_40, %c0_41], %38 {strides = array<i32>} : memref<72x168xf32, #tpu.memory_space<vmem>>, vector<64x168xf32>,
    %c0_42 = arith.constant 0 : index
    %c0_43 = arith.constant 0 : index
    %40 = vector.load %arg13[%c0_42, %c0_43] : memref<72x168xf32, #tpu.memory_space<vmem>>, vector<64x168xf32>
    %c1_44 = arith.constant 1 : index
    %c0_45 = arith.constant 0 : index
    %41 = vector.load %arg13[%c1_44, %c0_45] : memref<72x168xf32, #tpu.memory_space<vmem>>, vector<64x168xf32>
    %42 = arith.maximumf %40, %41 : vector<64x168xf32>
    %43 = vector.extract_strided_slice %42 {offsets = [0, 1], sizes = [64, 167], strides = [1, 1]} : vector<64x168xf32> to vector<64x167xf32>
    %44 = vector.extract_strided_slice %42 {offsets = [0, 167], sizes = [64, 1], strides = [1, 1]} : vector<64x168xf32> to vector<64x1xf32>
    %45 = tpu.concatenate %43, %44 in 1 : vector<64x167xf32>, vector<64x1xf32> -> vector<64x168xf32>
    %46 = arith.maximumf %42, %45 : vector<64x168xf32>
    %c0_46 = arith.constant 0 : index
    %c0_47 = arith.constant 0 : index
    %47 = vector.load %arg14[%c0_46, %c0_47] : memref<72x168xf32, #tpu.memory_space<vmem>>, vector<64x168xf32>
    tpu.vector_store %arg14[%c0_46, %c0_47], %46 {strides = array<i32>} : memref<72x168xf32, #tpu.memory_space<vmem>>, vector<64x168xf32>,
    %cst_48 = arith.constant 0.000000e+00 : f32
    %48 = vector.broadcast %cst_48 : f32 to vector<64x160xf32>
    %c0_49 = arith.constant 0 : index
    %c0_50 = arith.constant 0 : index
    %49 = vector.load %arg14[%c0_49, %c0_50] : memref<72x168xf32, #tpu.memory_space<vmem>>, vector<64x168xf32>
    %c0_51 = arith.constant 0 : index
    %c0_52 = arith.constant 0 : index
    %c0_53 = arith.constant 0 : index
    %50 = vector.load %arg4[%c0_51, %c0_52, %c0_53] : memref<5x168x160xf32, #tpu.memory_space<vmem>>, vector<1x168x160xf32>
    %51 = vector.shape_cast %50 : vector<1x168x160xf32> to vector<168x160xf32>
    %cst_54 = arith.constant dense<0.000000e+00> : vector<64x160xf32>
    %52 = tpu.matmul %49, %51, %cst_54 {dimension_numbers = #tpu.dot_dimension_numbers<[1], [0], [0], [1], [0, 0, 1, 1], [], []>} : vector<64x168xf32>, vector<168x160xf32>, vector<64x160xf32> -> vector<64x160xf32>
    %53 = arith.addf %48, %52 : vector<64x160xf32>
    %c2_55 = arith.constant 2 : index
    %c0_56 = arith.constant 0 : index
    %54 = vector.load %arg14[%c2_55, %c0_56] : memref<72x168xf32, #tpu.memory_space<vmem>>, vector<64x168xf32>
    %c1_57 = arith.constant 1 : index
    %c0_58 = arith.constant 0 : index
    %c0_59 = arith.constant 0 : index
    %55 = vector.load %arg4[%c1_57, %c0_58, %c0_59] : memref<5x168x160xf32, #tpu.memory_space<vmem>>, vector<1x168x160xf32>
    %56 = vector.shape_cast %55 : vector<1x168x160xf32> to vector<168x160xf32>
    %cst_60 = arith.constant dense<0.000000e+00> : vector<64x160xf32>
    %57 = tpu.matmul %54, %56, %cst_60 {dimension_numbers = #tpu.dot_dimension_numbers<[1], [0], [0], [1], [0, 0, 1, 1], [], []>} : vector<64x168xf32>, vector<168x160xf32>, vector<64x160xf32> -> vector<64x160xf32>
    %58 = arith.addf %53, %57 : vector<64x160xf32>
    %c4_61 = arith.constant 4 : index
    %c0_62 = arith.constant 0 : index
    %59 = vector.load %arg14[%c4_61, %c0_62] : memref<72x168xf32, #tpu.memory_space<vmem>>, vector<64x168xf32>
    %c2_63 = arith.constant 2 : index
    %c0_64 = arith.constant 0 : index
    %c0_65 = arith.constant 0 : index
    %60 = vector.load %arg4[%c2_63, %c0_64, %c0_65] : memref<5x168x160xf32, #tpu.memory_space<vmem>>, vector<1x168x160xf32>
    %61 = vector.shape_cast %60 : vector<1x168x160xf32> to vector<168x160xf32>
    %cst_66 = arith.constant dense<0.000000e+00> : vector<64x160xf32>
    %62 = tpu.matmul %59, %61, %cst_66 {dimension_numbers = #tpu.dot_dimension_numbers<[1], [0], [0], [1], [0, 0, 1, 1], [], []>} : vector<64x168xf32>, vector<168x160xf32>, vector<64x160xf32> -> vector<64x160xf32>
    %63 = arith.addf %58, %62 : vector<64x160xf32>
    %c6 = arith.constant 6 : index
    %c0_67 = arith.constant 0 : index
    %64 = vector.load %arg14[%c6, %c0_67] : memref<72x168xf32, #tpu.memory_space<vmem>>, vector<64x168xf32>
    %c3_68 = arith.constant 3 : index
    %c0_69 = arith.constant 0 : index
    %c0_70 = arith.constant 0 : index
    %65 = vector.load %arg4[%c3_68, %c0_69, %c0_70] : memref<5x168x160xf32, #tpu.memory_space<vmem>>, vector<1x168x160xf32>
    %66 = vector.shape_cast %65 : vector<1x168x160xf32> to vector<168x160xf32>
    %cst_71 = arith.constant dense<0.000000e+00> : vector<64x160xf32>
    %67 = tpu.matmul %64, %66, %cst_71 {dimension_numbers = #tpu.dot_dimension_numbers<[1], [0], [0], [1], [0, 0, 1, 1], [], []>} : vector<64x168xf32>, vector<168x160xf32>, vector<64x160xf32> -> vector<64x160xf32>
    %68 = arith.addf %63, %67 : vector<64x160xf32>
    %c8 = arith.constant 8 : index
    %c0_72 = arith.constant 0 : index
    %69 = vector.load %arg14[%c8, %c0_72] : memref<72x168xf32, #tpu.memory_space<vmem>>, vector<64x168xf32>
    %c4_73 = arith.constant 4 : index
    %c0_74 = arith.constant 0 : index
    %c0_75 = arith.constant 0 : index
    %70 = vector.load %arg4[%c4_73, %c0_74, %c0_75] : memref<5x168x160xf32, #tpu.memory_space<vmem>>, vector<1x168x160xf32>
    %71 = vector.shape_cast %70 : vector<1x168x160xf32> to vector<168x160xf32>
    %cst_76 = arith.constant dense<0.000000e+00> : vector<64x160xf32>
    %72 = tpu.matmul %69, %71, %cst_76 {dimension_numbers = #tpu.dot_dimension_numbers<[1], [0], [0], [1], [0, 0, 1, 1], [], []>} : vector<64x168xf32>, vector<168x160xf32>, vector<64x160xf32> -> vector<64x160xf32>
    %73 = arith.addf %68, %72 : vector<64x160xf32>
    %c0_77 = arith.constant 0 : index
    %c0_78 = arith.constant 0 : index
    %74 = vector.load %arg5[%c0_77, %c0_78] : memref<1x160xf32, #tpu.memory_space<vmem>>, vector<1x160xf32>
    %75 = vector.broadcast %74 : vector<1x160xf32> to vector<64x160xf32>
    %76 = arith.addf %73, %75 : vector<64x160xf32>
    %cst_79 = arith.constant 0.000000e+00 : f32
    %77 = vector.broadcast %cst_79 : f32 to vector<64x160xf32>
    %78 = arith.maximumf %76, %77 : vector<64x160xf32>
    %c0_80 = arith.constant 0 : index
    %c0_81 = arith.constant 0 : index
    %79 = vector.load %arg15[%c0_80, %c0_81] : memref<72x160xf32, #tpu.memory_space<vmem>>, vector<64x160xf32>
    tpu.vector_store %arg15[%c0_80, %c0_81], %78 {strides = array<i32>} : memref<72x160xf32, #tpu.memory_space<vmem>>, vector<64x160xf32>,
    %c0_82 = arith.constant 0 : index
    %c0_83 = arith.constant 0 : index
    %80 = vector.load %arg15[%c0_82, %c0_83] : memref<72x160xf32, #tpu.memory_space<vmem>>, vector<64x160xf32>
    %c2_84 = arith.constant 2 : index
    %c0_85 = arith.constant 0 : index
    %81 = vector.load %arg15[%c2_84, %c0_85] : memref<72x160xf32, #tpu.memory_space<vmem>>, vector<64x160xf32>
    %82 = arith.maximumf %80, %81 : vector<64x160xf32>
    %83 = vector.extract_strided_slice %82 {offsets = [0, 1], sizes = [64, 159], strides = [1, 1]} : vector<64x160xf32> to vector<64x159xf32>
    %84 = vector.extract_strided_slice %82 {offsets = [0, 159], sizes = [64, 1], strides = [1, 1]} : vector<64x160xf32> to vector<64x1xf32>
    %85 = tpu.concatenate %83, %84 in 1 : vector<64x159xf32>, vector<64x1xf32> -> vector<64x160xf32>
    %86 = arith.maximumf %82, %85 : vector<64x160xf32>
    %c0_86 = arith.constant 0 : index
    %c0_87 = arith.constant 0 : index
    %87 = vector.load %arg16[%c0_86, %c0_87] : memref<80x160xf32, #tpu.memory_space<vmem>>, vector<64x160xf32>
    tpu.vector_store %arg16[%c0_86, %c0_87], %86 {strides = array<i32>} : memref<80x160xf32, #tpu.memory_space<vmem>>, vector<64x160xf32>,
    %cst_88 = arith.constant 0.000000e+00 : f32
    %88 = vector.broadcast %cst_88 : f32 to vector<64x120xf32>
    %c0_89 = arith.constant 0 : index
    %c0_90 = arith.constant 0 : index
    %89 = vector.load %arg16[%c0_89, %c0_90] : memref<80x160xf32, #tpu.memory_space<vmem>>, vector<64x160xf32>
    %c0_91 = arith.constant 0 : index
    %c0_92 = arith.constant 0 : index
    %c0_93 = arith.constant 0 : index
    %90 = vector.load %arg6[%c0_91, %c0_92, %c0_93] : memref<5x160x120xf32, #tpu.memory_space<vmem>>, vector<1x160x120xf32>
    %91 = vector.shape_cast %90 : vector<1x160x120xf32> to vector<160x120xf32>
    %cst_94 = arith.constant dense<0.000000e+00> : vector<64x120xf32>
    %92 = tpu.matmul %89, %91, %cst_94 {dimension_numbers = #tpu.dot_dimension_numbers<[1], [0], [0], [1], [0, 0, 1, 1], [], []>} : vector<64x160xf32>, vector<160x120xf32>, vector<64x120xf32> -> vector<64x120xf32>
    %93 = arith.addf %88, %92 : vector<64x120xf32>
    %c4_95 = arith.constant 4 : index
    %c0_96 = arith.constant 0 : index
    %94 = vector.load %arg16[%c4_95, %c0_96] : memref<80x160xf32, #tpu.memory_space<vmem>>, vector<64x160xf32>
    %c1_97 = arith.constant 1 : index
    %c0_98 = arith.constant 0 : index
    %c0_99 = arith.constant 0 : index
    %95 = vector.load %arg6[%c1_97, %c0_98, %c0_99] : memref<5x160x120xf32, #tpu.memory_space<vmem>>, vector<1x160x120xf32>
    %96 = vector.shape_cast %95 : vector<1x160x120xf32> to vector<160x120xf32>
    %cst_100 = arith.constant dense<0.000000e+00> : vector<64x120xf32>
    %97 = tpu.matmul %94, %96, %cst_100 {dimension_numbers = #tpu.dot_dimension_numbers<[1], [0], [0], [1], [0, 0, 1, 1], [], []>} : vector<64x160xf32>, vector<160x120xf32>, vector<64x120xf32> -> vector<64x120xf32>
    %98 = arith.addf %93, %97 : vector<64x120xf32>
    %c8_101 = arith.constant 8 : index
    %c0_102 = arith.constant 0 : index
    %99 = vector.load %arg16[%c8_101, %c0_102] : memref<80x160xf32, #tpu.memory_space<vmem>>, vector<64x160xf32>
    %c2_103 = arith.constant 2 : index
    %c0_104 = arith.constant 0 : index
    %c0_105 = arith.constant 0 : index
    %100 = vector.load %arg6[%c2_103, %c0_104, %c0_105] : memref<5x160x120xf32, #tpu.memory_space<vmem>>, vector<1x160x120xf32>
    %101 = vector.shape_cast %100 : vector<1x160x120xf32> to vector<160x120xf32>
    %cst_106 = arith.constant dense<0.000000e+00> : vector<64x120xf32>
    %102 = tpu.matmul %99, %101, %cst_106 {dimension_numbers = #tpu.dot_dimension_numbers<[1], [0], [0], [1], [0, 0, 1, 1], [], []>} : vector<64x160xf32>, vector<160x120xf32>, vector<64x120xf32> -> vector<64x120xf32>
    %103 = arith.addf %98, %102 : vector<64x120xf32>
    %c12 = arith.constant 12 : index
    %c0_107 = arith.constant 0 : index
    %104 = vector.load %arg16[%c12, %c0_107] : memref<80x160xf32, #tpu.memory_space<vmem>>, vector<64x160xf32>
    %c3_108 = arith.constant 3 : index
    %c0_109 = arith.constant 0 : index
    %c0_110 = arith.constant 0 : index
    %105 = vector.load %arg6[%c3_108, %c0_109, %c0_110] : memref<5x160x120xf32, #tpu.memory_space<vmem>>, vector<1x160x120xf32>
    %106 = vector.shape_cast %105 : vector<1x160x120xf32> to vector<160x120xf32>
    %cst_111 = arith.constant dense<0.000000e+00> : vector<64x120xf32>
    %107 = tpu.matmul %104, %106, %cst_111 {dimension_numbers = #tpu.dot_dimension_numbers<[1], [0], [0], [1], [0, 0, 1, 1], [], []>} : vector<64x160xf32>, vector<160x120xf32>, vector<64x120xf32> -> vector<64x120xf32>
    %108 = arith.addf %103, %107 : vector<64x120xf32>
    %c16 = arith.constant 16 : index
    %c0_112 = arith.constant 0 : index
    %109 = vector.load %arg16[%c16, %c0_112] : memref<80x160xf32, #tpu.memory_space<vmem>>, vector<64x160xf32>
    %c4_113 = arith.constant 4 : index
    %c0_114 = arith.constant 0 : index
    %c0_115 = arith.constant 0 : index
    %110 = vector.load %arg6[%c4_113, %c0_114, %c0_115] : memref<5x160x120xf32, #tpu.memory_space<vmem>>, vector<1x160x120xf32>
    %111 = vector.shape_cast %110 : vector<1x160x120xf32> to vector<160x120xf32>
    %cst_116 = arith.constant dense<0.000000e+00> : vector<64x120xf32>
    %112 = tpu.matmul %109, %111, %cst_116 {dimension_numbers = #tpu.dot_dimension_numbers<[1], [0], [0], [1], [0, 0, 1, 1], [], []>} : vector<64x160xf32>, vector<160x120xf32>, vector<64x120xf32> -> vector<64x120xf32>
    %113 = arith.addf %108, %112 : vector<64x120xf32>
    %c0_117 = arith.constant 0 : index
    %c0_118 = arith.constant 0 : index
    %114 = vector.load %arg7[%c0_117, %c0_118] : memref<1x120xf32, #tpu.memory_space<vmem>>, vector<1x120xf32>
    %115 = vector.broadcast %114 : vector<1x120xf32> to vector<64x120xf32>
    %116 = arith.addf %113, %115 : vector<64x120xf32>
    %cst_119 = arith.constant 0.000000e+00 : f32
    %117 = vector.broadcast %cst_119 : f32 to vector<64x120xf32>
    %118 = arith.maximumf %116, %117 : vector<64x120xf32>
    %c0_120 = arith.constant 0 : index
    %c0_121 = arith.constant 0 : index
    %119 = vector.load %arg8[%c0_120, %c0_121] : memref<120x84xf32, #tpu.memory_space<vmem>>, vector<120x84xf32>
    %cst_122 = arith.constant dense<0.000000e+00> : vector<64x84xf32>
    %120 = tpu.matmul %118, %119, %cst_122 {dimension_numbers = #tpu.dot_dimension_numbers<[1], [0], [0], [1], [0, 0, 1, 1], [], []>} : vector<64x120xf32>, vector<120x84xf32>, vector<64x84xf32> -> vector<64x84xf32>
    %c0_123 = arith.constant 0 : index
    %c0_124 = arith.constant 0 : index
    %121 = vector.load %arg9[%c0_123, %c0_124] : memref<1x84xf32, #tpu.memory_space<vmem>>, vector<1x84xf32>
    %122 = vector.broadcast %121 : vector<1x84xf32> to vector<64x84xf32>
    %123 = arith.addf %120, %122 : vector<64x84xf32>
    %cst_125 = arith.constant 0.000000e+00 : f32
    %124 = vector.broadcast %cst_125 : f32 to vector<64x84xf32>
    %125 = arith.maximumf %123, %124 : vector<64x84xf32>
    %c0_126 = arith.constant 0 : index
    %c0_127 = arith.constant 0 : index
    %126 = vector.load %arg10[%c0_126, %c0_127] : memref<84x128xf32, #tpu.memory_space<vmem>>, vector<84x128xf32>
    %cst_128 = arith.constant dense<0.000000e+00> : vector<64x128xf32>
    %127 = tpu.matmul %125, %126, %cst_128 {dimension_numbers = #tpu.dot_dimension_numbers<[1], [0], [0], [1], [0, 0, 1, 1], [], []>} : vector<64x84xf32>, vector<84x128xf32>, vector<64x128xf32> -> vector<64x128xf32>
    %c0_129 = arith.constant 0 : index
    %c0_130 = arith.constant 0 : index
    %128 = vector.load %arg11[%c0_129, %c0_130] : memref<1x128xf32, #tpu.memory_space<vmem>>, vector<1x128xf32>
    %129 = vector.broadcast %128 : vector<1x128xf32> to vector<64x128xf32>
    %130 = arith.addf %127, %129 : vector<64x128xf32>
    %131 = vector.extract_strided_slice %130 {offsets = [0, 0], sizes = [1, 128], strides = [1, 1]} : vector<64x128xf32> to vector<1x128xf32>
    %c0_131 = arith.constant 0 : index
    %c0_132 = arith.constant 0 : index
    %132 = vector.load %arg12[%c0_131, %c0_132] : memref<2x128xf32, #tpu.memory_space<vmem>>, vector<1x128xf32>
    tpu.vector_store %arg12[%c0_131, %c0_132], %131 {strides = array<i32>} : memref<2x128xf32, #tpu.memory_space<vmem>>, vector<1x128xf32>,
    %133 = vector.extract_strided_slice %130 {offsets = [32, 0], sizes = [1, 128], strides = [1, 1]} : vector<64x128xf32> to vector<1x128xf32>
    %c1_133 = arith.constant 1 : index
    %c0_134 = arith.constant 0 : index
    %134 = vector.load %arg12[%c1_133, %c0_134] : memref<2x128xf32, #tpu.memory_space<vmem>>, vector<1x128xf32>
    tpu.vector_store %arg12[%c1_133, %c0_134], %133 {strides = array<i32>} : memref<2x128xf32, #tpu.memory_space<vmem>>, vector<1x128xf32>,
    return
  }
  func.func @transform_0(%arg0: i32) -> (i32, i32) {
    %c0_i32 = arith.constant 0 : i32
    %c0_i32_0 = arith.constant 0 : i32
    %c0_i32_1 = arith.constant 0 : i32
    return %c0_i32, %c0_i32_0 : i32, i32
  }
  func.func @transform_1(%arg0: i32) -> (i32, i32, i32) {
    %c0_i32 = arith.constant 0 : i32
    %c0_i32_0 = arith.constant 0 : i32
    %c0_i32_1 = arith.constant 0 : i32
    %c0_i32_2 = arith.constant 0 : i32
    return %c0_i32, %c0_i32_0, %c0_i32_1 : i32, i32, i32
  }
  func.func @transform_2(%arg0: i32) -> (i32, i32) {
    %c0_i32 = arith.constant 0 : i32
    %c0_i32_0 = arith.constant 0 : i32
    %c0_i32_1 = arith.constant 0 : i32
    return %c0_i32, %c0_i32_0 : i32, i32
  }
  func.func @transform_3(%arg0: i32) -> (i32, i32, i32) {
    %c0_i32 = arith.constant 0 : i32
    %c0_i32_0 = arith.constant 0 : i32
    %c0_i32_1 = arith.constant 0 : i32
    %c0_i32_2 = arith.constant 0 : i32
    return %c0_i32, %c0_i32_0, %c0_i32_1 : i32, i32, i32
  }
  func.func @transform_4(%arg0: i32) -> (i32, i32) {
    %c0_i32 = arith.constant 0 : i32
    %c0_i32_0 = arith.constant 0 : i32
    %c0_i32_1 = arith.constant 0 : i32
    return %c0_i32, %c0_i32_0 : i32, i32
  }
  func.func @transform_5(%arg0: i32) -> (i32, i32, i32) {
    %c0_i32 = arith.constant 0 : i32
    %c0_i32_0 = arith.constant 0 : i32
    %c0_i32_1 = arith.constant 0 : i32
    %c0_i32_2 = arith.constant 0 : i32
    return %c0_i32, %c0_i32_0, %c0_i32_1 : i32, i32, i32
  }
  func.func @transform_6(%arg0: i32) -> (i32, i32) {
    %c0_i32 = arith.constant 0 : i32
    %c0_i32_0 = arith.constant 0 : i32
    %c0_i32_1 = arith.constant 0 : i32
    return %c0_i32, %c0_i32_0 : i32, i32
  }
  func.func @transform_7(%arg0: i32) -> (i32, i32) {
    %c0_i32 = arith.constant 0 : i32
    %c0_i32_0 = arith.constant 0 : i32
    %c0_i32_1 = arith.constant 0 : i32
    return %c0_i32, %c0_i32_0 : i32, i32
  }
  func.func @transform_8(%arg0: i32) -> (i32, i32) {
    %c0_i32 = arith.constant 0 : i32
    %c0_i32_0 = arith.constant 0 : i32
    %c0_i32_1 = arith.constant 0 : i32
    return %c0_i32, %c0_i32_0 : i32, i32
  }
  func.func @transform_9(%arg0: i32) -> (i32, i32) {
    %c0_i32 = arith.constant 0 : i32
    %c0_i32_0 = arith.constant 0 : i32
    %c0_i32_1 = arith.constant 0 : i32
    return %c0_i32, %c0_i32_0 : i32, i32
  }
  func.func @transform_10(%arg0: i32) -> (i32, i32) {
    %c0_i32 = arith.constant 0 : i32
    %c0_i32_0 = arith.constant 0 : i32
    %c0_i32_1 = arith.constant 0 : i32
    return %c0_i32, %c0_i32_0 : i32, i32
  }
  func.func @transform_11(%arg0: i32) -> (i32, i32) {
    %c0_i32 = arith.constant 0 : i32
    %c0_i32_0 = arith.constant 0 : i32
    %c0_i32_1 = arith.constant 0 : i32
    return %c0_i32, %c0_i32_0 : i32, i32
  }
}

</mosaic_0001>

<llo_original>
// kernel: lenet5_forward.1
$region0: #{lenet5_forward.1}
  #allocation0 [shape = 'u32[]', space=smem, size = 0x4, offset = 0x4, fixed_abs, tag = 'smem constant byte address 0x4 - core index']
  #allocation1 [shape = 'u32[72,128]{1,0:T(1,128)}', space=vmem, size = 0x9000, scoped, tag = 'internal scratch']
  #allocation2 [shape = 'f32[72,168]{1,0:T(8,128)}', space=vmem, size = 0x12000, scoped, tag = 'scratch operand']
  #allocation3 [shape = 'f32[72,168]{1,0:T(8,128)}', space=vmem, size = 0x12000, scoped, tag = 'scratch operand']
  #allocation4 [shape = 'f32[72,160]{1,0:T(8,128)}', space=vmem, size = 0x12000, scoped, tag = 'scratch operand']
  #allocation5 [shape = 'f32[80,160]{1,0:T(8,128)}', space=vmem, size = 0x14000, scoped, tag = 'scratch operand']
  %s0 = inlined_call_operand.vmem [shape: f32[72,128], index: 0, kind: input, shape index: {}]
  %s1 = inlined_call_operand.vmem [shape: f32[5,128,168], index: 1, kind: input, shape index: {}]
  %s2 = inlined_call_operand.vmem [shape: f32[1,168], index: 2, kind: input, shape index: {}]
  %s3 = inlined_call_operand.vmem [shape: f32[5,168,160], index: 3, kind: input, shape index: {}]
  %s4 = inlined_call_operand.vmem [shape: f32[1,160], index: 4, kind: input, shape index: {}]
  %s5 = inlined_call_operand.vmem [shape: f32[5,160,120], index: 5, kind: input, shape index: {}]
  %s6 = inlined_call_operand.vmem [shape: f32[1,120], index: 6, kind: input, shape index: {}]
  %s7 = inlined_call_operand.vmem [shape: f32[120,84], index: 7, kind: input, shape index: {}]
  %s8 = inlined_call_operand.vmem [shape: f32[1,84], index: 8, kind: input, shape index: {}]
  %s9 = inlined_call_operand.vmem [shape: f32[84,128], index: 9, kind: input, shape index: {}]
  %s10 = inlined_call_operand.vmem [shape: f32[1,128], index: 10, kind: input, shape index: {}]
  %s11 = inlined_call_operand.hbm [shape: f32[2,128], index: 11, kind: output, shape index: {}]
  %s12 = sld [smem:[#allocation0]]
  $region54: #{lenet5_forward.1} parent=0
    _
  %s14 = ssub.s32 1, %s12
  %s15 = scalar_select 0, %s14, %s12
  $region1: #{lenet5_forward.1} parent=0
    #allocation6 [shape = 'u8[1024]{0}', space=vmem, size = 0x400, scoped, tag = 'output window, operand 0, single buffered']
    #allocation7 [shape = 's32[1]{0}', space=sflag, size = 0x4, scoped, tag = 'scoped memory for lenet5_forward.1']
    %16 = vsyncpa [#allocation7], 0
    // Predicated region
    $region2: #{lenet5_forward.1} parent=1 // pred_check
      _
    $region3: #{lenet5_forward.1} parent=1 // pred_check_branch
      %18 = sbr.rel (0) target = $region5
    $region4: #{lenet5_forward.1} parent=1 // pred_region
      _
    $region5: #{lenet5_forward.1} parent=1 // pred_fallthru
      _
    // Predicated region
    $region6: #{lenet5_forward.1} parent=1 // pred_check
      _
    $region7: #{lenet5_forward.1} parent=1 // pred_check_branch
      %20 = sbr.rel (0) target = $region9
    $region8: #{lenet5_forward.1} parent=1 // pred_region
      _
    $region9: #{lenet5_forward.1} parent=1 // pred_fallthru
      _
    // Predicated region
    $region10: #{lenet5_forward.1} parent=1 // pred_check
      _
    $region11: #{lenet5_forward.1} parent=1 // pred_check_branch
      %22 = sbr.rel (0) target = $region13
    $region12: #{lenet5_forward.1} parent=1 // pred_region
      _
    $region13: #{lenet5_forward.1} parent=1 // pred_fallthru
      _
    // Predicated region
    $region14: #{lenet5_forward.1} parent=1 // pred_check
      _
    $region15: #{lenet5_forward.1} parent=1 // pred_check_branch
      %24 = sbr.rel (0) target = $region17
    $region16: #{lenet5_forward.1} parent=1 // pred_region
      _
    $region17: #{lenet5_forward.1} parent=1 // pred_fallthru
      _
    // Predicated region
    $region18: #{lenet5_forward.1} parent=1 // pred_check
      _
    $region19: #{lenet5_forward.1} parent=1 // pred_check_branch
      %26 = sbr.rel (0) target = $region21
    $region20: #{lenet5_forward.1} parent=1 // pred_region
      _
    $region21: #{lenet5_forward.1} parent=1 // pred_fallthru
      _
    // Predicated region
    $region22: #{lenet5_forward.1} parent=1 // pred_check
      _
    $region23: #{lenet5_forward.1} parent=1 // pred_check_branch
      %28 = sbr.rel (0) target = $region25
    $region24: #{lenet5_forward.1} parent=1 // pred_region
      _
    $region25: #{lenet5_forward.1} parent=1 // pred_fallthru
      _
    // Predicated region
    $region26: #{lenet5_forward.1} parent=1 // pred_check
      _
    $region27: #{lenet5_forward.1} parent=1 // pred_check_branch
      %30 = sbr.rel (0) target = $region29
    $region28: #{lenet5_forward.1} parent=1 // pred_region
      _
    $region29: #{lenet5_forward.1} parent=1 // pred_fallthru
      _
    // Predicated region
    $region30: #{lenet5_forward.1} parent=1 // pred_check
      _
    $region31: #{lenet5_forward.1} parent=1 // pred_check_branch
      %32 = sbr.rel (0) target = $region33
    $region32: #{lenet5_forward.1} parent=1 // pred_region
      _
    $region33: #{lenet5_forward.1} parent=1 // pred_fallthru
      _
    // Predicated region
    $region34: #{lenet5_forward.1} parent=1 // pred_check
      _
    $region35: #{lenet5_forward.1} parent=1 // pred_check_branch
      %34 = sbr.rel (0) target = $region37
    $region36: #{lenet5_forward.1} parent=1 // pred_region
      _
    $region37: #{lenet5_forward.1} parent=1 // pred_fallthru
      _
    // Predicated region
    $region38: #{lenet5_forward.1} parent=1 // pred_check
      _
    $region39: #{lenet5_forward.1} parent=1 // pred_check_branch
      %36 = sbr.rel (0) target = $region41
    $region40: #{lenet5_forward.1} parent=1 // pred_region
      _
    $region41: #{lenet5_forward.1} parent=1 // pred_fallthru
      _
    // Predicated region
    $region42: #{lenet5_forward.1} parent=1 // pred_check
      _
    $region43: #{lenet5_forward.1} parent=1 // pred_check_branch
      %38 = sbr.rel (0) target = $region45
    $region44: #{lenet5_forward.1} parent=1 // pred_region
      _
    $region45: #{lenet5_forward.1} parent=1 // pred_fallthru
      _
    %39 = vst [vmem:[#allocation2] sm:$0xff] 0.0
    %vm40 = vcmask 326656
    %41 = vst.msk [vmem:[#allocation2 + $0x8] sm:$0xff] %vm40, 0.0
    %42 = vst [vmem:[#allocation2 + $0x10] sm:$0xff] 0.0
    %43 = vst.msk [vmem:[#allocation2 + $0x18] sm:$0xff] %vm40, 0.0
    %44 = vst [vmem:[#allocation2 + $0x20] sm:$0xff] 0.0
    %45 = vst.msk [vmem:[#allocation2 + $0x28] sm:$0xff] %vm40, 0.0
    %46 = vst [vmem:[#allocation2 + $0x30] sm:$0xff] 0.0
    %47 = vst.msk [vmem:[#allocation2 + $0x38] sm:$0xff] %vm40, 0.0
    %48 = vst [vmem:[#allocation2 + $0x40] sm:$0xff] 0.0
    %49 = vst.msk [vmem:[#allocation2 + $0x48] sm:$0xff] %vm40, 0.0
    %50 = vst [vmem:[#allocation2 + $0x50] sm:$0xff] 0.0
    %51 = vst.msk [vmem:[#allocation2 + $0x58] sm:$0xff] %vm40, 0.0
    %52 = vst [vmem:[#allocation2 + $0x60] sm:$0xff] 0.0
    %53 = vst.msk [vmem:[#allocation2 + $0x68] sm:$0xff] %vm40, 0.0
    %54 = vst [vmem:[#allocation2 + $0x70] sm:$0xff] 0.0
    %55 = vst.msk [vmem:[#allocation2 + $0x78] sm:$0xff] %vm40, 0.0
    %56 = vst [vmem:[#allocation2 + $0x80] sm:$0xff] 0.0
    %57 = vst.msk [vmem:[#allocation2 + $0x88] sm:$0xff] %vm40, 0.0
    %58 = vst [vmem:[#allocation3] sm:$0xff] 0.0
    %59 = vst.msk [vmem:[#allocation3 + $0x8] sm:$0xff] %vm40, 0.0
    %60 = vst [vmem:[#allocation3 + $0x10] sm:$0xff] 0.0
    %61 = vst.msk [vmem:[#allocation3 + $0x18] sm:$0xff] %vm40, 0.0
    %62 = vst [vmem:[#allocation3 + $0x20] sm:$0xff] 0.0
    %63 = vst.msk [vmem:[#allocation3 + $0x28] sm:$0xff] %vm40, 0.0
    %64 = vst [vmem:[#allocation3 + $0x30] sm:$0xff] 0.0
    %65 = vst.msk [vmem:[#allocation3 + $0x38] sm:$0xff] %vm40, 0.0
    %66 = vst [vmem:[#allocation3 + $0x40] sm:$0xff] 0.0
    %67 = vst.msk [vmem:[#allocation3 + $0x48] sm:$0xff] %vm40, 0.0
    %68 = vst [vmem:[#allocation3 + $0x50] sm:$0xff] 0.0
    %69 = vst.msk [vmem:[#allocation3 + $0x58] sm:$0xff] %vm40, 0.0
    %70 = vst [vmem:[#allocation3 + $0x60] sm:$0xff] 0.0
    %71 = vst.msk [vmem:[#allocation3 + $0x68] sm:$0xff] %vm40, 0.0
    %72 = vst [vmem:[#allocation3 + $0x70] sm:$0xff] 0.0
    %73 = vst.msk [vmem:[#allocation3 + $0x78] sm:$0xff] %vm40, 0.0
    %74 = vst [vmem:[#allocation3 + $0x80] sm:$0xff] 0.0
    %75 = vst.msk [vmem:[#allocation3 + $0x88] sm:$0xff] %vm40, 0.0
    %76 = vst [vmem:[#allocation4] sm:$0xff] 0.0
    %vm77 = vcmask 261120
    %78 = vst.msk [vmem:[#allocation4 + $0x8] sm:$0xff] %vm77, 0.0
    %79 = vst [vmem:[#allocation4 + $0x10] sm:$0xff] 0.0
    %80 = vst.msk [vmem:[#allocation4 + $0x18] sm:$0xff] %vm77, 0.0
    %81 = vst [vmem:[#allocation4 + $0x20] sm:$0xff] 0.0
    %82 = vst.msk [vmem:[#allocation4 + $0x28] sm:$0xff] %vm77, 0.0
    %83 = vst [vmem:[#allocation4 + $0x30] sm:$0xff] 0.0
    %84 = vst.msk [vmem:[#allocation4 + $0x38] sm:$0xff] %vm77, 0.0
    %85 = vst [vmem:[#allocation4 + $0x40] sm:$0xff] 0.0
    %86 = vst.msk [vmem:[#allocation4 + $0x48] sm:$0xff] %vm77, 0.0
    %87 = vst [vmem:[#allocation4 + $0x50] sm:$0xff] 0.0
    %88 = vst.msk [vmem:[#allocation4 + $0x58] sm:$0xff] %vm77, 0.0
    %89 = vst [vmem:[#allocation4 + $0x60] sm:$0xff] 0.0
    %90 = vst.msk [vmem:[#allocation4 + $0x68] sm:$0xff] %vm77, 0.0
    %91 = vst [vmem:[#allocation4 + $0x70] sm:$0xff] 0.0
    %92 = vst.msk [vmem:[#allocation4 + $0x78] sm:$0xff] %vm77, 0.0
    %93 = vst [vmem:[#allocation4 + $0x80] sm:$0xff] 0.0
    %94 = vst.msk [vmem:[#allocation4 + $0x88] sm:$0xff] %vm77, 0.0
    %95 = vst [vmem:[#allocation5] sm:$0xff] 0.0
    %96 = vst.msk [vmem:[#allocation5 + $0x8] sm:$0xff] %vm77, 0.0
    %97 = vst [vmem:[#allocation5 + $0x10] sm:$0xff] 0.0
    %98 = vst.msk [vmem:[#allocation5 + $0x18] sm:$0xff] %vm77, 0.0
    %99 = vst [vmem:[#allocation5 + $0x20] sm:$0xff] 0.0
    %100 = vst.msk [vmem:[#allocation5 + $0x28] sm:$0xff] %vm77, 0.0
    %101 = vst [vmem:[#allocation5 + $0x30] sm:$0xff] 0.0
    %102 = vst.msk [vmem:[#allocation5 + $0x38] sm:$0xff] %vm77, 0.0
    %103 = vst [vmem:[#allocation5 + $0x40] sm:$0xff] 0.0
    %104 = vst.msk [vmem:[#allocation5 + $0x48] sm:$0xff] %vm77, 0.0
    %105 = vst [vmem:[#allocation5 + $0x50] sm:$0xff] 0.0
    %106 = vst.msk [vmem:[#allocation5 + $0x58] sm:$0xff] %vm77, 0.0
    %107 = vst [vmem:[#allocation5 + $0x60] sm:$0xff] 0.0
    %108 = vst.msk [vmem:[#allocation5 + $0x68] sm:$0xff] %vm77, 0.0
    %109 = vst [vmem:[#allocation5 + $0x70] sm:$0xff] 0.0
    %110 = vst.msk [vmem:[#allocation5 + $0x78] sm:$0xff] %vm77, 0.0
    %111 = vst [vmem:[#allocation5 + $0x80] sm:$0xff] 0.0
    %112 = vst.msk [vmem:[#allocation5 + $0x88] sm:$0xff] %vm77, 0.0
    %113 = vst [vmem:[#allocation5 + $0x90] sm:$0xff] 0.0
    %114 = vst.msk [vmem:[#allocation5 + $0x98] sm:$0xff] %vm77, 0.0
    %v115 = vld [vmem:[%s0] sm:$0xff]
    %v116 = vld [vmem:[%s0 + $0x8] sm:$0xff]
    %v117 = vld [vmem:[%s0 + $0x10] sm:$0xff]
    %v118 = vld [vmem:[%s0 + $0x18] sm:$0xff]
    %v119 = vld [vmem:[%s0 + $0x20] sm:$0xff]
    %v120 = vld [vmem:[%s0 + $0x28] sm:$0xff]
    %v121 = vld [vmem:[%s0 + $0x30] sm:$0xff]
    %v122 = vld [vmem:[%s0 + $0x38] sm:$0xff]
    %v123 = vld [vmem:[%s1] sm:$0xff]
    %v124 = vld [vmem:[%s1 + $0x8] sm:$0xff]
    %v125 = vld [vmem:[%s1 + $0x10] sm:$0xff]
    %v126 = vld [vmem:[%s1 + $0x18] sm:$0xff]
    %v127 = vld [vmem:[%s1 + $0x20] sm:$0xff]
    %v128 = vld [vmem:[%s1 + $0x28] sm:$0xff]
    %v129 = vld [vmem:[%s1 + $0x30] sm:$0xff]
    %v130 = vld [vmem:[%s1 + $0x38] sm:$0xff]
    %v131 = vld [vmem:[%s1 + $0x40] sm:$0xff]
    %v132 = vld [vmem:[%s1 + $0x48] sm:$0xff]
    %v133 = vld [vmem:[%s1 + $0x50] sm:$0xff]
    %v134 = vld [vmem:[%s1 + $0x58] sm:$0xff]
    %v135 = vld [vmem:[%s1 + $0x60] sm:$0xff]
    %v136 = vld [vmem:[%s1 + $0x68] sm:$0xff]
    %v137 = vld [vmem:[%s1 + $0x70] sm:$0xff]
    %v138 = vld [vmem:[%s1 + $0x78] sm:$0xff]
    %v139 = vld [vmem:[%s1 + $0x80] sm:$0xff]
    %v140 = vld [vmem:[%s1 + $0x88] sm:$0xff]
    %v141 = vld [vmem:[%s1 + $0x90] sm:$0xff]
    %v142 = vld [vmem:[%s1 + $0x98] sm:$0xff]
    %v143 = vld [vmem:[%s1 + $0xa0] sm:$0xff]
    %v144 = vld [vmem:[%s1 + $0xa8] sm:$0xff]
    %v145 = vld [vmem:[%s1 + $0xb0] sm:$0xff]
    %v146 = vld [vmem:[%s1 + $0xb8] sm:$0xff]
    %v147 = vld [vmem:[%s1 + $0xc0] sm:$0xff]
    %v148 = vld [vmem:[%s1 + $0xc8] sm:$0xff]
    %v149 = vld [vmem:[%s1 + $0xd0] sm:$0xff]
    %v150 = vld [vmem:[%s1 + $0xd8] sm:$0xff]
    %v151 = vld [vmem:[%s1 + $0xe0] sm:$0xff]
    %v152 = vld [vmem:[%s1 + $0xe8] sm:$0xff]
    %v153 = vld [vmem:[%s1 + $0xf0] sm:$0xff]
    %v154 = vld [vmem:[%s1 + $0xf8] sm:$0xff]
    %v155 = vld [vmem:[%s0 + $0x1] sm:$0xff]
    %v156 = vld [vmem:[%s0 + $0x9] sm:$0xff]
    %v157 = vld [vmem:[%s0 + $0x11] sm:$0xff]
    %v158 = vld [vmem:[%s0 + $0x19] sm:$0xff]
    %v159 = vld [vmem:[%s0 + $0x21] sm:$0xff]
    %v160 = vld [vmem:[%s0 + $0x29] sm:$0xff]
    %v161 = vld [vmem:[%s0 + $0x31] sm:$0xff]
    %v162 = vld [vmem:[%s0 + $0x39] sm:$0xff]
    %s163 = scalar_lea.vmem %s1, 256
    %v164 = vld [vmem:[%s163] sm:$0xff]
    %v165 = vld [vmem:[%s163 + $0x8] sm:$0xff]
    %v166 = vld [vmem:[%s163 + $0x10] sm:$0xff]
    %v167 = vld [vmem:[%s163 + $0x18] sm:$0xff]
    %v168 = vld [vmem:[%s163 + $0x20] sm:$0xff]
    %v169 = vld [vmem:[%s163 + $0x28] sm:$0xff]
    %v170 = vld [vmem:[%s163 + $0x30] sm:$0xff]
    %v171 = vld [vmem:[%s163 + $0x38] sm:$0xff]
    %v172 = vld [vmem:[%s163 + $0x40] sm:$0xff]
    %v173 = vld [vmem:[%s163 + $0x48] sm:$0xff]
    %v174 = vld [vmem:[%s163 + $0x50] sm:$0xff]
    %v175 = vld [vmem:[%s163 + $0x58] sm:$0xff]
    %v176 = vld [vmem:[%s163 + $0x60] sm:$0xff]
    %v177 = vld [vmem:[%s163 + $0x68] sm:$0xff]
    %v178 = vld [vmem:[%s163 + $0x70] sm:$0xff]
    %v179 = vld [vmem:[%s163 + $0x78] sm:$0xff]
    %v180 = vld [vmem:[%s163 + $0x80] sm:$0xff]
    %v181 = vld [vmem:[%s163 + $0x88] sm:$0xff]
    %v182 = vld [vmem:[%s163 + $0x90] sm:$0xff]
    %v183 = vld [vmem:[%s163 + $0x98] sm:$0xff]
    %v184 = vld [vmem:[%s163 + $0xa0] sm:$0xff]
    %v185 = vld [vmem:[%s163 + $0xa8] sm:$0xff]
    %v186 = vld [vmem:[%s163 + $0xb0] sm:$0xff]
    %v187 = vld [vmem:[%s163 + $0xb8] sm:$0xff]
    %v188 = vld [vmem:[%s163 + $0xc0] sm:$0xff]
    %v189 = vld [vmem:[%s163 + $0xc8] sm:$0xff]
    %v190 = vld [vmem:[%s163 + $0xd0] sm:$0xff]
    %v191 = vld [vmem:[%s163 + $0xd8] sm:$0xff]
    %v192 = vld [vmem:[%s163 + $0xe0] sm:$0xff]
    %v193 = vld [vmem:[%s163 + $0xe8] sm:$0xff]
    %v194 = vld [vmem:[%s163 + $0xf0] sm:$0xff]
    %v195 = vld [vmem:[%s163 + $0xf8] sm:$0xff]
    %196 = vmatpush.msra.mxu0 %v194
    %197 = vmatpush.msra.mxu0 %v192
    %198 = vmatpush.msra.mxu0 %v190
    %199 = vmatpush.msra.mxu0 %v188
    %200 = vmatpush.msra.mxu0 %v186
    %201 = vmatpush.msra.mxu0 %v184
    %202 = vmatpush.msra.mxu0 %v182
    %203 = vmatpush.msra.mxu0 %v180
    %204 = vmatpush.msra.mxu0 %v178
    %205 = vmatpush.msra.mxu0 %v176
    %206 = vmatpush.msra.mxu0 %v174
    %207 = vmatpush.msra.mxu0 %v172
    %208 = vmatpush.msra.mxu0 %v170
    %209 = vmatpush.msra.mxu0 %v168
    %210 = vmatpush.msra.mxu0 %v166
    %211 = vmatpush.msra.mxu0 %v164
    %212 = vmatmul.f32.gmra.mxu0 %v155
    %v213 = vpop.f32.mrf.mxu0
    %v214 = vadd.f32 0.0, %v213
    %215 = vmatmul.f32.gmra.mxu0 %v156
    %v216 = vpop.f32.mrf.mxu0
    %v217 = vadd.f32 0.0, %v216
    %218 = vmatmul.f32.gmra.mxu0 %v157
    %v219 = vpop.f32.mrf.mxu0
    %v220 = vadd.f32 0.0, %v219
    %221 = vmatmul.f32.gmra.mxu0 %v158
    %v222 = vpop.f32.mrf.mxu0
    %v223 = vadd.f32 0.0, %v222
    %224 = vmatmul.f32.gmra.mxu0 %v159
    %v225 = vpop.f32.mrf.mxu0
    %v226 = vadd.f32 0.0, %v225
    %227 = vmatmul.f32.gmra.mxu0 %v160
    %v228 = vpop.f32.mrf.mxu0
    %v229 = vadd.f32 0.0, %v228
    %230 = vmatmul.f32.gmra.mxu0 %v161
    %v231 = vpop.f32.mrf.mxu0
    %v232 = vadd.f32 0.0, %v231
    %233 = vmatmul.f32.gmra.mxu0 %v162
    %v234 = vpop.f32.mrf.mxu0
    %v235 = vadd.f32 0.0, %v234
    %236 = vdwg.mxu0
    %237 = vmatpush.msra.mxu0 %v195
    %238 = vmatpush.msra.mxu0 %v193
    %239 = vmatpush.msra.mxu0 %v191
    %240 = vmatpush.msra.mxu0 %v189
    %241 = vmatpush.msra.mxu0 %v187
    %242 = vmatpush.msra.mxu0 %v185
    %243 = vmatpush.msra.mxu0 %v183
    %244 = vmatpush.msra.mxu0 %v181
    %245 = vmatpush.msra.mxu0 %v179
    %246 = vmatpush.msra.mxu0 %v177
    %247 = vmatpush.msra.mxu0 %v175
    %248 = vmatpush.msra.mxu0 %v173
    %249 = vmatpush.msra.mxu0 %v171
    %250 = vmatpush.msra.mxu0 %v169
    %251 = vmatpush.msra.mxu0 %v167
    %252 = vmatpush.msra.mxu0 %v165
    %253 = vmatmul.f32.gmra.mxu0 %v155
    %v254 = vpop.f32.mrf.mxu0
    %v255 = vadd.f32 0.0, %v254
    %256 = vmatmul.f32.gmra.mxu0 %v156
    %v257 = vpop.f32.mrf.mxu0
    %v258 = vadd.f32 0.0, %v257
    %259 = vmatmul.f32.gmra.mxu0 %v157
    %v260 = vpop.f32.mrf.mxu0
    %v261 = vadd.f32 0.0, %v260
    %262 = vmatmul.f32.gmra.mxu0 %v158
    %v263 = vpop.f32.mrf.mxu0
    %v264 = vadd.f32 0.0, %v263
    %265 = vmatmul.f32.gmra.mxu0 %v159
    %v266 = vpop.f32.mrf.mxu0
    %v267 = vadd.f32 0.0, %v266
    %268 = vmatmul.f32.gmra.mxu0 %v160
    %v269 = vpop.f32.mrf.mxu0
    %v270 = vadd.f32 0.0, %v269
    %271 = vmatmul.f32.gmra.mxu0 %v161
    %v272 = vpop.f32.mrf.mxu0
    %v273 = vadd.f32 0.0, %v272
    %274 = vmatmul.f32.gmra.mxu0 %v162
    %v275 = vpop.f32.mrf.mxu0
    %v276 = vadd.f32 0.0, %v275
    %277 = vdwg.mxu0
    %278 = vmatpush.msra.mxu0 %v153
    %279 = vmatpush.msra.mxu0 %v151
    %280 = vmatpush.msra.mxu0 %v149
    %281 = vmatpush.msra.mxu0 %v147
    %282 = vmatpush.msra.mxu0 %v145
    %283 = vmatpush.msra.mxu0 %v143
    %284 = vmatpush.msra.mxu0 %v141
    %285 = vmatpush.msra.mxu0 %v139
    %286 = vmatpush.msra.mxu0 %v137
    %287 = vmatpush.msra.mxu0 %v135
    %288 = vmatpush.msra.mxu0 %v133
    %289 = vmatpush.msra.mxu0 %v131
    %290 = vmatpush.msra.mxu0 %v129
    %291 = vmatpush.msra.mxu0 %v127
    %292 = vmatpush.msra.mxu0 %v125
    %293 = vmatpush.msra.mxu0 %v123
    %294 = vmatmul.f32.gmra.mxu0 %v115
    %v295 = vpop.f32.mrf.mxu0
    %v296 = vadd.f32 %v214, %v295
    %297 = vmatmul.f32.gmra.mxu0 %v116
    %v298 = vpop.f32.mrf.mxu0
    %v299 = vadd.f32 %v217, %v298
    %300 = vmatmul.f32.gmra.mxu0 %v117
    %v301 = vpop.f32.mrf.mxu0
    %v302 = vadd.f32 %v220, %v301
    %303 = vmatmul.f32.gmra.mxu0 %v118
    %v304 = vpop.f32.mrf.mxu0
    %v305 = vadd.f32 %v223, %v304
    %306 = vmatmul.f32.gmra.mxu0 %v119
    %v307 = vpop.f32.mrf.mxu0
    %v308 = vadd.f32 %v226, %v307
    %309 = vmatmul.f32.gmra.mxu0 %v120
    %v310 = vpop.f32.mrf.mxu0
    %v311 = vadd.f32 %v229, %v310
    %312 = vmatmul.f32.gmra.mxu0 %v121
    %v313 = vpop.f32.mrf.mxu0
    %v314 = vadd.f32 %v232, %v313
    %315 = vmatmul.f32.gmra.mxu0 %v122
    %v316 = vpop.f32.mrf.mxu0
    %v317 = vadd.f32 %v235, %v316
    %318 = vdwg.mxu0
    %319 = vmatpush.msra.mxu0 %v154
    %320 = vmatpush.msra.mxu0 %v152
    %321 = vmatpush.msra.mxu0 %v150
    %322 = vmatpush.msra.mxu0 %v148
    %323 = vmatpush.msra.mxu0 %v146
    %324 = vmatpush.msra.mxu0 %v144
    %325 = vmatpush.msra.mxu0 %v142
    %326 = vmatpush.msra.mxu0 %v140
    %327 = vmatpush.msra.mxu0 %v138
    %328 = vmatpush.msra.mxu0 %v136
    %329 = vmatpush.msra.mxu0 %v134
    %330 = vmatpush.msra.mxu0 %v132
    %331 = vmatpush.msra.mxu0 %v130
    %332 = vmatpush.msra.mxu0 %v128
    %333 = vmatpush.msra.mxu0 %v126
    %334 = vmatpush.msra.mxu0 %v124
    %335 = vmatmul.f32.gmra.mxu0 %v115
    %v336 = vpop.f32.mrf.mxu0
    %v337 = vadd.f32 %v255, %v336
    %338 = vmatmul.f32.gmra.mxu0 %v116
    %v339 = vpop.f32.mrf.mxu0
    %v340 = vadd.f32 %v258, %v339
    %341 = vmatmul.f32.gmra.mxu0 %v117
    %v342 = vpop.f32.mrf.mxu0
    %v343 = vadd.f32 %v261, %v342
    %344 = vmatmul.f32.gmra.mxu0 %v118
    %v345 = vpop.f32.mrf.mxu0
    %v346 = vadd.f32 %v264, %v345
    %347 = vmatmul.f32.gmra.mxu0 %v119
    %v348 = vpop.f32.mrf.mxu0
    %v349 = vadd.f32 %v267, %v348
    %350 = vmatmul.f32.gmra.mxu0 %v120
    %v351 = vpop.f32.mrf.mxu0
    %v352 = vadd.f32 %v270, %v351
    %353 = vmatmul.f32.gmra.mxu0 %v121
    %v354 = vpop.f32.mrf.mxu0
    %v355 = vadd.f32 %v273, %v354
    %356 = vmatmul.f32.gmra.mxu0 %v122
    %v357 = vpop.f32.mrf.mxu0
    %v358 = vadd.f32 %v276, %v357
    %359 = vdwg.mxu0
    %v360 = vld [vmem:[%s0 + $0x2] sm:$0xff]
    %v361 = vld [vmem:[%s0 + $0xa] sm:$0xff]
    %v362 = vld [vmem:[%s0 + $0x12] sm:$0xff]
    %v363 = vld [vmem:[%s0 + $0x1a] sm:$0xff]
    %v364 = vld [vmem:[%s0 + $0x22] sm:$0xff]
    %v365 = vld [vmem:[%s0 + $0x2a] sm:$0xff]
    %v366 = vld [vmem:[%s0 + $0x32] sm:$0xff]
    %v367 = vld [vmem:[%s0 + $0x3a] sm:$0xff]
    %s368 = scalar_lea.vmem %s1, 512
    %v369 = vld [vmem:[%s368] sm:$0xff]
    %v370 = vld [vmem:[%s368 + $0x8] sm:$0xff]
    %v371 = vld [vmem:[%s368 + $0x10] sm:$0xff]
    %v372 = vld [vmem:[%s368 + $0x18] sm:$0xff]
    %v373 = vld [vmem:[%s368 + $0x20] sm:$0xff]
    %v374 = vld [vmem:[%s368 + $0x28] sm:$0xff]
    %v375 = vld [vmem:[%s368 + $0x30] sm:$0xff]
    %v376 = vld [vmem:[%s368 + $0x38] sm:$0xff]
    %v377 = vld [vmem:[%s368 + $0x40] sm:$0xff]
    %v378 = vld [vmem:[%s368 + $0x48] sm:$0xff]
    %v379 = vld [vmem:[%s368 + $0x50] sm:$0xff]
    %v380 = vld [vmem:[%s368 + $0x58] sm:$0xff]
    %v381 = vld [vmem:[%s368 + $0x60] sm:$0xff]
    %v382 = vld [vmem:[%s368 + $0x68] sm:$0xff]
    %v383 = vld [vmem:[%s368 + $0x70] sm:$0xff]
    %v384 = vld [vmem:[%s368 + $0x78] sm:$0xff]
    %v385 = vld [vmem:[%s368 + $0x80] sm:$0xff]
    %v386 = vld [vmem:[%s368 + $0x88] sm:$0xff]
    %v387 = vld [vmem:[%s368 + $0x90] sm:$0xff]
    %v388 = vld [vmem:[%s368 + $0x98] sm:$0xff]
    %v389 = vld [vmem:[%s368 + $0xa0] sm:$0xff]
    %v390 = vld [vmem:[%s368 + $0xa8] sm:$0xff]
    %v391 = vld [vmem:[%s368 + $0xb0] sm:$0xff]
    %v392 = vld [vmem:[%s368 + $0xb8] sm:$0xff]
    %v393 = vld [vmem:[%s368 + $0xc0] sm:$0xff]
    %v394 = vld [vmem:[%s368 + $0xc8] sm:$0xff]
    %v395 = vld [vmem:[%s368 + $0xd0] sm:$0xff]
    %v396 = vld [vmem:[%s368 + $0xd8] sm:$0xff]
    %v397 = vld [vmem:[%s368 + $0xe0] sm:$0xff]
    %v398 = vld [vmem:[%s368 + $0xe8] sm:$0xff]
    %v399 = vld [vmem:[%s368 + $0xf0] sm:$0xff]
    %v400 = vld [vmem:[%s368 + $0xf8] sm:$0xff]
    %401 = vmatpush.msra.mxu0 %v399
    %402 = vmatpush.msra.mxu0 %v397
    %403 = vmatpush.msra.mxu0 %v395
    %404 = vmatpush.msra.mxu0 %v393
    %405 = vmatpush.msra.mxu0 %v391
    %406 = vmatpush.msra.mxu0 %v389
    %407 = vmatpush.msra.mxu0 %v387
    %408 = vmatpush.msra.mxu0 %v385
    %409 = vmatpush.msra.mxu0 %v383
    %410 = vmatpush.msra.mxu0 %v381
    %411 = vmatpush.msra.mxu0 %v379
    %412 = vmatpush.msra.mxu0 %v377
    %413 = vmatpush.msra.mxu0 %v375
    %414 = vmatpush.msra.mxu0 %v373
    %415 = vmatpush.msra.mxu0 %v371
    %416 = vmatpush.msra.mxu0 %v369
    %417 = vmatmul.f32.gmra.mxu0 %v360
    %v418 = vpop.f32.mrf.mxu0
    %v419 = vadd.f32 0.0, %v418
    %420 = vmatmul.f32.gmra.mxu0 %v361
    %v421 = vpop.f32.mrf.mxu0
    %v422 = vadd.f32 0.0, %v421
    %423 = vmatmul.f32.gmra.mxu0 %v362
    %v424 = vpop.f32.mrf.mxu0
    %v425 = vadd.f32 0.0, %v424
    %426 = vmatmul.f32.gmra.mxu0 %v363
    %v427 = vpop.f32.mrf.mxu0
    %v428 = vadd.f32 0.0, %v427
    %429 = vmatmul.f32.gmra.mxu0 %v364
    %v430 = vpop.f32.mrf.mxu0
    %v431 = vadd.f32 0.0, %v430
    %432 = vmatmul.f32.gmra.mxu0 %v365
    %v433 = vpop.f32.mrf.mxu0
    %v434 = vadd.f32 0.0, %v433
    %435 = vmatmul.f32.gmra.mxu0 %v366
    %v436 = vpop.f32.mrf.mxu0
    %v437 = vadd.f32 0.0, %v436
    %438 = vmatmul.f32.gmra.mxu0 %v367
    %v439 = vpop.f32.mrf.mxu0
    %v440 = vadd.f32 0.0, %v439
    %441 = vdwg.mxu0
    %442 = vmatpush.msra.mxu0 %v400
    %443 = vmatpush.msra.mxu0 %v398
    %444 = vmatpush.msra.mxu0 %v396
    %445 = vmatpush.msra.mxu0 %v394
    %446 = vmatpush.msra.mxu0 %v392
    %447 = vmatpush.msra.mxu0 %v390
    %448 = vmatpush.msra.mxu0 %v388
    %449 = vmatpush.msra.mxu0 %v386
    %450 = vmatpush.msra.mxu0 %v384
    %451 = vmatpush.msra.mxu0 %v382
    %452 = vmatpush.msra.mxu0 %v380
    %453 = vmatpush.msra.mxu0 %v378
    %454 = vmatpush.msra.mxu0 %v376
    %455 = vmatpush.msra.mxu0 %v374
    %456 = vmatpush.msra.mxu0 %v372
    %457 = vmatpush.msra.mxu0 %v370
    %458 = vmatmul.f32.gmra.mxu0 %v360
    %v459 = vpop.f32.mrf.mxu0
    %v460 = vadd.f32 0.0, %v459
    %461 = vmatmul.f32.gmra.mxu0 %v361
    %v462 = vpop.f32.mrf.mxu0
    %v463 = vadd.f32 0.0, %v462
    %464 = vmatmul.f32.gmra.mxu0 %v362
    %v465 = vpop.f32.mrf.mxu0
    %v466 = vadd.f32 0.0, %v465
    %467 = vmatmul.f32.gmra.mxu0 %v363
    %v468 = vpop.f32.mrf.mxu0
    %v469 = vadd.f32 0.0, %v468
    %470 = vmatmul.f32.gmra.mxu0 %v364
    %v471 = vpop.f32.mrf.mxu0
    %v472 = vadd.f32 0.0, %v471
    %473 = vmatmul.f32.gmra.mxu0 %v365
    %v474 = vpop.f32.mrf.mxu0
    %v475 = vadd.f32 0.0, %v474
    %476 = vmatmul.f32.gmra.mxu0 %v366
    %v477 = vpop.f32.mrf.mxu0
    %v478 = vadd.f32 0.0, %v477
    %479 = vmatmul.f32.gmra.mxu0 %v367
    %v480 = vpop.f32.mrf.mxu0
    %v481 = vadd.f32 0.0, %v480
    %482 = vdwg.mxu0
    %v483 = vadd.f32 %v296, %v419
    %v484 = vadd.f32 %v337, %v460
    %v485 = vadd.f32 %v299, %v422
    %v486 = vadd.f32 %v340, %v463
    %v487 = vadd.f32 %v302, %v425
    %v488 = vadd.f32 %v343, %v466
    %v489 = vadd.f32 %v305, %v428
    %v490 = vadd.f32 %v346, %v469
    %v491 = vadd.f32 %v308, %v431
    %v492 = vadd.f32 %v349, %v472
    %v493 = vadd.f32 %v311, %v434
    %v494 = vadd.f32 %v352, %v475
    %v495 = vadd.f32 %v314, %v437
    %v496 = vadd.f32 %v355, %v478
    %v497 = vadd.f32 %v317, %v440
    %v498 = vadd.f32 %v358, %v481
    %v499 = vld [vmem:[%s0 + $0x3] sm:$0xff]
    %v500 = vld [vmem:[%s0 + $0xb] sm:$0xff]
    %v501 = vld [vmem:[%s0 + $0x13] sm:$0xff]
    %v502 = vld [vmem:[%s0 + $0x1b] sm:$0xff]
    %v503 = vld [vmem:[%s0 + $0x23] sm:$0xff]
    %v504 = vld [vmem:[%s0 + $0x2b] sm:$0xff]
    %v505 = vld [vmem:[%s0 + $0x33] sm:$0xff]
    %v506 = vld [vmem:[%s0 + $0x3b] sm:$0xff]
    %s507 = scalar_lea.vmem %s1, 768
    %v508 = vld [vmem:[%s507] sm:$0xff]
    %v509 = vld [vmem:[%s507 + $0x8] sm:$0xff]
    %v510 = vld [vmem:[%s507 + $0x10] sm:$0xff]
    %v511 = vld [vmem:[%s507 + $0x18] sm:$0xff]
    %v512 = vld [vmem:[%s507 + $0x20] sm:$0xff]
    %v513 = vld [vmem:[%s507 + $0x28] sm:$0xff]
    %v514 = vld [vmem:[%s507 + $0x30] sm:$0xff]
    %v515 = vld [vmem:[%s507 + $0x38] sm:$0xff]
    %v516 = vld [vmem:[%s507 + $0x40] sm:$0xff]
    %v517 = vld [vmem:[%s507 + $0x48] sm:$0xff]
    %v518 = vld [vmem:[%s507 + $0x50] sm:$0xff]
    %v519 = vld [vmem:[%s507 + $0x58] sm:$0xff]
    %v520 = vld [vmem:[%s507 + $0x60] sm:$0xff]
    %v521 = vld [vmem:[%s507 + $0x68] sm:$0xff]
    %v522 = vld [vmem:[%s507 + $0x70] sm:$0xff]
    %v523 = vld [vmem:[%s507 + $0x78] sm:$0xff]
    %v524 = vld [vmem:[%s507 + $0x80] sm:$0xff]
    %v525 = vld [vmem:[%s507 + $0x88] sm:$0xff]
    %v526 = vld [vmem:[%s507 + $0x90] sm:$0xff]
    %v527 = vld [vmem:[%s507 + $0x98] sm:$0xff]
    %v528 = vld [vmem:[%s507 + $0xa0] sm:$0xff]
    %v529 = vld [vmem:[%s507 + $0xa8] sm:$0xff]
    %v530 = vld [vmem:[%s507 + $0xb0] sm:$0xff]
    %v531 = vld [vmem:[%s507 + $0xb8] sm:$0xff]
    %v532 = vld [vmem:[%s507 + $0xc0] sm:$0xff]
    %v533 = vld [vmem:[%s507 + $0xc8] sm:$0xff]
    %v534 = vld [vmem:[%s507 + $0xd0] sm:$0xff]
    %v535 = vld [vmem:[%s507 + $0xd8] sm:$0xff]
    %v536 = vld [vmem:[%s507 + $0xe0] sm:$0xff]
    %v537 = vld [vmem:[%s507 + $0xe8] sm:$0xff]
    %v538 = vld [vmem:[%s507 + $0xf0] sm:$0xff]
    %v539 = vld [vmem:[%s507 + $0xf8] sm:$0xff]
    %540 = vmatpush.msra.mxu0 %v538
    %541 = vmatpush.msra.mxu0 %v536
    %542 = vmatpush.msra.mxu0 %v534
    %543 = vmatpush.msra.mxu0 %v532
    %544 = vmatpush.msra.mxu0 %v530
    %545 = vmatpush.msra.mxu0 %v528
    %546 = vmatpush.msra.mxu0 %v526
    %547 = vmatpush.msra.mxu0 %v524
    %548 = vmatpush.msra.mxu0 %v522
    %549 = vmatpush.msra.mxu0 %v520
    %550 = vmatpush.msra.mxu0 %v518
    %551 = vmatpush.msra.mxu0 %v516
    %552 = vmatpush.msra.mxu0 %v514
    %553 = vmatpush.msra.mxu0 %v512
    %554 = vmatpush.msra.mxu0 %v510
    %555 = vmatpush.msra.mxu0 %v508
    %556 = vmatmul.f32.gmra.mxu0 %v499
    %v557 = vpop.f32.mrf.mxu0
    %v558 = vadd.f32 0.0, %v557
    %559 = vmatmul.f32.gmra.mxu0 %v500
    %v560 = vpop.f32.mrf.mxu0
    %v561 = vadd.f32 0.0, %v560
    %562 = vmatmul.f32.gmra.mxu0 %v501
    %v563 = vpop.f32.mrf.mxu0
    %v564 = vadd.f32 0.0, %v563
    %565 = vmatmul.f32.gmra.mxu0 %v502
    %v566 = vpop.f32.mrf.mxu0
    %v567 = vadd.f32 0.0, %v566
    %568 = vmatmul.f32.gmra.mxu0 %v503
    %v569 = vpop.f32.mrf.mxu0
    %v570 = vadd.f32 0.0, %v569
    %571 = vmatmul.f32.gmra.mxu0 %v504
    %v572 = vpop.f32.mrf.mxu0
    %v573 = vadd.f32 0.0, %v572
    %574 = vmatmul.f32.gmra.mxu0 %v505
    %v575 = vpop.f32.mrf.mxu0
    %v576 = vadd.f32 0.0, %v575
    %577 = vmatmul.f32.gmra.mxu0 %v506
    %v578 = vpop.f32.mrf.mxu0
    %v579 = vadd.f32 0.0, %v578
    %580 = vdwg.mxu0
    %581 = vmatpush.msra.mxu0 %v539
    %582 = vmatpush.msra.mxu0 %v537
    %583 = vmatpush.msra.mxu0 %v535
    %584 = vmatpush.msra.mxu0 %v533
    %585 = vmatpush.msra.mxu0 %v531
    %586 = vmatpush.msra.mxu0 %v529
    %587 = vmatpush.msra.mxu0 %v527
    %588 = vmatpush.msra.mxu0 %v525
    %589 = vmatpush.msra.mxu0 %v523
    %590 = vmatpush.msra.mxu0 %v521
    %591 = vmatpush.msra.mxu0 %v519
    %592 = vmatpush.msra.mxu0 %v517
    %593 = vmatpush.msra.mxu0 %v515
    %594 = vmatpush.msra.mxu0 %v513
    %595 = vmatpush.msra.mxu0 %v511
    %596 = vmatpush.msra.mxu0 %v509
    %597 = vmatmul.f32.gmra.mxu0 %v499
    %v598 = vpop.f32.mrf.mxu0
    %v599 = vadd.f32 0.0, %v598
    %600 = vmatmul.f32.gmra.mxu0 %v500
    %v601 = vpop.f32.mrf.mxu0
    %v602 = vadd.f32 0.0, %v601
    %603 = vmatmul.f32.gmra.mxu0 %v501
    %v604 = vpop.f32.mrf.mxu0
    %v605 = vadd.f32 0.0, %v604
    %606 = vmatmul.f32.gmra.mxu0 %v502
    %v607 = vpop.f32.mrf.mxu0
    %v608 = vadd.f32 0.0, %v607
    %609 = vmatmul.f32.gmra.mxu0 %v503
    %v610 = vpop.f32.mrf.mxu0
    %v611 = vadd.f32 0.0, %v610
    %612 = vmatmul.f32.gmra.mxu0 %v504
    %v613 = vpop.f32.mrf.mxu0
    %v614 = vadd.f32 0.0, %v613
    %615 = vmatmul.f32.gmra.mxu0 %v505
    %v616 = vpop.f32.mrf.mxu0
    %v617 = vadd.f32 0.0, %v616
    %618 = vmatmul.f32.gmra.mxu0 %v506
    %v619 = vpop.f32.mrf.mxu0
    %v620 = vadd.f32 0.0, %v619
    %621 = vdwg.mxu0
    %v622 = vadd.f32 %v483, %v558
    %v623 = vadd.f32 %v484, %v599
    %v624 = vadd.f32 %v485, %v561
    %v625 = vadd.f32 %v486, %v602
    %v626 = vadd.f32 %v487, %v564
    %v627 = vadd.f32 %v488, %v605
    %v628 = vadd.f32 %v489, %v567
    %v629 = vadd.f32 %v490, %v608
    %v630 = vadd.f32 %v491, %v570
    %v631 = vadd.f32 %v492, %v611
    %v632 = vadd.f32 %v493, %v573
    %v633 = vadd.f32 %v494, %v614
    %v634 = vadd.f32 %v495, %v576
    %v635 = vadd.f32 %v496, %v617
    %v636 = vadd.f32 %v497, %v579
    %v637 = vadd.f32 %v498, %v620
    %v638 = vld [vmem:[%s0 + $0x4] sm:$0xff]
    %v639 = vld [vmem:[%s0 + $0xc] sm:$0xff]
    %v640 = vld [vmem:[%s0 + $0x14] sm:$0xff]
    %v641 = vld [vmem:[%s0 + $0x1c] sm:$0xff]
    %v642 = vld [vmem:[%s0 + $0x24] sm:$0xff]
    %v643 = vld [vmem:[%s0 + $0x2c] sm:$0xff]
    %v644 = vld [vmem:[%s0 + $0x34] sm:$0xff]
    %v645 = vld [vmem:[%s0 + $0x3c] sm:$0xff]
    %s646 = scalar_lea.vmem %s1, 1024
    %v647 = vld [vmem:[%s646] sm:$0xff]
    %v648 = vld [vmem:[%s646 + $0x8] sm:$0xff]
    %v649 = vld [vmem:[%s646 + $0x10] sm:$0xff]
    %v650 = vld [vmem:[%s646 + $0x18] sm:$0xff]
    %v651 = vld [vmem:[%s646 + $0x20] sm:$0xff]
    %v652 = vld [vmem:[%s646 + $0x28] sm:$0xff]
    %v653 = vld [vmem:[%s646 + $0x30] sm:$0xff]
    %v654 = vld [vmem:[%s646 + $0x38] sm:$0xff]
    %v655 = vld [vmem:[%s646 + $0x40] sm:$0xff]
    %v656 = vld [vmem:[%s646 + $0x48] sm:$0xff]
    %v657 = vld [vmem:[%s646 + $0x50] sm:$0xff]
    %v658 = vld [vmem:[%s646 + $0x58] sm:$0xff]
    %v659 = vld [vmem:[%s646 + $0x60] sm:$0xff]
    %v660 = vld [vmem:[%s646 + $0x68] sm:$0xff]
    %v661 = vld [vmem:[%s646 + $0x70] sm:$0xff]
    %v662 = vld [vmem:[%s646 + $0x78] sm:$0xff]
    %v663 = vld [vmem:[%s646 + $0x80] sm:$0xff]
    %v664 = vld [vmem:[%s646 + $0x88] sm:$0xff]
    %v665 = vld [vmem:[%s646 + $0x90] sm:$0xff]
    %v666 = vld [vmem:[%s646 + $0x98] sm:$0xff]
    %v667 = vld [vmem:[%s646 + $0xa0] sm:$0xff]
    %v668 = vld [vmem:[%s646 + $0xa8] sm:$0xff]
    %v669 = vld [vmem:[%s646 + $0xb0] sm:$0xff]
    %v670 = vld [vmem:[%s646 + $0xb8] sm:$0xff]
    %v671 = vld [vmem:[%s646 + $0xc0] sm:$0xff]
    %v672 = vld [vmem:[%s646 + $0xc8] sm:$0xff]
    %v673 = vld [vmem:[%s646 + $0xd0] sm:$0xff]
    %v674 = vld [vmem:[%s646 + $0xd8] sm:$0xff]
    %v675 = vld [vmem:[%s646 + $0xe0] sm:$0xff]
    %v676 = vld [vmem:[%s646 + $0xe8] sm:$0xff]
    %v677 = vld [vmem:[%s646 + $0xf0] sm:$0xff]
    %v678 = vld [vmem:[%s646 + $0xf8] sm:$0xff]
    %679 = vmatpush.msra.mxu0 %v677
    %680 = vmatpush.msra.mxu0 %v675
    %681 = vmatpush.msra.mxu0 %v673
    %682 = vmatpush.msra.mxu0 %v671
    %683 = vmatpush.msra.mxu0 %v669
    %684 = vmatpush.msra.mxu0 %v667
    %685 = vmatpush.msra.mxu0 %v665
    %686 = vmatpush.msra.mxu0 %v663
    %687 = vmatpush.msra.mxu0 %v661
    %688 = vmatpush.msra.mxu0 %v659
    %689 = vmatpush.msra.mxu0 %v657
    %690 = vmatpush.msra.mxu0 %v655
    %691 = vmatpush.msra.mxu0 %v653
    %692 = vmatpush.msra.mxu0 %v651
    %693 = vmatpush.msra.mxu0 %v649
    %694 = vmatpush.msra.mxu0 %v647
    %695 = vmatmul.f32.gmra.mxu0 %v638
    %v696 = vpop.f32.mrf.mxu0
    %v697 = vadd.f32 0.0, %v696
    %698 = vmatmul.f32.gmra.mxu0 %v639
    %v699 = vpop.f32.mrf.mxu0
    %v700 = vadd.f32 0.0, %v699
    %701 = vmatmul.f32.gmra.mxu0 %v640
    %v702 = vpop.f32.mrf.mxu0
    %v703 = vadd.f32 0.0, %v702
    %704 = vmatmul.f32.gmra.mxu0 %v641
    %v705 = vpop.f32.mrf.mxu0
    %v706 = vadd.f32 0.0, %v705
    %707 = vmatmul.f32.gmra.mxu0 %v642
    %v708 = vpop.f32.mrf.mxu0
    %v709 = vadd.f32 0.0, %v708
    %710 = vmatmul.f32.gmra.mxu0 %v643
    %v711 = vpop.f32.mrf.mxu0
    %v712 = vadd.f32 0.0, %v711
    %713 = vmatmul.f32.gmra.mxu0 %v644
    %v714 = vpop.f32.mrf.mxu0
    %v715 = vadd.f32 0.0, %v714
    %716 = vmatmul.f32.gmra.mxu0 %v645
    %v717 = vpop.f32.mrf.mxu0
    %v718 = vadd.f32 0.0, %v717
    %719 = vdwg.mxu0
    %720 = vmatpush.msra.mxu0 %v678
    %721 = vmatpush.msra.mxu0 %v676
    %722 = vmatpush.msra.mxu0 %v674
    %723 = vmatpush.msra.mxu0 %v672
    %724 = vmatpush.msra.mxu0 %v670
    %725 = vmatpush.msra.mxu0 %v668
    %726 = vmatpush.msra.mxu0 %v666
    %727 = vmatpush.msra.mxu0 %v664
    %728 = vmatpush.msra.mxu0 %v662
    %729 = vmatpush.msra.mxu0 %v660
    %730 = vmatpush.msra.mxu0 %v658
    %731 = vmatpush.msra.mxu0 %v656
    %732 = vmatpush.msra.mxu0 %v654
    %733 = vmatpush.msra.mxu0 %v652
    %734 = vmatpush.msra.mxu0 %v650
    %735 = vmatpush.msra.mxu0 %v648
    %736 = vmatmul.f32.gmra.mxu0 %v638
    %v737 = vpop.f32.mrf.mxu0
    %v738 = vadd.f32 0.0, %v737
    %739 = vmatmul.f32.gmra.mxu0 %v639
    %v740 = vpop.f32.mrf.mxu0
    %v741 = vadd.f32 0.0, %v740
    %742 = vmatmul.f32.gmra.mxu0 %v640
    %v743 = vpop.f32.mrf.mxu0
    %v744 = vadd.f32 0.0, %v743
    %745 = vmatmul.f32.gmra.mxu0 %v641
    %v746 = vpop.f32.mrf.mxu0
    %v747 = vadd.f32 0.0, %v746
    %748 = vmatmul.f32.gmra.mxu0 %v642
    %v749 = vpop.f32.mrf.mxu0
    %v750 = vadd.f32 0.0, %v749
    %751 = vmatmul.f32.gmra.mxu0 %v643
    %v752 = vpop.f32.mrf.mxu0
    %v753 = vadd.f32 0.0, %v752
    %754 = vmatmul.f32.gmra.mxu0 %v644
    %v755 = vpop.f32.mrf.mxu0
    %v756 = vadd.f32 0.0, %v755
    %757 = vmatmul.f32.gmra.mxu0 %v645
    %v758 = vpop.f32.mrf.mxu0
    %v759 = vadd.f32 0.0, %v758
    %760 = vdwg.mxu0
    %v761 = vadd.f32 %v622, %v697
    %v762 = vadd.f32 %v623, %v738
    %v763 = vadd.f32 %v624, %v700
    %v764 = vadd.f32 %v625, %v741
    %v765 = vadd.f32 %v626, %v703
    %v766 = vadd.f32 %v627, %v744
    %v767 = vadd.f32 %v628, %v706
    %v768 = vadd.f32 %v629, %v747
    %v769 = vadd.f32 %v630, %v709
    %v770 = vadd.f32 %v631, %v750
    %v771 = vadd.f32 %v632, %v712
    %v772 = vadd.f32 %v633, %v753
    %v773 = vadd.f32 %v634, %v715
    %v774 = vadd.f32 %v635, %v756
    %v775 = vadd.f32 %v636, %v718
    %v776 = vadd.f32 %v637, %v759
    %v777 = vld [vmem:[%s2] sm:$0x3]
    %v779 = vperm.slane %v777, 0
    %v780 = vperm.slane %v777, 1
    %v783 = vadd.f32 %v761, %v779
    %v784 = vadd.f32 %v762, %v780
    %v785 = vadd.f32 %v763, %v779
    %v786 = vadd.f32 %v764, %v780
    %v787 = vadd.f32 %v765, %v779
    %v788 = vadd.f32 %v766, %v780
    %v789 = vadd.f32 %v767, %v779
    %v790 = vadd.f32 %v768, %v780
    %v791 = vadd.f32 %v769, %v779
    %v792 = vadd.f32 %v770, %v780
    %v793 = vadd.f32 %v771, %v779
    %v794 = vadd.f32 %v772, %v780
    %v795 = vadd.f32 %v773, %v779
    %v796 = vadd.f32 %v774, %v780
    %v797 = vadd.f32 %v775, %v779
    %v798 = vadd.f32 %v776, %v780
    %v799 = vmax.f32 %v783, 0.0
    %v800 = vmax.f32 %v784, 0.0
    %v801 = vmax.f32 %v785, 0.0
    %v802 = vmax.f32 %v786, 0.0
    %v803 = vmax.f32 %v787, 0.0
    %v804 = vmax.f32 %v788, 0.0
    %v805 = vmax.f32 %v789, 0.0
    %v806 = vmax.f32 %v790, 0.0
    %v807 = vmax.f32 %v791, 0.0
    %v808 = vmax.f32 %v792, 0.0
    %v809 = vmax.f32 %v793, 0.0
    %v810 = vmax.f32 %v794, 0.0
    %v811 = vmax.f32 %v795, 0.0
    %v812 = vmax.f32 %v796, 0.0
    %v813 = vmax.f32 %v797, 0.0
    %v814 = vmax.f32 %v798, 0.0
    %815 = vst [vmem:[#allocation2] sm:$0xff] %v799
    %816 = vst.msk [vmem:[#allocation2 + $0x8] sm:$0xff] %vm40, %v800
    %817 = vst [vmem:[#allocation2 + $0x10] sm:$0xff] %v801
    %818 = vst.msk [vmem:[#allocation2 + $0x18] sm:$0xff] %vm40, %v802
    %819 = vst [vmem:[#allocation2 + $0x20] sm:$0xff] %v803
    %820 = vst.msk [vmem:[#allocation2 + $0x28] sm:$0xff] %vm40, %v804
    %821 = vst [vmem:[#allocation2 + $0x30] sm:$0xff] %v805
    %822 = vst.msk [vmem:[#allocation2 + $0x38] sm:$0xff] %vm40, %v806
    %823 = vst [vmem:[#allocation2 + $0x40] sm:$0xff] %v807
    %824 = vst.msk [vmem:[#allocation2 + $0x48] sm:$0xff] %vm40, %v808
    %825 = vst [vmem:[#allocation2 + $0x50] sm:$0xff] %v809
    %826 = vst.msk [vmem:[#allocation2 + $0x58] sm:$0xff] %vm40, %v810
    %827 = vst [vmem:[#allocation2 + $0x60] sm:$0xff] %v811
    %828 = vst.msk [vmem:[#allocation2 + $0x68] sm:$0xff] %vm40, %v812
    %829 = vst [vmem:[#allocation2 + $0x70] sm:$0xff] %v813
    %830 = vst.msk [vmem:[#allocation2 + $0x78] sm:$0xff] %vm40, %v814
    %v831 = vld [vmem:[#allocation2] sm:$0xff]
    %v832 = vld [vmem:[#allocation2 + $0x8] sm:$0xff]
    %v833 = vld [vmem:[#allocation2 + $0x10] sm:$0xff]
    %v834 = vld [vmem:[#allocation2 + $0x18] sm:$0xff]
    %v835 = vld [vmem:[#allocation2 + $0x20] sm:$0xff]
    %v836 = vld [vmem:[#allocation2 + $0x28] sm:$0xff]
    %v837 = vld [vmem:[#allocation2 + $0x30] sm:$0xff]
    %v838 = vld [vmem:[#allocation2 + $0x38] sm:$0xff]
    %v839 = vld [vmem:[#allocation2 + $0x40] sm:$0xff]
    %v840 = vld [vmem:[#allocation2 + $0x48] sm:$0xff]
    %v841 = vld [vmem:[#allocation2 + $0x50] sm:$0xff]
    %v842 = vld [vmem:[#allocation2 + $0x58] sm:$0xff]
    %v843 = vld [vmem:[#allocation2 + $0x60] sm:$0xff]
    %v844 = vld [vmem:[#allocation2 + $0x68] sm:$0xff]
    %v845 = vld [vmem:[#allocation2 + $0x70] sm:$0xff]
    %v846 = vld [vmem:[#allocation2 + $0x78] sm:$0xff]
    %v847 = vld [vmem:[#allocation2] sm:$0xfe]
    %v848 = vld [vmem:[#allocation2 + $0x8] sm:$0xfe]
    %v849 = vld [vmem:[#allocation2 + $0x80] sm:$0x1]
    %v850 = vld [vmem:[#allocation2 + $0x88] sm:$0x1]
    %vm869 = vcmask 1046528
    %v870 = vrot.slane %v847, 1
    %v871 = vrot.slane %v833, 1
    %v872 = vsel %vm869, %v870, %v871
    %v873 = vrot.slane %v848, 1
    %v874 = vrot.slane %v834, 1
    %v875 = vsel %vm869, %v873, %v874
    %v876 = vrot.slane %v835, 1
    %v877 = vsel %vm869, %v871, %v876
    %v878 = vrot.slane %v836, 1
    %v879 = vsel %vm869, %v874, %v878
    %v880 = vrot.slane %v837, 1
    %v881 = vsel %vm869, %v876, %v880
    %v882 = vrot.slane %v838, 1
    %v883 = vsel %vm869, %v878, %v882
    %v884 = vrot.slane %v839, 1
    %v885 = vsel %vm869, %v880, %v884
    %v886 = vrot.slane %v840, 1
    %v887 = vsel %vm869, %v882, %v886
    %v888 = vrot.slane %v841, 1
    %v889 = vsel %vm869, %v884, %v888
    %v890 = vrot.slane %v842, 1
    %v891 = vsel %vm869, %v886, %v890
    %v892 = vrot.slane %v843, 1
    %v893 = vsel %vm869, %v888, %v892
    %v894 = vrot.slane %v844, 1
    %v895 = vsel %vm869, %v890, %v894
    %v896 = vrot.slane %v845, 1
    %v897 = vsel %vm869, %v892, %v896
    %v898 = vrot.slane %v846, 1
    %v899 = vsel %vm869, %v894, %v898
    %v900 = vrot.slane %v849, 1
    %v901 = vsel %vm869, %v896, %v900
    %v902 = vrot.slane %v850, 1
    %v903 = vsel %vm869, %v898, %v902
    %v920 = vmax.f32 %v831, %v872
    %v921 = vmax.f32 %v832, %v875
    %v922 = vmax.f32 %v833, %v877
    %v923 = vmax.f32 %v834, %v879
    %v924 = vmax.f32 %v835, %v881
    %v925 = vmax.f32 %v836, %v883
    %v926 = vmax.f32 %v837, %v885
    %v927 = vmax.f32 %v838, %v887
    %v928 = vmax.f32 %v839, %v889
    %v929 = vmax.f32 %v840, %v891
    %v930 = vmax.f32 %v841, %v893
    %v931 = vmax.f32 %v842, %v895
    %v932 = vmax.f32 %v843, %v897
    %v933 = vmax.f32 %v844, %v899
    %v934 = vmax.f32 %v845, %v901
    %v935 = vmax.f32 %v846, %v903
    %952 = vrot.lane.b32.xlu0 %v920, 127
    %v953 = vpop.permute.xlu0 %952
    %954 = vrot.lane.b32.xlu0 %v921, 127
    %v955 = vpop.permute.xlu0 %954
    %956 = vrot.lane.b32.xlu0 %v922, 127
    %v957 = vpop.permute.xlu0 %956
    %958 = vrot.lane.b32.xlu0 %v923, 127
    %v959 = vpop.permute.xlu0 %958
    %960 = vrot.lane.b32.xlu0 %v924, 127
    %v961 = vpop.permute.xlu0 %960
    %962 = vrot.lane.b32.xlu0 %v925, 127
    %v963 = vpop.permute.xlu0 %962
    %964 = vrot.lane.b32.xlu0 %v926, 127
    %v965 = vpop.permute.xlu0 %964
    %966 = vrot.lane.b32.xlu0 %v927, 127
    %v967 = vpop.permute.xlu0 %966
    %968 = vrot.lane.b32.xlu0 %v928, 127
    %v969 = vpop.permute.xlu0 %968
    %970 = vrot.lane.b32.xlu0 %v929, 127
    %v971 = vpop.permute.xlu0 %970
    %972 = vrot.lane.b32.xlu0 %v930, 127
    %v973 = vpop.permute.xlu0 %972
    %974 = vrot.lane.b32.xlu0 %v931, 127
    %v975 = vpop.permute.xlu0 %974
    %976 = vrot.lane.b32.xlu0 %v932, 127
    %v977 = vpop.permute.xlu0 %976
    %978 = vrot.lane.b32.xlu0 %v933, 127
    %v979 = vpop.permute.xlu0 %978
    %980 = vrot.lane.b32.xlu0 %v934, 127
    %v981 = vpop.permute.xlu0 %980
    %982 = vrot.lane.b32.xlu0 %v935, 127
    %v983 = vpop.permute.xlu0 %982
    %vm984 = vcmask 1039360
    %v985 = vsel %vm984, %v953, %v955
    %v986 = vsel %vm984, %v957, %v959
    %v987 = vsel %vm984, %v961, %v963
    %v988 = vsel %vm984, %v965, %v967
    %v989 = vsel %vm984, %v969, %v971
    %v990 = vsel %vm984, %v973, %v975
    %v991 = vsel %vm984, %v977, %v979
    %v992 = vsel %vm984, %v981, %v983
    %vm1009 = vcmask 318464
    %v1010 = vsel %vm1009, %v955, %v921
    %v1011 = vsel %vm1009, %v959, %v923
    %v1012 = vsel %vm1009, %v963, %v925
    %v1013 = vsel %vm1009, %v967, %v927
    %v1014 = vsel %vm1009, %v971, %v929
    %v1015 = vsel %vm1009, %v975, %v931
    %v1016 = vsel %vm1009, %v979, %v933
    %v1017 = vsel %vm1009, %v983, %v935
    %v1018 = vmax.f32 %v920, %v985
    %v1019 = vmax.f32 %v921, %v1010
    %v1020 = vmax.f32 %v922, %v986
    %v1021 = vmax.f32 %v923, %v1011
    %v1022 = vmax.f32 %v924, %v987
    %v1023 = vmax.f32 %v925, %v1012
    %v1024 = vmax.f32 %v926, %v988
    %v1025 = vmax.f32 %v927, %v1013
    %v1026 = vmax.f32 %v928, %v989
    %v1027 = vmax.f32 %v929, %v1014
    %v1028 = vmax.f32 %v930, %v990
    %v1029 = vmax.f32 %v931, %v1015
    %v1030 = vmax.f32 %v932, %v991
    %v1031 = vmax.f32 %v933, %v1016
    %v1032 = vmax.f32 %v934, %v992
    %v1033 = vmax.f32 %v935, %v1017
    %1034 = vst [vmem:[#allocation3] sm:$0xff] %v1018
    %1035 = vst.msk [vmem:[#allocation3 + $0x8] sm:$0xff] %vm40, %v1019
    %1036 = vst [vmem:[#allocation3 + $0x10] sm:$0xff] %v1020
    %1037 = vst.msk [vmem:[#allocation3 + $0x18] sm:$0xff] %vm40, %v1021
    %1038 = vst [vmem:[#allocation3 + $0x20] sm:$0xff] %v1022
    %1039 = vst.msk [vmem:[#allocation3 + $0x28] sm:$0xff] %vm40, %v1023
    %1040 = vst [vmem:[#allocation3 + $0x30] sm:$0xff] %v1024
    %1041 = vst.msk [vmem:[#allocation3 + $0x38] sm:$0xff] %vm40, %v1025
    %1042 = vst [vmem:[#allocation3 + $0x40] sm:$0xff] %v1026
    %1043 = vst.msk [vmem:[#allocation3 + $0x48] sm:$0xff] %vm40, %v1027
    %1044 = vst [vmem:[#allocation3 + $0x50] sm:$0xff] %v1028
    %1045 = vst.msk [vmem:[#allocation3 + $0x58] sm:$0xff] %vm40, %v1029
    %1046 = vst [vmem:[#allocation3 + $0x60] sm:$0xff] %v1030
    %1047 = vst.msk [vmem:[#allocation3 + $0x68] sm:$0xff] %vm40, %v1031
    %1048 = vst [vmem:[#allocation3 + $0x70] sm:$0xff] %v1032
    %1049 = vst.msk [vmem:[#allocation3 + $0x78] sm:$0xff] %vm40, %v1033
    %v1050 = vld [vmem:[#allocation3] sm:$0xff]
    %v1051 = vld [vmem:[#allocation3 + $0x8] sm:$0xff]
    %v1052 = vld [vmem:[#allocation3 + $0x10] sm:$0xff]
    %v1053 = vld [vmem:[#allocation3 + $0x18] sm:$0xff]
    %v1054 = vld [vmem:[#allocation3 + $0x20] sm:$0xff]
    %v1055 = vld [vmem:[#allocation3 + $0x28] sm:$0xff]
    %v1056 = vld [vmem:[#allocation3 + $0x30] sm:$0xff]
    %v1057 = vld [vmem:[#allocation3 + $0x38] sm:$0xff]
    %v1058 = vld [vmem:[#allocation3 + $0x40] sm:$0xff]
    %v1059 = vld [vmem:[#allocation3 + $0x48] sm:$0xff]
    %v1060 = vld [vmem:[#allocation3 + $0x50] sm:$0xff]
    %v1061 = vld [vmem:[#allocation3 + $0x58] sm:$0xff]
    %v1062 = vld [vmem:[#allocation3 + $0x60] sm:$0xff]
    %v1063 = vld [vmem:[#allocation3 + $0x68] sm:$0xff]
    %v1064 = vld [vmem:[#allocation3 + $0x70] sm:$0xff]
    %v1065 = vld [vmem:[#allocation3 + $0x78] sm:$0xff]
    %v1066 = vld [vmem:[%s3] sm:$0xff]
    %v1067 = vld [vmem:[%s3 + $0x8] sm:$0xff]
    %v1068 = vld [vmem:[%s3 + $0x10] sm:$0xff]
    %v1069 = vld [vmem:[%s3 + $0x18] sm:$0xff]
    %v1070 = vld [vmem:[%s3 + $0x20] sm:$0xff]
    %v1071 = vld [vmem:[%s3 + $0x28] sm:$0xff]
    %v1072 = vld [vmem:[%s3 + $0x30] sm:$0xff]
    %v1073 = vld [vmem:[%s3 + $0x38] sm:$0xff]
    %v1074 = vld [vmem:[%s3 + $0x40] sm:$0xff]
    %v1075 = vld [vmem:[%s3 + $0x48] sm:$0xff]
    %v1076 = vld [vmem:[%s3 + $0x50] sm:$0xff]
    %v1077 = vld [vmem:[%s3 + $0x58] sm:$0xff]
    %v1078 = vld [vmem:[%s3 + $0x60] sm:$0xff]
    %v1079 = vld [vmem:[%s3 + $0x68] sm:$0xff]
    %v1080 = vld [vmem:[%s3 + $0x70] sm:$0xff]
    %v1081 = vld [vmem:[%s3 + $0x78] sm:$0xff]
    %v1082 = vld [vmem:[%s3 + $0x80] sm:$0xff]
    %v1083 = vld [vmem:[%s3 + $0x88] sm:$0xff]
    %v1084 = vld [vmem:[%s3 + $0x90] sm:$0xff]
    %v1085 = vld [vmem:[%s3 + $0x98] sm:$0xff]
    %v1086 = vld [vmem:[%s3 + $0xa0] sm:$0xff]
    %v1087 = vld [vmem:[%s3 + $0xa8] sm:$0xff]
    %v1088 = vld [vmem:[%s3 + $0xb0] sm:$0xff]
    %v1089 = vld [vmem:[%s3 + $0xb8] sm:$0xff]
    %v1090 = vld [vmem:[%s3 + $0xc0] sm:$0xff]
    %v1091 = vld [vmem:[%s3 + $0xc8] sm:$0xff]
    %v1092 = vld [vmem:[%s3 + $0xd0] sm:$0xff]
    %v1093 = vld [vmem:[%s3 + $0xd8] sm:$0xff]
    %v1094 = vld [vmem:[%s3 + $0xe0] sm:$0xff]
    %v1095 = vld [vmem:[%s3 + $0xe8] sm:$0xff]
    %v1096 = vld [vmem:[%s3 + $0xf0] sm:$0xff]
    %v1097 = vld [vmem:[%s3 + $0xf8] sm:$0xff]
    %v1098 = vld [vmem:[%s3 + $0x100] sm:$0xff]
    %v1099 = vld [vmem:[%s3 + $0x108] sm:$0xff]
    %v1100 = vld [vmem:[%s3 + $0x110] sm:$0xff]
    %v1101 = vld [vmem:[%s3 + $0x118] sm:$0xff]
    %v1102 = vld [vmem:[%s3 + $0x120] sm:$0xff]
    %v1103 = vld [vmem:[%s3 + $0x128] sm:$0xff]
    %v1104 = vld [vmem:[%s3 + $0x130] sm:$0xff]
    %v1105 = vld [vmem:[%s3 + $0x138] sm:$0xff]
    %v1106 = vld [vmem:[%s3 + $0x140] sm:$0xff]
    %v1107 = vld [vmem:[%s3 + $0x148] sm:$0xff]
    %v1108 = vld [vmem:[#allocation3] sm:$0xfc]
    %v1109 = vld [vmem:[#allocation3 + $0x8] sm:$0xfc]
    %v1110 = vld [vmem:[#allocation3 + $0x80] sm:$0x3]
    %v1111 = vld [vmem:[#allocation3 + $0x88] sm:$0x3]
    %s1112 = scalar_lea.vmem %s3, 336
    %v1113 = vld [vmem:[%s1112] sm:$0xff]
    %v1114 = vld [vmem:[%s1112 + $0x8] sm:$0xff]
    %v1115 = vld [vmem:[%s1112 + $0x10] sm:$0xff]
    %v1116 = vld [vmem:[%s1112 + $0x18] sm:$0xff]
    %v1117 = vld [vmem:[%s1112 + $0x20] sm:$0xff]
    %v1118 = vld [vmem:[%s1112 + $0x28] sm:$0xff]
    %v1119 = vld [vmem:[%s1112 + $0x30] sm:$0xff]
    %v1120 = vld [vmem:[%s1112 + $0x38] sm:$0xff]
    %v1121 = vld [vmem:[%s1112 + $0x40] sm:$0xff]
    %v1122 = vld [vmem:[%s1112 + $0x48] sm:$0xff]
    %v1123 = vld [vmem:[%s1112 + $0x50] sm:$0xff]
    %v1124 = vld [vmem:[%s1112 + $0x58] sm:$0xff]
    %v1125 = vld [vmem:[%s1112 + $0x60] sm:$0xff]
    %v1126 = vld [vmem:[%s1112 + $0x68] sm:$0xff]
    %v1127 = vld [vmem:[%s1112 + $0x70] sm:$0xff]
    %v1128 = vld [vmem:[%s1112 + $0x78] sm:$0xff]
    %v1129 = vld [vmem:[%s1112 + $0x80] sm:$0xff]
    %v1130 = vld [vmem:[%s1112 + $0x88] sm:$0xff]
    %v1131 = vld [vmem:[%s1112 + $0x90] sm:$0xff]
    %v1132 = vld [vmem:[%s1112 + $0x98] sm:$0xff]
    %v1133 = vld [vmem:[%s1112 + $0xa0] sm:$0xff]
    %v1134 = vld [vmem:[%s1112 + $0xa8] sm:$0xff]
    %v1135 = vld [vmem:[%s1112 + $0xb0] sm:$0xff]
    %v1136 = vld [vmem:[%s1112 + $0xb8] sm:$0xff]
    %v1137 = vld [vmem:[%s1112 + $0xc0] sm:$0xff]
    %v1138 = vld [vmem:[%s1112 + $0xc8] sm:$0xff]
    %v1139 = vld [vmem:[%s1112 + $0xd0] sm:$0xff]
    %v1140 = vld [vmem:[%s1112 + $0xd8] sm:$0xff]
    %v1141 = vld [vmem:[%s1112 + $0xe0] sm:$0xff]
    %v1142 = vld [vmem:[%s1112 + $0xe8] sm:$0xff]
    %v1143 = vld [vmem:[%s1112 + $0xf0] sm:$0xff]
    %v1144 = vld [vmem:[%s1112 + $0xf8] sm:$0xff]
    %v1145 = vld [vmem:[%s1112 + $0x100] sm:$0xff]
    %v1146 = vld [vmem:[%s1112 + $0x108] sm:$0xff]
    %v1147 = vld [vmem:[%s1112 + $0x110] sm:$0xff]
    %v1148 = vld [vmem:[%s1112 + $0x118] sm:$0xff]
    %v1149 = vld [vmem:[%s1112 + $0x120] sm:$0xff]
    %v1150 = vld [vmem:[%s1112 + $0x128] sm:$0xff]
    %v1151 = vld [vmem:[%s1112 + $0x130] sm:$0xff]
    %v1152 = vld [vmem:[%s1112 + $0x138] sm:$0xff]
    %v1153 = vld [vmem:[%s1112 + $0x140] sm:$0xff]
    %v1154 = vld [vmem:[%s1112 + $0x148] sm:$0xff]
    %vm1173 = vcmask 1045504
    %v1174 = vrot.slane %v1108, 2
    %v1175 = vrot.slane %v1052, 2
    %v1176 = vsel %vm1173, %v1174, %v1175
    %v1177 = vrot.slane %v1109, 2
    %v1178 = vrot.slane %v1053, 2
    %v1179 = vsel %vm1173, %v1177, %v1178
    %v1180 = vrot.slane %v1054, 2
    %v1181 = vsel %vm1173, %v1175, %v1180
    %v1182 = vrot.slane %v1055, 2
    %v1183 = vsel %vm1173, %v1178, %v1182
    %v1184 = vrot.slane %v1056, 2
    %v1185 = vsel %vm1173, %v1180, %v1184
    %v1186 = vrot.slane %v1057, 2
    %v1187 = vsel %vm1173, %v1182, %v1186
    %v1188 = vrot.slane %v1058, 2
    %v1189 = vsel %vm1173, %v1184, %v1188
    %v1190 = vrot.slane %v1059, 2
    %v1191 = vsel %vm1173, %v1186, %v1190
    %v1192 = vrot.slane %v1060, 2
    %v1193 = vsel %vm1173, %v1188, %v1192
    %v1194 = vrot.slane %v1061, 2
    %v1195 = vsel %vm1173, %v1190, %v1194
    %v1196 = vrot.slane %v1062, 2
    %v1197 = vsel %vm1173, %v1192, %v1196
    %v1198 = vrot.slane %v1063, 2
    %v1199 = vsel %vm1173, %v1194, %v1198
    %v1200 = vrot.slane %v1064, 2
    %v1201 = vsel %vm1173, %v1196, %v1200
    %v1202 = vrot.slane %v1065, 2
    %v1203 = vsel %vm1173, %v1198, %v1202
    %v1204 = vrot.slane %v1110, 2
    %v1205 = vsel %vm1173, %v1200, %v1204
    %v1206 = vrot.slane %v1111, 2
    %v1207 = vsel %vm1173, %v1202, %v1206
    %v1216 = vsel %vm40, %v1179, 0
    %v1218 = vsel %vm40, %v1183, 0
    %v1220 = vsel %vm40, %v1187, 0
    %v1222 = vsel %vm40, %v1191, 0
    %v1224 = vsel %vm40, %v1195, 0
    %v1226 = vsel %vm40, %v1199, 0
    %v1228 = vsel %vm40, %v1203, 0
    %v1230 = vsel %vm40, %v1207, 0
    %1232 = vmatpush.msra.mxu0 %v1143
    %1233 = vmatpush.msra.mxu0 %v1141
    %1234 = vmatpush.msra.mxu0 %v1139
    %1235 = vmatpush.msra.mxu0 %v1137
    %1236 = vmatpush.msra.mxu0 %v1135
    %1237 = vmatpush.msra.mxu0 %v1133
    %1238 = vmatpush.msra.mxu0 %v1131
    %1239 = vmatpush.msra.mxu0 %v1129
    %1240 = vmatpush.msra.mxu0 %v1127
    %1241 = vmatpush.msra.mxu0 %v1125
    %1242 = vmatpush.msra.mxu0 %v1123
    %1243 = vmatpush.msra.mxu0 %v1121
    %1244 = vmatpush.msra.mxu0 %v1119
    %1245 = vmatpush.msra.mxu0 %v1117
    %1246 = vmatpush.msra.mxu0 %v1115
    %1247 = vmatpush.msra.mxu0 %v1113
    %1248 = vmatmul.f32.gmra.mxu0 %v1176
    %v1249 = vpop.f32.mrf.mxu0
    %v1250 = vadd.f32 0.0, %v1249
    %1251 = vmatmul.f32.gmra.mxu0 %v1181
    %v1252 = vpop.f32.mrf.mxu0
    %v1253 = vadd.f32 0.0, %v1252
    %1254 = vmatmul.f32.gmra.mxu0 %v1185
    %v1255 = vpop.f32.mrf.mxu0
    %v1256 = vadd.f32 0.0, %v1255
    %1257 = vmatmul.f32.gmra.mxu0 %v1189
    %v1258 = vpop.f32.mrf.mxu0
    %v1259 = vadd.f32 0.0, %v1258
    %1260 = vmatmul.f32.gmra.mxu0 %v1193
    %v1261 = vpop.f32.mrf.mxu0
    %v1262 = vadd.f32 0.0, %v1261
    %1263 = vmatmul.f32.gmra.mxu0 %v1197
    %v1264 = vpop.f32.mrf.mxu0
    %v1265 = vadd.f32 0.0, %v1264
    %1266 = vmatmul.f32.gmra.mxu0 %v1201
    %v1267 = vpop.f32.mrf.mxu0
    %v1268 = vadd.f32 0.0, %v1267
    %1269 = vmatmul.f32.gmra.mxu0 %v1205
    %v1270 = vpop.f32.mrf.mxu0
    %v1271 = vadd.f32 0.0, %v1270
    %1272 = vdwg.mxu0
    %1273 = vmatpush.msra.mxu0 0.0
    %1274 = vmatpush.msra.mxu0 0.0
    %1275 = vmatpush.msra.mxu0 0.0
    %1276 = vmatpush.msra.mxu0 0.0
    %1277 = vmatpush.msra.mxu0 0.0
    %1278 = vmatpush.msra.mxu0 0.0
    %1279 = vmatpush.msra.mxu0 0.0
    %1280 = vmatpush.msra.mxu0 0.0
    %1281 = vmatpush.msra.mxu0 0.0
    %1282 = vmatpush.msra.mxu0 0.0
    %1283 = vmatpush.msra.mxu0 0.0
    %1284 = vmatpush.msra.mxu0 %v1153
    %1285 = vmatpush.msra.mxu0 %v1151
    %1286 = vmatpush.msra.mxu0 %v1149
    %1287 = vmatpush.msra.mxu0 %v1147
    %1288 = vmatpush.msra.mxu0 %v1145
    %1289 = vmatmul.f32.gmra.mxu0 %v1216
    %v1290 = vpop.f32.mrf.mxu0
    %v1291 = vadd.f32 %v1250, %v1290
    %1292 = vmatmul.f32.gmra.mxu0 %v1218
    %v1293 = vpop.f32.mrf.mxu0
    %v1294 = vadd.f32 %v1253, %v1293
    %1295 = vmatmul.f32.gmra.mxu0 %v1220
    %v1296 = vpop.f32.mrf.mxu0
    %v1297 = vadd.f32 %v1256, %v1296
    %1298 = vmatmul.f32.gmra.mxu0 %v1222
    %v1299 = vpop.f32.mrf.mxu0
    %v1300 = vadd.f32 %v1259, %v1299
    %1301 = vmatmul.f32.gmra.mxu0 %v1224
    %v1302 = vpop.f32.mrf.mxu0
    %v1303 = vadd.f32 %v1262, %v1302
    %1304 = vmatmul.f32.gmra.mxu0 %v1226
    %v1305 = vpop.f32.mrf.mxu0
    %v1306 = vadd.f32 %v1265, %v1305
    %1307 = vmatmul.f32.gmra.mxu0 %v1228
    %v1308 = vpop.f32.mrf.mxu0
    %v1309 = vadd.f32 %v1268, %v1308
    %1310 = vmatmul.f32.gmra.mxu0 %v1230
    %v1311 = vpop.f32.mrf.mxu0
    %v1312 = vadd.f32 %v1271, %v1311
    %1313 = vdwg.mxu0
    %1314 = vmatpush.msra.mxu0 %v1144
    %1315 = vmatpush.msra.mxu0 %v1142
    %1316 = vmatpush.msra.mxu0 %v1140
    %1317 = vmatpush.msra.mxu0 %v1138
    %1318 = vmatpush.msra.mxu0 %v1136
    %1319 = vmatpush.msra.mxu0 %v1134
    %1320 = vmatpush.msra.mxu0 %v1132
    %1321 = vmatpush.msra.mxu0 %v1130
    %1322 = vmatpush.msra.mxu0 %v1128
    %1323 = vmatpush.msra.mxu0 %v1126
    %1324 = vmatpush.msra.mxu0 %v1124
    %1325 = vmatpush.msra.mxu0 %v1122
    %1326 = vmatpush.msra.mxu0 %v1120
    %1327 = vmatpush.msra.mxu0 %v1118
    %1328 = vmatpush.msra.mxu0 %v1116
    %1329 = vmatpush.msra.mxu0 %v1114
    %1330 = vmatmul.f32.gmra.mxu0 %v1176
    %v1331 = vpop.f32.mrf.mxu0
    %v1332 = vadd.f32 0.0, %v1331
    %1333 = vmatmul.f32.gmra.mxu0 %v1181
    %v1334 = vpop.f32.mrf.mxu0
    %v1335 = vadd.f32 0.0, %v1334
    %1336 = vmatmul.f32.gmra.mxu0 %v1185
    %v1337 = vpop.f32.mrf.mxu0
    %v1338 = vadd.f32 0.0, %v1337
    %1339 = vmatmul.f32.gmra.mxu0 %v1189
    %v1340 = vpop.f32.mrf.mxu0
    %v1341 = vadd.f32 0.0, %v1340
    %1342 = vmatmul.f32.gmra.mxu0 %v1193
    %v1343 = vpop.f32.mrf.mxu0
    %v1344 = vadd.f32 0.0, %v1343
    %1345 = vmatmul.f32.gmra.mxu0 %v1197
    %v1346 = vpop.f32.mrf.mxu0
    %v1347 = vadd.f32 0.0, %v1346
    %1348 = vmatmul.f32.gmra.mxu0 %v1201
    %v1349 = vpop.f32.mrf.mxu0
    %v1350 = vadd.f32 0.0, %v1349
    %1351 = vmatmul.f32.gmra.mxu0 %v1205
    %v1352 = vpop.f32.mrf.mxu0
    %v1353 = vadd.f32 0.0, %v1352
    %1354 = vdwg.mxu0
    %1355 = vmatpush.msra.mxu0 0.0
    %1356 = vmatpush.msra.mxu0 0.0
    %1357 = vmatpush.msra.mxu0 0.0
    %1358 = vmatpush.msra.mxu0 0.0
    %1359 = vmatpush.msra.mxu0 0.0
    %1360 = vmatpush.msra.mxu0 0.0
    %1361 = vmatpush.msra.mxu0 0.0
    %1362 = vmatpush.msra.mxu0 0.0
    %1363 = vmatpush.msra.mxu0 0.0
    %1364 = vmatpush.msra.mxu0 0.0
    %1365 = vmatpush.msra.mxu0 0.0
    %1366 = vmatpush.msra.mxu0 %v1154
    %1367 = vmatpush.msra.mxu0 %v1152
    %1368 = vmatpush.msra.mxu0 %v1150
    %1369 = vmatpush.msra.mxu0 %v1148
    %1370 = vmatpush.msra.mxu0 %v1146
    %1371 = vmatmul.f32.gmra.mxu0 %v1216
    %v1372 = vpop.f32.mrf.mxu0
    %v1373 = vadd.f32 %v1332, %v1372
    %1374 = vmatmul.f32.gmra.mxu0 %v1218
    %v1375 = vpop.f32.mrf.mxu0
    %v1376 = vadd.f32 %v1335, %v1375
    %1377 = vmatmul.f32.gmra.mxu0 %v1220
    %v1378 = vpop.f32.mrf.mxu0
    %v1379 = vadd.f32 %v1338, %v1378
    %1380 = vmatmul.f32.gmra.mxu0 %v1222
    %v1381 = vpop.f32.mrf.mxu0
    %v1382 = vadd.f32 %v1341, %v1381
    %1383 = vmatmul.f32.gmra.mxu0 %v1224
    %v1384 = vpop.f32.mrf.mxu0
    %v1385 = vadd.f32 %v1344, %v1384
    %1386 = vmatmul.f32.gmra.mxu0 %v1226
    %v1387 = vpop.f32.mrf.mxu0
    %v1388 = vadd.f32 %v1347, %v1387
    %1389 = vmatmul.f32.gmra.mxu0 %v1228
    %v1390 = vpop.f32.mrf.mxu0
    %v1391 = vadd.f32 %v1350, %v1390
    %1392 = vmatmul.f32.gmra.mxu0 %v1230
    %v1393 = vpop.f32.mrf.mxu0
    %v1394 = vadd.f32 %v1353, %v1393
    %1395 = vdwg.mxu0
    %v1397 = vsel %vm40, %v1051, 0
    %v1399 = vsel %vm40, %v1053, 0
    %v1401 = vsel %vm40, %v1055, 0
    %v1403 = vsel %vm40, %v1057, 0
    %v1405 = vsel %vm40, %v1059, 0
    %v1407 = vsel %vm40, %v1061, 0
    %v1409 = vsel %vm40, %v1063, 0
    %v1411 = vsel %vm40, %v1065, 0
    %1413 = vmatpush.msra.mxu0 %v1096
    %1414 = vmatpush.msra.mxu0 %v1094
    %1415 = vmatpush.msra.mxu0 %v1092
    %1416 = vmatpush.msra.mxu0 %v1090
    %1417 = vmatpush.msra.mxu0 %v1088
    %1418 = vmatpush.msra.mxu0 %v1086
    %1419 = vmatpush.msra.mxu0 %v1084
    %1420 = vmatpush.msra.mxu0 %v1082
    %1421 = vmatpush.msra.mxu0 %v1080
    %1422 = vmatpush.msra.mxu0 %v1078
    %1423 = vmatpush.msra.mxu0 %v1076
    %1424 = vmatpush.msra.mxu0 %v1074
    %1425 = vmatpush.msra.mxu0 %v1072
    %1426 = vmatpush.msra.mxu0 %v1070
    %1427 = vmatpush.msra.mxu0 %v1068
    %1428 = vmatpush.msra.mxu0 %v1066
    %1429 = vmatmul.f32.gmra.mxu0 %v1050
    %v1430 = vpop.f32.mrf.mxu0
    %v1431 = vadd.f32 %v1291, %v1430
    %1432 = vmatmul.f32.gmra.mxu0 %v1052
    %v1433 = vpop.f32.mrf.mxu0
    %v1434 = vadd.f32 %v1294, %v1433
    %1435 = vmatmul.f32.gmra.mxu0 %v1054
    %v1436 = vpop.f32.mrf.mxu0
    %v1437 = vadd.f32 %v1297, %v1436
    %1438 = vmatmul.f32.gmra.mxu0 %v1056
    %v1439 = vpop.f32.mrf.mxu0
    %v1440 = vadd.f32 %v1300, %v1439
    %1441 = vmatmul.f32.gmra.mxu0 %v1058
    %v1442 = vpop.f32.mrf.mxu0
    %v1443 = vadd.f32 %v1303, %v1442
    %1444 = vmatmul.f32.gmra.mxu0 %v1060
    %v1445 = vpop.f32.mrf.mxu0
    %v1446 = vadd.f32 %v1306, %v1445
    %1447 = vmatmul.f32.gmra.mxu0 %v1062
    %v1448 = vpop.f32.mrf.mxu0
    %v1449 = vadd.f32 %v1309, %v1448
    %1450 = vmatmul.f32.gmra.mxu0 %v1064
    %v1451 = vpop.f32.mrf.mxu0
    %v1452 = vadd.f32 %v1312, %v1451
    %1453 = vdwg.mxu0
    %1454 = vmatpush.msra.mxu0 0.0
    %1455 = vmatpush.msra.mxu0 0.0
    %1456 = vmatpush.msra.mxu0 0.0
    %1457 = vmatpush.msra.mxu0 0.0
    %1458 = vmatpush.msra.mxu0 0.0
    %1459 = vmatpush.msra.mxu0 0.0
    %1460 = vmatpush.msra.mxu0 0.0
    %1461 = vmatpush.msra.mxu0 0.0
    %1462 = vmatpush.msra.mxu0 0.0
    %1463 = vmatpush.msra.mxu0 0.0
    %1464 = vmatpush.msra.mxu0 0.0
    %1465 = vmatpush.msra.mxu0 %v1106
    %1466 = vmatpush.msra.mxu0 %v1104
    %1467 = vmatpush.msra.mxu0 %v1102
    %1468 = vmatpush.msra.mxu0 %v1100
    %1469 = vmatpush.msra.mxu0 %v1098
    %1470 = vmatmul.f32.gmra.mxu0 %v1397
    %v1471 = vpop.f32.mrf.mxu0
    %v1472 = vadd.f32 %v1431, %v1471
    %1473 = vmatmul.f32.gmra.mxu0 %v1399
    %v1474 = vpop.f32.mrf.mxu0
    %v1475 = vadd.f32 %v1434, %v1474
    %1476 = vmatmul.f32.gmra.mxu0 %v1401
    %v1477 = vpop.f32.mrf.mxu0
    %v1478 = vadd.f32 %v1437, %v1477
    %1479 = vmatmul.f32.gmra.mxu0 %v1403
    %v1480 = vpop.f32.mrf.mxu0
    %v1481 = vadd.f32 %v1440, %v1480
    %1482 = vmatmul.f32.gmra.mxu0 %v1405
    %v1483 = vpop.f32.mrf.mxu0
    %v1484 = vadd.f32 %v1443, %v1483
    %1485 = vmatmul.f32.gmra.mxu0 %v1407
    %v1486 = vpop.f32.mrf.mxu0
    %v1487 = vadd.f32 %v1446, %v1486
    %1488 = vmatmul.f32.gmra.mxu0 %v1409
    %v1489 = vpop.f32.mrf.mxu0
    %v1490 = vadd.f32 %v1449, %v1489
    %1491 = vmatmul.f32.gmra.mxu0 %v1411
    %v1492 = vpop.f32.mrf.mxu0
    %v1493 = vadd.f32 %v1452, %v1492
    %1494 = vdwg.mxu0
    %1495 = vmatpush.msra.mxu0 %v1097
    %1496 = vmatpush.msra.mxu0 %v1095
    %1497 = vmatpush.msra.mxu0 %v1093
    %1498 = vmatpush.msra.mxu0 %v1091
    %1499 = vmatpush.msra.mxu0 %v1089
    %1500 = vmatpush.msra.mxu0 %v1087
    %1501 = vmatpush.msra.mxu0 %v1085
    %1502 = vmatpush.msra.mxu0 %v1083
    %1503 = vmatpush.msra.mxu0 %v1081
    %1504 = vmatpush.msra.mxu0 %v1079
    %1505 = vmatpush.msra.mxu0 %v1077
    %1506 = vmatpush.msra.mxu0 %v1075
    %1507 = vmatpush.msra.mxu0 %v1073
    %1508 = vmatpush.msra.mxu0 %v1071
    %1509 = vmatpush.msra.mxu0 %v1069
    %1510 = vmatpush.msra.mxu0 %v1067
    %1511 = vmatmul.f32.gmra.mxu0 %v1050
    %v1512 = vpop.f32.mrf.mxu0
    %v1513 = vadd.f32 %v1373, %v1512
    %1514 = vmatmul.f32.gmra.mxu0 %v1052
    %v1515 = vpop.f32.mrf.mxu0
    %v1516 = vadd.f32 %v1376, %v1515
    %1517 = vmatmul.f32.gmra.mxu0 %v1054
    %v1518 = vpop.f32.mrf.mxu0
    %v1519 = vadd.f32 %v1379, %v1518
    %1520 = vmatmul.f32.gmra.mxu0 %v1056
    %v1521 = vpop.f32.mrf.mxu0
    %v1522 = vadd.f32 %v1382, %v1521
    %1523 = vmatmul.f32.gmra.mxu0 %v1058
    %v1524 = vpop.f32.mrf.mxu0
    %v1525 = vadd.f32 %v1385, %v1524
    %1526 = vmatmul.f32.gmra.mxu0 %v1060
    %v1527 = vpop.f32.mrf.mxu0
    %v1528 = vadd.f32 %v1388, %v1527
    %1529 = vmatmul.f32.gmra.mxu0 %v1062
    %v1530 = vpop.f32.mrf.mxu0
    %v1531 = vadd.f32 %v1391, %v1530
    %1532 = vmatmul.f32.gmra.mxu0 %v1064
    %v1533 = vpop.f32.mrf.mxu0
    %v1534 = vadd.f32 %v1394, %v1533
    %1535 = vdwg.mxu0
    %1536 = vmatpush.msra.mxu0 0.0
    %1537 = vmatpush.msra.mxu0 0.0
    %1538 = vmatpush.msra.mxu0 0.0
    %1539 = vmatpush.msra.mxu0 0.0
    %1540 = vmatpush.msra.mxu0 0.0
    %1541 = vmatpush.msra.mxu0 0.0
    %1542 = vmatpush.msra.mxu0 0.0
    %1543 = vmatpush.msra.mxu0 0.0
    %1544 = vmatpush.msra.mxu0 0.0
    %1545 = vmatpush.msra.mxu0 0.0
    %1546 = vmatpush.msra.mxu0 0.0
    %1547 = vmatpush.msra.mxu0 %v1107
    %1548 = vmatpush.msra.mxu0 %v1105
    %1549 = vmatpush.msra.mxu0 %v1103
    %1550 = vmatpush.msra.mxu0 %v1101
    %1551 = vmatpush.msra.mxu0 %v1099
    %1552 = vmatmul.f32.gmra.mxu0 %v1397
    %v1553 = vpop.f32.mrf.mxu0
    %v1554 = vadd.f32 %v1513, %v1553
    %1555 = vmatmul.f32.gmra.mxu0 %v1399
    %v1556 = vpop.f32.mrf.mxu0
    %v1557 = vadd.f32 %v1516, %v1556
    %1558 = vmatmul.f32.gmra.mxu0 %v1401
    %v1559 = vpop.f32.mrf.mxu0
    %v1560 = vadd.f32 %v1519, %v1559
    %1561 = vmatmul.f32.gmra.mxu0 %v1403
    %v1562 = vpop.f32.mrf.mxu0
    %v1563 = vadd.f32 %v1522, %v1562
    %1564 = vmatmul.f32.gmra.mxu0 %v1405
    %v1565 = vpop.f32.mrf.mxu0
    %v1566 = vadd.f32 %v1525, %v1565
    %1567 = vmatmul.f32.gmra.mxu0 %v1407
    %v1568 = vpop.f32.mrf.mxu0
    %v1569 = vadd.f32 %v1528, %v1568
    %1570 = vmatmul.f32.gmra.mxu0 %v1409
    %v1571 = vpop.f32.mrf.mxu0
    %v1572 = vadd.f32 %v1531, %v1571
    %1573 = vmatmul.f32.gmra.mxu0 %v1411
    %v1574 = vpop.f32.mrf.mxu0
    %v1575 = vadd.f32 %v1534, %v1574
    %1576 = vdwg.mxu0
    %v1577 = vld [vmem:[#allocation3] sm:$0xf0]
    %v1578 = vld [vmem:[#allocation3 + $0x8] sm:$0xf0]
    %v1579 = vld [vmem:[#allocation3 + $0x80] sm:$0xf]
    %v1580 = vld [vmem:[#allocation3 + $0x88] sm:$0xf]
    %s1581 = scalar_lea.vmem %s3, 672
    %v1582 = vld [vmem:[%s1581] sm:$0xff]
    %v1583 = vld [vmem:[%s1581 + $0x8] sm:$0xff]
    %v1584 = vld [vmem:[%s1581 + $0x10] sm:$0xff]
    %v1585 = vld [vmem:[%s1581 + $0x18] sm:$0xff]
    %v1586 = vld [vmem:[%s1581 + $0x20] sm:$0xff]
    %v1587 = vld [vmem:[%s1581 + $0x28] sm:$0xff]
    %v1588 = vld [vmem:[%s1581 + $0x30] sm:$0xff]
    %v1589 = vld [vmem:[%s1581 + $0x38] sm:$0xff]
    %v1590 = vld [vmem:[%s1581 + $0x40] sm:$0xff]
    %v1591 = vld [vmem:[%s1581 + $0x48] sm:$0xff]
    %v1592 = vld [vmem:[%s1581 + $0x50] sm:$0xff]
    %v1593 = vld [vmem:[%s1581 + $0x58] sm:$0xff]
    %v1594 = vld [vmem:[%s1581 + $0x60] sm:$0xff]
    %v1595 = vld [vmem:[%s1581 + $0x68] sm:$0xff]
    %v1596 = vld [vmem:[%s1581 + $0x70] sm:$0xff]
    %v1597 = vld [vmem:[%s1581 + $0x78] sm:$0xff]
    %v1598 = vld [vmem:[%s1581 + $0x80] sm:$0xff]
    %v1599 = vld [vmem:[%s1581 + $0x88] sm:$0xff]
    %v1600 = vld [vmem:[%s1581 + $0x90] sm:$0xff]
    %v1601 = vld [vmem:[%s1581 + $0x98] sm:$0xff]
    %v1602 = vld [vmem:[%s1581 + $0xa0] sm:$0xff]
    %v1603 = vld [vmem:[%s1581 + $0xa8] sm:$0xff]
    %v1604 = vld [vmem:[%s1581 + $0xb0] sm:$0xff]
    %v1605 = vld [vmem:[%s1581 + $0xb8] sm:$0xff]
    %v1606 = vld [vmem:[%s1581 + $0xc0] sm:$0xff]
    %v1607 = vld [vmem:[%s1581 + $0xc8] sm:$0xff]
    %v1608 = vld [vmem:[%s1581 + $0xd0] sm:$0xff]
    %v1609 = vld [vmem:[%s1581 + $0xd8] sm:$0xff]
    %v1610 = vld [vmem:[%s1581 + $0xe0] sm:$0xff]
    %v1611 = vld [vmem:[%s1581 + $0xe8] sm:$0xff]
    %v1612 = vld [vmem:[%s1581 + $0xf0] sm:$0xff]
    %v1613 = vld [vmem:[%s1581 + $0xf8] sm:$0xff]
    %v1614 = vld [vmem:[%s1581 + $0x100] sm:$0xff]
    %v1615 = vld [vmem:[%s1581 + $0x108] sm:$0xff]
    %v1616 = vld [vmem:[%s1581 + $0x110] sm:$0xff]
    %v1617 = vld [vmem:[%s1581 + $0x118] sm:$0xff]
    %v1618 = vld [vmem:[%s1581 + $0x120] sm:$0xff]
    %v1619 = vld [vmem:[%s1581 + $0x128] sm:$0xff]
    %v1620 = vld [vmem:[%s1581 + $0x130] sm:$0xff]
    %v1621 = vld [vmem:[%s1581 + $0x138] sm:$0xff]
    %v1622 = vld [vmem:[%s1581 + $0x140] sm:$0xff]
    %v1623 = vld [vmem:[%s1581 + $0x148] sm:$0xff]
    %vm1628 = vcmask 1043456
    %v1629 = vrot.slane %v1577, 4
    %v1630 = vrot.slane %v1052, 4
    %v1631 = vsel %vm1628, %v1629, %v1630
    %v1632 = vrot.slane %v1578, 4
    %v1633 = vrot.slane %v1053, 4
    %v1634 = vsel %vm1628, %v1632, %v1633
    %v1635 = vrot.slane %v1054, 4
    %v1636 = vsel %vm1628, %v1630, %v1635
    %v1637 = vrot.slane %v1055, 4
    %v1638 = vsel %vm1628, %v1633, %v1637
    %v1639 = vrot.slane %v1056, 4
    %v1640 = vsel %vm1628, %v1635, %v1639
    %v1641 = vrot.slane %v1057, 4
    %v1642 = vsel %vm1628, %v1637, %v1641
    %v1643 = vrot.slane %v1058, 4
    %v1644 = vsel %vm1628, %v1639, %v1643
    %v1645 = vrot.slane %v1059, 4
    %v1646 = vsel %vm1628, %v1641, %v1645
    %v1647 = vrot.slane %v1060, 4
    %v1648 = vsel %vm1628, %v1643, %v1647
    %v1649 = vrot.slane %v1061, 4
    %v1650 = vsel %vm1628, %v1645, %v1649
    %v1651 = vrot.slane %v1062, 4
    %v1652 = vsel %vm1628, %v1647, %v1651
    %v1653 = vrot.slane %v1063, 4
    %v1654 = vsel %vm1628, %v1649, %v1653
    %v1655 = vrot.slane %v1064, 4
    %v1656 = vsel %vm1628, %v1651, %v1655
    %v1657 = vrot.slane %v1065, 4
    %v1658 = vsel %vm1628, %v1653, %v1657
    %v1659 = vrot.slane %v1579, 4
    %v1660 = vsel %vm1628, %v1655, %v1659
    %v1661 = vrot.slane %v1580, 4
    %v1662 = vsel %vm1628, %v1657, %v1661
    %v1671 = vsel %vm40, %v1634, 0
    %v1673 = vsel %vm40, %v1638, 0
    %v1675 = vsel %vm40, %v1642, 0
    %v1677 = vsel %vm40, %v1646, 0
    %v1679 = vsel %vm40, %v1650, 0
    %v1681 = vsel %vm40, %v1654, 0
    %v1683 = vsel %vm40, %v1658, 0
    %v1685 = vsel %vm40, %v1662, 0
    %1687 = vmatpush.msra.mxu0 %v1612
    %1688 = vmatpush.msra.mxu0 %v1610
    %1689 = vmatpush.msra.mxu0 %v1608
    %1690 = vmatpush.msra.mxu0 %v1606
    %1691 = vmatpush.msra.mxu0 %v1604
    %1692 = vmatpush.msra.mxu0 %v1602
    %1693 = vmatpush.msra.mxu0 %v1600
    %1694 = vmatpush.msra.mxu0 %v1598
    %1695 = vmatpush.msra.mxu0 %v1596
    %1696 = vmatpush.msra.mxu0 %v1594
    %1697 = vmatpush.msra.mxu0 %v1592
    %1698 = vmatpush.msra.mxu0 %v1590
    %1699 = vmatpush.msra.mxu0 %v1588
    %1700 = vmatpush.msra.mxu0 %v1586
    %1701 = vmatpush.msra.mxu0 %v1584
    %1702 = vmatpush.msra.mxu0 %v1582
    %1703 = vmatmul.f32.gmra.mxu0 %v1631
    %v1704 = vpop.f32.mrf.mxu0
    %v1705 = vadd.f32 0.0, %v1704
    %1706 = vmatmul.f32.gmra.mxu0 %v1636
    %v1707 = vpop.f32.mrf.mxu0
    %v1708 = vadd.f32 0.0, %v1707
    %1709 = vmatmul.f32.gmra.mxu0 %v1640
    %v1710 = vpop.f32.mrf.mxu0
    %v1711 = vadd.f32 0.0, %v1710
    %1712 = vmatmul.f32.gmra.mxu0 %v1644
    %v1713 = vpop.f32.mrf.mxu0
    %v1714 = vadd.f32 0.0, %v1713
    %1715 = vmatmul.f32.gmra.mxu0 %v1648
    %v1716 = vpop.f32.mrf.mxu0
    %v1717 = vadd.f32 0.0, %v1716
    %1718 = vmatmul.f32.gmra.mxu0 %v1652
    %v1719 = vpop.f32.mrf.mxu0
    %v1720 = vadd.f32 0.0, %v1719
    %1721 = vmatmul.f32.gmra.mxu0 %v1656
    %v1722 = vpop.f32.mrf.mxu0
    %v1723 = vadd.f32 0.0, %v1722
    %1724 = vmatmul.f32.gmra.mxu0 %v1660
    %v1725 = vpop.f32.mrf.mxu0
    %v1726 = vadd.f32 0.0, %v1725
    %1727 = vdwg.mxu0
    %1728 = vmatpush.msra.mxu0 0.0
    %1729 = vmatpush.msra.mxu0 0.0
    %1730 = vmatpush.msra.mxu0 0.0
    %1731 = vmatpush.msra.mxu0 0.0
    %1732 = vmatpush.msra.mxu0 0.0
    %1733 = vmatpush.msra.mxu0 0.0
    %1734 = vmatpush.msra.mxu0 0.0
    %1735 = vmatpush.msra.mxu0 0.0
    %1736 = vmatpush.msra.mxu0 0.0
    %1737 = vmatpush.msra.mxu0 0.0
    %1738 = vmatpush.msra.mxu0 0.0
    %1739 = vmatpush.msra.mxu0 %v1622
    %1740 = vmatpush.msra.mxu0 %v1620
    %1741 = vmatpush.msra.mxu0 %v1618
    %1742 = vmatpush.msra.mxu0 %v1616
    %1743 = vmatpush.msra.mxu0 %v1614
    %1744 = vmatmul.f32.gmra.mxu0 %v1671
    %v1745 = vpop.f32.mrf.mxu0
    %v1746 = vadd.f32 %v1705, %v1745
    %1747 = vmatmul.f32.gmra.mxu0 %v1673
    %v1748 = vpop.f32.mrf.mxu0
    %v1749 = vadd.f32 %v1708, %v1748
    %1750 = vmatmul.f32.gmra.mxu0 %v1675
    %v1751 = vpop.f32.mrf.mxu0
    %v1752 = vadd.f32 %v1711, %v1751
    %1753 = vmatmul.f32.gmra.mxu0 %v1677
    %v1754 = vpop.f32.mrf.mxu0
    %v1755 = vadd.f32 %v1714, %v1754
    %1756 = vmatmul.f32.gmra.mxu0 %v1679
    %v1757 = vpop.f32.mrf.mxu0
    %v1758 = vadd.f32 %v1717, %v1757
    %1759 = vmatmul.f32.gmra.mxu0 %v1681
    %v1760 = vpop.f32.mrf.mxu0
    %v1761 = vadd.f32 %v1720, %v1760
    %1762 = vmatmul.f32.gmra.mxu0 %v1683
    %v1763 = vpop.f32.mrf.mxu0
    %v1764 = vadd.f32 %v1723, %v1763
    %1765 = vmatmul.f32.gmra.mxu0 %v1685
    %v1766 = vpop.f32.mrf.mxu0
    %v1767 = vadd.f32 %v1726, %v1766
    %1768 = vdwg.mxu0
    %1769 = vmatpush.msra.mxu0 %v1613
    %1770 = vmatpush.msra.mxu0 %v1611
    %1771 = vmatpush.msra.mxu0 %v1609
    %1772 = vmatpush.msra.mxu0 %v1607
    %1773 = vmatpush.msra.mxu0 %v1605
    %1774 = vmatpush.msra.mxu0 %v1603
    %1775 = vmatpush.msra.mxu0 %v1601
    %1776 = vmatpush.msra.mxu0 %v1599
    %1777 = vmatpush.msra.mxu0 %v1597
    %1778 = vmatpush.msra.mxu0 %v1595
    %1779 = vmatpush.msra.mxu0 %v1593
    %1780 = vmatpush.msra.mxu0 %v1591
    %1781 = vmatpush.msra.mxu0 %v1589
    %1782 = vmatpush.msra.mxu0 %v1587
    %1783 = vmatpush.msra.mxu0 %v1585
    %1784 = vmatpush.msra.mxu0 %v1583
    %1785 = vmatmul.f32.gmra.mxu0 %v1631
    %v1786 = vpop.f32.mrf.mxu0
    %v1787 = vadd.f32 0.0, %v1786
    %1788 = vmatmul.f32.gmra.mxu0 %v1636
    %v1789 = vpop.f32.mrf.mxu0
    %v1790 = vadd.f32 0.0, %v1789
    %1791 = vmatmul.f32.gmra.mxu0 %v1640
    %v1792 = vpop.f32.mrf.mxu0
    %v1793 = vadd.f32 0.0, %v1792
    %1794 = vmatmul.f32.gmra.mxu0 %v1644
    %v1795 = vpop.f32.mrf.mxu0
    %v1796 = vadd.f32 0.0, %v1795
    %1797 = vmatmul.f32.gmra.mxu0 %v1648
    %v1798 = vpop.f32.mrf.mxu0
    %v1799 = vadd.f32 0.0, %v1798
    %1800 = vmatmul.f32.gmra.mxu0 %v1652
    %v1801 = vpop.f32.mrf.mxu0
    %v1802 = vadd.f32 0.0, %v1801
    %1803 = vmatmul.f32.gmra.mxu0 %v1656
    %v1804 = vpop.f32.mrf.mxu0
    %v1805 = vadd.f32 0.0, %v1804
    %1806 = vmatmul.f32.gmra.mxu0 %v1660
    %v1807 = vpop.f32.mrf.mxu0
    %v1808 = vadd.f32 0.0, %v1807
    %1809 = vdwg.mxu0
    %1810 = vmatpush.msra.mxu0 0.0
    %1811 = vmatpush.msra.mxu0 0.0
    %1812 = vmatpush.msra.mxu0 0.0
    %1813 = vmatpush.msra.mxu0 0.0
    %1814 = vmatpush.msra.mxu0 0.0
    %1815 = vmatpush.msra.mxu0 0.0
    %1816 = vmatpush.msra.mxu0 0.0
    %1817 = vmatpush.msra.mxu0 0.0
    %1818 = vmatpush.msra.mxu0 0.0
    %1819 = vmatpush.msra.mxu0 0.0
    %1820 = vmatpush.msra.mxu0 0.0
    %1821 = vmatpush.msra.mxu0 %v1623
    %1822 = vmatpush.msra.mxu0 %v1621
    %1823 = vmatpush.msra.mxu0 %v1619
    %1824 = vmatpush.msra.mxu0 %v1617
    %1825 = vmatpush.msra.mxu0 %v1615
    %1826 = vmatmul.f32.gmra.mxu0 %v1671
    %v1827 = vpop.f32.mrf.mxu0
    %v1828 = vadd.f32 %v1787, %v1827
    %1829 = vmatmul.f32.gmra.mxu0 %v1673
    %v1830 = vpop.f32.mrf.mxu0
    %v1831 = vadd.f32 %v1790, %v1830
    %1832 = vmatmul.f32.gmra.mxu0 %v1675
    %v1833 = vpop.f32.mrf.mxu0
    %v1834 = vadd.f32 %v1793, %v1833
    %1835 = vmatmul.f32.gmra.mxu0 %v1677
    %v1836 = vpop.f32.mrf.mxu0
    %v1837 = vadd.f32 %v1796, %v1836
    %1838 = vmatmul.f32.gmra.mxu0 %v1679
    %v1839 = vpop.f32.mrf.mxu0
    %v1840 = vadd.f32 %v1799, %v1839
    %1841 = vmatmul.f32.gmra.mxu0 %v1681
    %v1842 = vpop.f32.mrf.mxu0
    %v1843 = vadd.f32 %v1802, %v1842
    %1844 = vmatmul.f32.gmra.mxu0 %v1683
    %v1845 = vpop.f32.mrf.mxu0
    %v1846 = vadd.f32 %v1805, %v1845
    %1847 = vmatmul.f32.gmra.mxu0 %v1685
    %v1848 = vpop.f32.mrf.mxu0
    %v1849 = vadd.f32 %v1808, %v1848
    %1850 = vdwg.mxu0
    %v1851 = vadd.f32 %v1472, %v1746
    %v1852 = vadd.f32 %v1554, %v1828
    %v1853 = vadd.f32 %v1475, %v1749
    %v1854 = vadd.f32 %v1557, %v1831
    %v1855 = vadd.f32 %v1478, %v1752
    %v1856 = vadd.f32 %v1560, %v1834
    %v1857 = vadd.f32 %v1481, %v1755
    %v1858 = vadd.f32 %v1563, %v1837
    %v1859 = vadd.f32 %v1484, %v1758
    %v1860 = vadd.f32 %v1566, %v1840
    %v1861 = vadd.f32 %v1487, %v1761
    %v1862 = vadd.f32 %v1569, %v1843
    %v1863 = vadd.f32 %v1490, %v1764
    %v1864 = vadd.f32 %v1572, %v1846
    %v1865 = vadd.f32 %v1493, %v1767
    %v1866 = vadd.f32 %v1575, %v1849
    %v1867 = vld [vmem:[#allocation3] sm:$0xc0]
    %v1868 = vld [vmem:[#allocation3 + $0x8] sm:$0xc0]
    %v1869 = vld [vmem:[#allocation3 + $0x80] sm:$0x3f]
    %v1870 = vld [vmem:[#allocation3 + $0x88] sm:$0x3f]
    %s1871 = scalar_lea.vmem %s3, 1008
    %v1872 = vld [vmem:[%s1871] sm:$0xff]
    %v1873 = vld [vmem:[%s1871 + $0x8] sm:$0xff]
    %v1874 = vld [vmem:[%s1871 + $0x10] sm:$0xff]
    %v1875 = vld [vmem:[%s1871 + $0x18] sm:$0xff]
    %v1876 = vld [vmem:[%s1871 + $0x20] sm:$0xff]
    %v1877 = vld [vmem:[%s1871 + $0x28] sm:$0xff]
    %v1878 = vld [vmem:[%s1871 + $0x30] sm:$0xff]
    %v1879 = vld [vmem:[%s1871 + $0x38] sm:$0xff]
    %v1880 = vld [vmem:[%s1871 + $0x40] sm:$0xff]
    %v1881 = vld [vmem:[%s1871 + $0x48] sm:$0xff]
    %v1882 = vld [vmem:[%s1871 + $0x50] sm:$0xff]
    %v1883 = vld [vmem:[%s1871 + $0x58] sm:$0xff]
    %v1884 = vld [vmem:[%s1871 + $0x60] sm:$0xff]
    %v1885 = vld [vmem:[%s1871 + $0x68] sm:$0xff]
    %v1886 = vld [vmem:[%s1871 + $0x70] sm:$0xff]
    %v1887 = vld [vmem:[%s1871 + $0x78] sm:$0xff]
    %v1888 = vld [vmem:[%s1871 + $0x80] sm:$0xff]
    %v1889 = vld [vmem:[%s1871 + $0x88] sm:$0xff]
    %v1890 = vld [vmem:[%s1871 + $0x90] sm:$0xff]
    %v1891 = vld [vmem:[%s1871 + $0x98] sm:$0xff]
    %v1892 = vld [vmem:[%s1871 + $0xa0] sm:$0xff]
    %v1893 = vld [vmem:[%s1871 + $0xa8] sm:$0xff]
    %v1894 = vld [vmem:[%s1871 + $0xb0] sm:$0xff]
    %v1895 = vld [vmem:[%s1871 + $0xb8] sm:$0xff]
    %v1896 = vld [vmem:[%s1871 + $0xc0] sm:$0xff]
    %v1897 = vld [vmem:[%s1871 + $0xc8] sm:$0xff]
    %v1898 = vld [vmem:[%s1871 + $0xd0] sm:$0xff]
    %v1899 = vld [vmem:[%s1871 + $0xd8] sm:$0xff]
    %v1900 = vld [vmem:[%s1871 + $0xe0] sm:$0xff]
    %v1901 = vld [vmem:[%s1871 + $0xe8] sm:$0xff]
    %v1902 = vld [vmem:[%s1871 + $0xf0] sm:$0xff]
    %v1903 = vld [vmem:[%s1871 + $0xf8] sm:$0xff]
    %v1904 = vld [vmem:[%s1871 + $0x100] sm:$0xff]
    %v1905 = vld [vmem:[%s1871 + $0x108] sm:$0xff]
    %v1906 = vld [vmem:[%s1871 + $0x110] sm:$0xff]
    %v1907 = vld [vmem:[%s1871 + $0x118] sm:$0xff]
    %v1908 = vld [vmem:[%s1871 + $0x120] sm:$0xff]
    %v1909 = vld [vmem:[%s1871 + $0x128] sm:$0xff]
    %v1910 = vld [vmem:[%s1871 + $0x130] sm:$0xff]
    %v1911 = vld [vmem:[%s1871 + $0x138] sm:$0xff]
    %v1912 = vld [vmem:[%s1871 + $0x140] sm:$0xff]
    %v1913 = vld [vmem:[%s1871 + $0x148] sm:$0xff]
    %vm1918 = vcmask 1041408
    %v1919 = vrot.slane %v1867, 6
    %v1920 = vrot.slane %v1052, 6
    %v1921 = vsel %vm1918, %v1919, %v1920
    %v1922 = vrot.slane %v1868, 6
    %v1923 = vrot.slane %v1053, 6
    %v1924 = vsel %vm1918, %v1922, %v1923
    %v1925 = vrot.slane %v1054, 6
    %v1926 = vsel %vm1918, %v1920, %v1925
    %v1927 = vrot.slane %v1055, 6
    %v1928 = vsel %vm1918, %v1923, %v1927
    %v1929 = vrot.slane %v1056, 6
    %v1930 = vsel %vm1918, %v1925, %v1929
    %v1931 = vrot.slane %v1057, 6
    %v1932 = vsel %vm1918, %v1927, %v1931
    %v1933 = vrot.slane %v1058, 6
    %v1934 = vsel %vm1918, %v1929, %v1933
    %v1935 = vrot.slane %v1059, 6
    %v1936 = vsel %vm1918, %v1931, %v1935
    %v1937 = vrot.slane %v1060, 6
    %v1938 = vsel %vm1918, %v1933, %v1937
    %v1939 = vrot.slane %v1061, 6
    %v1940 = vsel %vm1918, %v1935, %v1939
    %v1941 = vrot.slane %v1062, 6
    %v1942 = vsel %vm1918, %v1937, %v1941
    %v1943 = vrot.slane %v1063, 6
    %v1944 = vsel %vm1918, %v1939, %v1943
    %v1945 = vrot.slane %v1064, 6
    %v1946 = vsel %vm1918, %v1941, %v1945
    %v1947 = vrot.slane %v1065, 6
    %v1948 = vsel %vm1918, %v1943, %v1947
    %v1949 = vrot.slane %v1869, 6
    %v1950 = vsel %vm1918, %v1945, %v1949
    %v1951 = vrot.slane %v1870, 6
    %v1952 = vsel %vm1918, %v1947, %v1951
    %v1961 = vsel %vm40, %v1924, 0
    %v1963 = vsel %vm40, %v1928, 0
    %v1965 = vsel %vm40, %v1932, 0
    %v1967 = vsel %vm40, %v1936, 0
    %v1969 = vsel %vm40, %v1940, 0
    %v1971 = vsel %vm40, %v1944, 0
    %v1973 = vsel %vm40, %v1948, 0
    %v1975 = vsel %vm40, %v1952, 0
    %1977 = vmatpush.msra.mxu0 %v1902
    %1978 = vmatpush.msra.mxu0 %v1900
    %1979 = vmatpush.msra.mxu0 %v1898
    %1980 = vmatpush.msra.mxu0 %v1896
    %1981 = vmatpush.msra.mxu0 %v1894
    %1982 = vmatpush.msra.mxu0 %v1892
    %1983 = vmatpush.msra.mxu0 %v1890
    %1984 = vmatpush.msra.mxu0 %v1888
    %1985 = vmatpush.msra.mxu0 %v1886
    %1986 = vmatpush.msra.mxu0 %v1884
    %1987 = vmatpush.msra.mxu0 %v1882
    %1988 = vmatpush.msra.mxu0 %v1880
    %1989 = vmatpush.msra.mxu0 %v1878
    %1990 = vmatpush.msra.mxu0 %v1876
    %1991 = vmatpush.msra.mxu0 %v1874
    %1992 = vmatpush.msra.mxu0 %v1872
    %1993 = vmatmul.f32.gmra.mxu0 %v1921
    %v1994 = vpop.f32.mrf.mxu0
    %v1995 = vadd.f32 0.0, %v1994
    %1996 = vmatmul.f32.gmra.mxu0 %v1926
    %v1997 = vpop.f32.mrf.mxu0
    %v1998 = vadd.f32 0.0, %v1997
    %1999 = vmatmul.f32.gmra.mxu0 %v1930
    %v2000 = vpop.f32.mrf.mxu0
    %v2001 = vadd.f32 0.0, %v2000
    %2002 = vmatmul.f32.gmra.mxu0 %v1934
    %v2003 = vpop.f32.mrf.mxu0
    %v2004 = vadd.f32 0.0, %v2003
    %2005 = vmatmul.f32.gmra.mxu0 %v1938
    %v2006 = vpop.f32.mrf.mxu0
    %v2007 = vadd.f32 0.0, %v2006
    %2008 = vmatmul.f32.gmra.mxu0 %v1942
    %v2009 = vpop.f32.mrf.mxu0
    %v2010 = vadd.f32 0.0, %v2009
    %2011 = vmatmul.f32.gmra.mxu0 %v1946
    %v2012 = vpop.f32.mrf.mxu0
    %v2013 = vadd.f32 0.0, %v2012
    %2014 = vmatmul.f32.gmra.mxu0 %v1950
    %v2015 = vpop.f32.mrf.mxu0
    %v2016 = vadd.f32 0.0, %v2015
    %2017 = vdwg.mxu0
    %2018 = vmatpush.msra.mxu0 0.0
    %2019 = vmatpush.msra.mxu0 0.0
    %2020 = vmatpush.msra.mxu0 0.0
    %2021 = vmatpush.msra.mxu0 0.0
    %2022 = vmatpush.msra.mxu0 0.0
    %2023 = vmatpush.msra.mxu0 0.0
    %2024 = vmatpush.msra.mxu0 0.0
    %2025 = vmatpush.msra.mxu0 0.0
    %2026 = vmatpush.msra.mxu0 0.0
    %2027 = vmatpush.msra.mxu0 0.0
    %2028 = vmatpush.msra.mxu0 0.0
    %2029 = vmatpush.msra.mxu0 %v1912
    %2030 = vmatpush.msra.mxu0 %v1910
    %2031 = vmatpush.msra.mxu0 %v1908
    %2032 = vmatpush.msra.mxu0 %v1906
    %2033 = vmatpush.msra.mxu0 %v1904
    %2034 = vmatmul.f32.gmra.mxu0 %v1961
    %v2035 = vpop.f32.mrf.mxu0
    %v2036 = vadd.f32 %v1995, %v2035
    %2037 = vmatmul.f32.gmra.mxu0 %v1963
    %v2038 = vpop.f32.mrf.mxu0
    %v2039 = vadd.f32 %v1998, %v2038
    %2040 = vmatmul.f32.gmra.mxu0 %v1965
    %v2041 = vpop.f32.mrf.mxu0
    %v2042 = vadd.f32 %v2001, %v2041
    %2043 = vmatmul.f32.gmra.mxu0 %v1967
    %v2044 = vpop.f32.mrf.mxu0
    %v2045 = vadd.f32 %v2004, %v2044
    %2046 = vmatmul.f32.gmra.mxu0 %v1969
    %v2047 = vpop.f32.mrf.mxu0
    %v2048 = vadd.f32 %v2007, %v2047
    %2049 = vmatmul.f32.gmra.mxu0 %v1971
    %v2050 = vpop.f32.mrf.mxu0
    %v2051 = vadd.f32 %v2010, %v2050
    %2052 = vmatmul.f32.gmra.mxu0 %v1973
    %v2053 = vpop.f32.mrf.mxu0
    %v2054 = vadd.f32 %v2013, %v2053
    %2055 = vmatmul.f32.gmra.mxu0 %v1975
    %v2056 = vpop.f32.mrf.mxu0
    %v2057 = vadd.f32 %v2016, %v2056
    %2058 = vdwg.mxu0
    %2059 = vmatpush.msra.mxu0 %v1903
    %2060 = vmatpush.msra.mxu0 %v1901
    %2061 = vmatpush.msra.mxu0 %v1899
    %2062 = vmatpush.msra.mxu0 %v1897
    %2063 = vmatpush.msra.mxu0 %v1895
    %2064 = vmatpush.msra.mxu0 %v1893
    %2065 = vmatpush.msra.mxu0 %v1891
    %2066 = vmatpush.msra.mxu0 %v1889
    %2067 = vmatpush.msra.mxu0 %v1887
    %2068 = vmatpush.msra.mxu0 %v1885
    %2069 = vmatpush.msra.mxu0 %v1883
    %2070 = vmatpush.msra.mxu0 %v1881
    %2071 = vmatpush.msra.mxu0 %v1879
    %2072 = vmatpush.msra.mxu0 %v1877
    %2073 = vmatpush.msra.mxu0 %v1875
    %2074 = vmatpush.msra.mxu0 %v1873
    %2075 = vmatmul.f32.gmra.mxu0 %v1921
    %v2076 = vpop.f32.mrf.mxu0
    %v2077 = vadd.f32 0.0, %v2076
    %2078 = vmatmul.f32.gmra.mxu0 %v1926
    %v2079 = vpop.f32.mrf.mxu0
    %v2080 = vadd.f32 0.0, %v2079
    %2081 = vmatmul.f32.gmra.mxu0 %v1930
    %v2082 = vpop.f32.mrf.mxu0
    %v2083 = vadd.f32 0.0, %v2082
    %2084 = vmatmul.f32.gmra.mxu0 %v1934
    %v2085 = vpop.f32.mrf.mxu0
    %v2086 = vadd.f32 0.0, %v2085
    %2087 = vmatmul.f32.gmra.mxu0 %v1938
    %v2088 = vpop.f32.mrf.mxu0
    %v2089 = vadd.f32 0.0, %v2088
    %2090 = vmatmul.f32.gmra.mxu0 %v1942
    %v2091 = vpop.f32.mrf.mxu0
    %v2092 = vadd.f32 0.0, %v2091
    %2093 = vmatmul.f32.gmra.mxu0 %v1946
    %v2094 = vpop.f32.mrf.mxu0
    %v2095 = vadd.f32 0.0, %v2094
    %2096 = vmatmul.f32.gmra.mxu0 %v1950
    %v2097 = vpop.f32.mrf.mxu0
    %v2098 = vadd.f32 0.0, %v2097
    %2099 = vdwg.mxu0
    %2100 = vmatpush.msra.mxu0 0.0
    %2101 = vmatpush.msra.mxu0 0.0
    %2102 = vmatpush.msra.mxu0 0.0
    %2103 = vmatpush.msra.mxu0 0.0
    %2104 = vmatpush.msra.mxu0 0.0
    %2105 = vmatpush.msra.mxu0 0.0
    %2106 = vmatpush.msra.mxu0 0.0
    %2107 = vmatpush.msra.mxu0 0.0
    %2108 = vmatpush.msra.mxu0 0.0
    %2109 = vmatpush.msra.mxu0 0.0
    %2110 = vmatpush.msra.mxu0 0.0
    %2111 = vmatpush.msra.mxu0 %v1913
    %2112 = vmatpush.msra.mxu0 %v1911
    %2113 = vmatpush.msra.mxu0 %v1909
    %2114 = vmatpush.msra.mxu0 %v1907
    %2115 = vmatpush.msra.mxu0 %v1905
    %2116 = vmatmul.f32.gmra.mxu0 %v1961
    %v2117 = vpop.f32.mrf.mxu0
    %v2118 = vadd.f32 %v2077, %v2117
    %2119 = vmatmul.f32.gmra.mxu0 %v1963
    %v2120 = vpop.f32.mrf.mxu0
    %v2121 = vadd.f32 %v2080, %v2120
    %2122 = vmatmul.f32.gmra.mxu0 %v1965
    %v2123 = vpop.f32.mrf.mxu0
    %v2124 = vadd.f32 %v2083, %v2123
    %2125 = vmatmul.f32.gmra.mxu0 %v1967
    %v2126 = vpop.f32.mrf.mxu0
    %v2127 = vadd.f32 %v2086, %v2126
    %2128 = vmatmul.f32.gmra.mxu0 %v1969
    %v2129 = vpop.f32.mrf.mxu0
    %v2130 = vadd.f32 %v2089, %v2129
    %2131 = vmatmul.f32.gmra.mxu0 %v1971
    %v2132 = vpop.f32.mrf.mxu0
    %v2133 = vadd.f32 %v2092, %v2132
    %2134 = vmatmul.f32.gmra.mxu0 %v1973
    %v2135 = vpop.f32.mrf.mxu0
    %v2136 = vadd.f32 %v2095, %v2135
    %2137 = vmatmul.f32.gmra.mxu0 %v1975
    %v2138 = vpop.f32.mrf.mxu0
    %v2139 = vadd.f32 %v2098, %v2138
    %2140 = vdwg.mxu0
    %v2141 = vadd.f32 %v1851, %v2036
    %v2142 = vadd.f32 %v1852, %v2118
    %v2143 = vadd.f32 %v1853, %v2039
    %v2144 = vadd.f32 %v1854, %v2121
    %v2145 = vadd.f32 %v1855, %v2042
    %v2146 = vadd.f32 %v1856, %v2124
    %v2147 = vadd.f32 %v1857, %v2045
    %v2148 = vadd.f32 %v1858, %v2127
    %v2149 = vadd.f32 %v1859, %v2048
    %v2150 = vadd.f32 %v1860, %v2130
    %v2151 = vadd.f32 %v1861, %v2051
    %v2152 = vadd.f32 %v1862, %v2133
    %v2153 = vadd.f32 %v1863, %v2054
    %v2154 = vadd.f32 %v1864, %v2136
    %v2155 = vadd.f32 %v1865, %v2057
    %v2156 = vadd.f32 %v1866, %v2139
    %v2157 = vld [vmem:[#allocation3 + $0x80] sm:$0xff]
    %v2158 = vld [vmem:[#allocation3 + $0x88] sm:$0xff]
    %s2159 = scalar_lea.vmem %s3, 1344
    %v2160 = vld [vmem:[%s2159] sm:$0xff]
    %v2161 = vld [vmem:[%s2159 + $0x8] sm:$0xff]
    %v2162 = vld [vmem:[%s2159 + $0x10] sm:$0xff]
    %v2163 = vld [vmem:[%s2159 + $0x18] sm:$0xff]
    %v2164 = vld [vmem:[%s2159 + $0x20] sm:$0xff]
    %v2165 = vld [vmem:[%s2159 + $0x28] sm:$0xff]
    %v2166 = vld [vmem:[%s2159 + $0x30] sm:$0xff]
    %v2167 = vld [vmem:[%s2159 + $0x38] sm:$0xff]
    %v2168 = vld [vmem:[%s2159 + $0x40] sm:$0xff]
    %v2169 = vld [vmem:[%s2159 + $0x48] sm:$0xff]
    %v2170 = vld [vmem:[%s2159 + $0x50] sm:$0xff]
    %v2171 = vld [vmem:[%s2159 + $0x58] sm:$0xff]
    %v2172 = vld [vmem:[%s2159 + $0x60] sm:$0xff]
    %v2173 = vld [vmem:[%s2159 + $0x68] sm:$0xff]
    %v2174 = vld [vmem:[%s2159 + $0x70] sm:$0xff]
    %v2175 = vld [vmem:[%s2159 + $0x78] sm:$0xff]
    %v2176 = vld [vmem:[%s2159 + $0x80] sm:$0xff]
    %v2177 = vld [vmem:[%s2159 + $0x88] sm:$0xff]
    %v2178 = vld [vmem:[%s2159 + $0x90] sm:$0xff]
    %v2179 = vld [vmem:[%s2159 + $0x98] sm:$0xff]
    %v2180 = vld [vmem:[%s2159 + $0xa0] sm:$0xff]
    %v2181 = vld [vmem:[%s2159 + $0xa8] sm:$0xff]
    %v2182 = vld [vmem:[%s2159 + $0xb0] sm:$0xff]
    %v2183 = vld [vmem:[%s2159 + $0xb8] sm:$0xff]
    %v2184 = vld [vmem:[%s2159 + $0xc0] sm:$0xff]
    %v2185 = vld [vmem:[%s2159 + $0xc8] sm:$0xff]
    %v2186 = vld [vmem:[%s2159 + $0xd0] sm:$0xff]
    %v2187 = vld [vmem:[%s2159 + $0xd8] sm:$0xff]
    %v2188 = vld [vmem:[%s2159 + $0xe0] sm:$0xff]
    %v2189 = vld [vmem:[%s2159 + $0xe8] sm:$0xff]
    %v2190 = vld [vmem:[%s2159 + $0xf0] sm:$0xff]
    %v2191 = vld [vmem:[%s2159 + $0xf8] sm:$0xff]
    %v2192 = vld [vmem:[%s2159 + $0x100] sm:$0xff]
    %v2193 = vld [vmem:[%s2159 + $0x108] sm:$0xff]
    %v2194 = vld [vmem:[%s2159 + $0x110] sm:$0xff]
    %v2195 = vld [vmem:[%s2159 + $0x118] sm:$0xff]
    %v2196 = vld [vmem:[%s2159 + $0x120] sm:$0xff]
    %v2197 = vld [vmem:[%s2159 + $0x128] sm:$0xff]
    %v2198 = vld [vmem:[%s2159 + $0x130] sm:$0xff]
    %v2199 = vld [vmem:[%s2159 + $0x138] sm:$0xff]
    %v2200 = vld [vmem:[%s2159 + $0x140] sm:$0xff]
    %v2201 = vld [vmem:[%s2159 + $0x148] sm:$0xff]
    %v2203 = vsel %vm40, %v2158, 0
    %2205 = vmatpush.msra.mxu0 %v2190
    %2206 = vmatpush.msra.mxu0 %v2188
    %2207 = vmatpush.msra.mxu0 %v2186
    %2208 = vmatpush.msra.mxu0 %v2184
    %2209 = vmatpush.msra.mxu0 %v2182
    %2210 = vmatpush.msra.mxu0 %v2180
    %2211 = vmatpush.msra.mxu0 %v2178
    %2212 = vmatpush.msra.mxu0 %v2176
    %2213 = vmatpush.msra.mxu0 %v2174
    %2214 = vmatpush.msra.mxu0 %v2172
    %2215 = vmatpush.msra.mxu0 %v2170
    %2216 = vmatpush.msra.mxu0 %v2168
    %2217 = vmatpush.msra.mxu0 %v2166
    %2218 = vmatpush.msra.mxu0 %v2164
    %2219 = vmatpush.msra.mxu0 %v2162
    %2220 = vmatpush.msra.mxu0 %v2160
    %2221 = vmatmul.f32.gmra.mxu0 %v1052
    %v2222 = vpop.f32.mrf.mxu0
    %v2223 = vadd.f32 0.0, %v2222
    %2224 = vmatmul.f32.gmra.mxu0 %v1054
    %v2225 = vpop.f32.mrf.mxu0
    %v2226 = vadd.f32 0.0, %v2225
    %2227 = vmatmul.f32.gmra.mxu0 %v1056
    %v2228 = vpop.f32.mrf.mxu0
    %v2229 = vadd.f32 0.0, %v2228
    %2230 = vmatmul.f32.gmra.mxu0 %v1058
    %v2231 = vpop.f32.mrf.mxu0
    %v2232 = vadd.f32 0.0, %v2231
    %2233 = vmatmul.f32.gmra.mxu0 %v1060
    %v2234 = vpop.f32.mrf.mxu0
    %v2235 = vadd.f32 0.0, %v2234
    %2236 = vmatmul.f32.gmra.mxu0 %v1062
    %v2237 = vpop.f32.mrf.mxu0
    %v2238 = vadd.f32 0.0, %v2237
    %2239 = vmatmul.f32.gmra.mxu0 %v1064
    %v2240 = vpop.f32.mrf.mxu0
    %v2241 = vadd.f32 0.0, %v2240
    %2242 = vmatmul.f32.gmra.mxu0 %v2157
    %v2243 = vpop.f32.mrf.mxu0
    %v2244 = vadd.f32 0.0, %v2243
    %2245 = vdwg.mxu0
    %2246 = vmatpush.msra.mxu0 0.0
    %2247 = vmatpush.msra.mxu0 0.0
    %2248 = vmatpush.msra.mxu0 0.0
    %2249 = vmatpush.msra.mxu0 0.0
    %2250 = vmatpush.msra.mxu0 0.0
    %2251 = vmatpush.msra.mxu0 0.0
    %2252 = vmatpush.msra.mxu0 0.0
    %2253 = vmatpush.msra.mxu0 0.0
    %2254 = vmatpush.msra.mxu0 0.0
    %2255 = vmatpush.msra.mxu0 0.0
    %2256 = vmatpush.msra.mxu0 0.0
    %2257 = vmatpush.msra.mxu0 %v2200
    %2258 = vmatpush.msra.mxu0 %v2198
    %2259 = vmatpush.msra.mxu0 %v2196
    %2260 = vmatpush.msra.mxu0 %v2194
    %2261 = vmatpush.msra.mxu0 %v2192
    %2262 = vmatmul.f32.gmra.mxu0 %v1399
    %v2263 = vpop.f32.mrf.mxu0
    %v2264 = vadd.f32 %v2223, %v2263
    %2265 = vmatmul.f32.gmra.mxu0 %v1401
    %v2266 = vpop.f32.mrf.mxu0
    %v2267 = vadd.f32 %v2226, %v2266
    %2268 = vmatmul.f32.gmra.mxu0 %v1403
    %v2269 = vpop.f32.mrf.mxu0
    %v2270 = vadd.f32 %v2229, %v2269
    %2271 = vmatmul.f32.gmra.mxu0 %v1405
    %v2272 = vpop.f32.mrf.mxu0
    %v2273 = vadd.f32 %v2232, %v2272
    %2274 = vmatmul.f32.gmra.mxu0 %v1407
    %v2275 = vpop.f32.mrf.mxu0
    %v2276 = vadd.f32 %v2235, %v2275
    %2277 = vmatmul.f32.gmra.mxu0 %v1409
    %v2278 = vpop.f32.mrf.mxu0
    %v2279 = vadd.f32 %v2238, %v2278
    %2280 = vmatmul.f32.gmra.mxu0 %v1411
    %v2281 = vpop.f32.mrf.mxu0
    %v2282 = vadd.f32 %v2241, %v2281
    %2283 = vmatmul.f32.gmra.mxu0 %v2203
    %v2284 = vpop.f32.mrf.mxu0
    %v2285 = vadd.f32 %v2244, %v2284
    %2286 = vdwg.mxu0
    %2287 = vmatpush.msra.mxu0 %v2191
    %2288 = vmatpush.msra.mxu0 %v2189
    %2289 = vmatpush.msra.mxu0 %v2187
    %2290 = vmatpush.msra.mxu0 %v2185
    %2291 = vmatpush.msra.mxu0 %v2183
    %2292 = vmatpush.msra.mxu0 %v2181
    %2293 = vmatpush.msra.mxu0 %v2179
    %2294 = vmatpush.msra.mxu0 %v2177
    %2295 = vmatpush.msra.mxu0 %v2175
    %2296 = vmatpush.msra.mxu0 %v2173
    %2297 = vmatpush.msra.mxu0 %v2171
    %2298 = vmatpush.msra.mxu0 %v2169
    %2299 = vmatpush.msra.mxu0 %v2167
    %2300 = vmatpush.msra.mxu0 %v2165
    %2301 = vmatpush.msra.mxu0 %v2163
    %2302 = vmatpush.msra.mxu0 %v2161
    %2303 = vmatmul.f32.gmra.mxu0 %v1052
    %v2304 = vpop.f32.mrf.mxu0
    %v2305 = vadd.f32 0.0, %v2304
    %2306 = vmatmul.f32.gmra.mxu0 %v1054
    %v2307 = vpop.f32.mrf.mxu0
    %v2308 = vadd.f32 0.0, %v2307
    %2309 = vmatmul.f32.gmra.mxu0 %v1056
    %v2310 = vpop.f32.mrf.mxu0
    %v2311 = vadd.f32 0.0, %v2310
    %2312 = vmatmul.f32.gmra.mxu0 %v1058
    %v2313 = vpop.f32.mrf.mxu0
    %v2314 = vadd.f32 0.0, %v2313
    %2315 = vmatmul.f32.gmra.mxu0 %v1060
    %v2316 = vpop.f32.mrf.mxu0
    %v2317 = vadd.f32 0.0, %v2316
    %2318 = vmatmul.f32.gmra.mxu0 %v1062
    %v2319 = vpop.f32.mrf.mxu0
    %v2320 = vadd.f32 0.0, %v2319
    %2321 = vmatmul.f32.gmra.mxu0 %v1064
    %v2322 = vpop.f32.mrf.mxu0
    %v2323 = vadd.f32 0.0, %v2322
    %2324 = vmatmul.f32.gmra.mxu0 %v2157
    %v2325 = vpop.f32.mrf.mxu0
    %v2326 = vadd.f32 0.0, %v2325
    %2327 = vdwg.mxu0
    %2328 = vmatpush.msra.mxu0 0.0
    %2329 = vmatpush.msra.mxu0 0.0
    %2330 = vmatpush.msra.mxu0 0.0
    %2331 = vmatpush.msra.mxu0 0.0
    %2332 = vmatpush.msra.mxu0 0.0
    %2333 = vmatpush.msra.mxu0 0.0
    %2334 = vmatpush.msra.mxu0 0.0
    %2335 = vmatpush.msra.mxu0 0.0
    %2336 = vmatpush.msra.mxu0 0.0
    %2337 = vmatpush.msra.mxu0 0.0
    %2338 = vmatpush.msra.mxu0 0.0
    %2339 = vmatpush.msra.mxu0 %v2201
    %2340 = vmatpush.msra.mxu0 %v2199
    %2341 = vmatpush.msra.mxu0 %v2197
    %2342 = vmatpush.msra.mxu0 %v2195
    %2343 = vmatpush.msra.mxu0 %v2193
    %2344 = vmatmul.f32.gmra.mxu0 %v1399
    %v2345 = vpop.f32.mrf.mxu0
    %v2346 = vadd.f32 %v2305, %v2345
    %2347 = vmatmul.f32.gmra.mxu0 %v1401
    %v2348 = vpop.f32.mrf.mxu0
    %v2349 = vadd.f32 %v2308, %v2348
    %2350 = vmatmul.f32.gmra.mxu0 %v1403
    %v2351 = vpop.f32.mrf.mxu0
    %v2352 = vadd.f32 %v2311, %v2351
    %2353 = vmatmul.f32.gmra.mxu0 %v1405
    %v2354 = vpop.f32.mrf.mxu0
    %v2355 = vadd.f32 %v2314, %v2354
    %2356 = vmatmul.f32.gmra.mxu0 %v1407
    %v2357 = vpop.f32.mrf.mxu0
    %v2358 = vadd.f32 %v2317, %v2357
    %2359 = vmatmul.f32.gmra.mxu0 %v1409
    %v2360 = vpop.f32.mrf.mxu0
    %v2361 = vadd.f32 %v2320, %v2360
    %2362 = vmatmul.f32.gmra.mxu0 %v1411
    %v2363 = vpop.f32.mrf.mxu0
    %v2364 = vadd.f32 %v2323, %v2363
    %2365 = vmatmul.f32.gmra.mxu0 %v2203
    %v2366 = vpop.f32.mrf.mxu0
    %v2367 = vadd.f32 %v2326, %v2366
    %2368 = vdwg.mxu0
    %v2369 = vadd.f32 %v2141, %v2264
    %v2370 = vadd.f32 %v2142, %v2346
    %v2371 = vadd.f32 %v2143, %v2267
    %v2372 = vadd.f32 %v2144, %v2349
    %v2373 = vadd.f32 %v2145, %v2270
    %v2374 = vadd.f32 %v2146, %v2352
    %v2375 = vadd.f32 %v2147, %v2273
    %v2376 = vadd.f32 %v2148, %v2355
    %v2377 = vadd.f32 %v2149, %v2276
    %v2378 = vadd.f32 %v2150, %v2358
    %v2379 = vadd.f32 %v2151, %v2279
    %v2380 = vadd.f32 %v2152, %v2361
    %v2381 = vadd.f32 %v2153, %v2282
    %v2382 = vadd.f32 %v2154, %v2364
    %v2383 = vadd.f32 %v2155, %v2285
    %v2384 = vadd.f32 %v2156, %v2367
    %v2385 = vld [vmem:[%s4] sm:$0x3]
    %v2387 = vperm.slane %v2385, 0
    %v2388 = vperm.slane %v2385, 1
    %v2391 = vadd.f32 %v2369, %v2387
    %v2392 = vadd.f32 %v2370, %v2388
    %v2393 = vadd.f32 %v2371, %v2387
    %v2394 = vadd.f32 %v2372, %v2388
    %v2395 = vadd.f32 %v2373, %v2387
    %v2396 = vadd.f32 %v2374, %v2388
    %v2397 = vadd.f32 %v2375, %v2387
    %v2398 = vadd.f32 %v2376, %v2388
    %v2399 = vadd.f32 %v2377, %v2387
    %v2400 = vadd.f32 %v2378, %v2388
    %v2401 = vadd.f32 %v2379, %v2387
    %v2402 = vadd.f32 %v2380, %v2388
    %v2403 = vadd.f32 %v2381, %v2387
    %v2404 = vadd.f32 %v2382, %v2388
    %v2405 = vadd.f32 %v2383, %v2387
    %v2406 = vadd.f32 %v2384, %v2388
    %v2407 = vmax.f32 %v2391, 0.0
    %v2408 = vmax.f32 %v2392, 0.0
    %v2409 = vmax.f32 %v2393, 0.0
    %v2410 = vmax.f32 %v2394, 0.0
    %v2411 = vmax.f32 %v2395, 0.0
    %v2412 = vmax.f32 %v2396, 0.0
    %v2413 = vmax.f32 %v2397, 0.0
    %v2414 = vmax.f32 %v2398, 0.0
    %v2415 = vmax.f32 %v2399, 0.0
    %v2416 = vmax.f32 %v2400, 0.0
    %v2417 = vmax.f32 %v2401, 0.0
    %v2418 = vmax.f32 %v2402, 0.0
    %v2419 = vmax.f32 %v2403, 0.0
    %v2420 = vmax.f32 %v2404, 0.0
    %v2421 = vmax.f32 %v2405, 0.0
    %v2422 = vmax.f32 %v2406, 0.0
    %2423 = vst [vmem:[#allocation4] sm:$0xff] %v2407
    %2424 = vst.msk [vmem:[#allocation4 + $0x8] sm:$0xff] %vm77, %v2408
    %2425 = vst [vmem:[#allocation4 + $0x10] sm:$0xff] %v2409
    %2426 = vst.msk [vmem:[#allocation4 + $0x18] sm:$0xff] %vm77, %v2410
    %2427 = vst [vmem:[#allocation4 + $0x20] sm:$0xff] %v2411
    %2428 = vst.msk [vmem:[#allocation4 + $0x28] sm:$0xff] %vm77, %v2412
    %2429 = vst [vmem:[#allocation4 + $0x30] sm:$0xff] %v2413
    %2430 = vst.msk [vmem:[#allocation4 + $0x38] sm:$0xff] %vm77, %v2414
    %2431 = vst [vmem:[#allocation4 + $0x40] sm:$0xff] %v2415
    %2432 = vst.msk [vmem:[#allocation4 + $0x48] sm:$0xff] %vm77, %v2416
    %2433 = vst [vmem:[#allocation4 + $0x50] sm:$0xff] %v2417
    %2434 = vst.msk [vmem:[#allocation4 + $0x58] sm:$0xff] %vm77, %v2418
    %2435 = vst [vmem:[#allocation4 + $0x60] sm:$0xff] %v2419
    %2436 = vst.msk [vmem:[#allocation4 + $0x68] sm:$0xff] %vm77, %v2420
    %2437 = vst [vmem:[#allocation4 + $0x70] sm:$0xff] %v2421
    %2438 = vst.msk [vmem:[#allocation4 + $0x78] sm:$0xff] %vm77, %v2422
    %v2439 = vld [vmem:[#allocation4] sm:$0xff]
    %v2440 = vld [vmem:[#allocation4 + $0x8] sm:$0xff]
    %v2441 = vld [vmem:[#allocation4 + $0x10] sm:$0xff]
    %v2442 = vld [vmem:[#allocation4 + $0x18] sm:$0xff]
    %v2443 = vld [vmem:[#allocation4 + $0x20] sm:$0xff]
    %v2444 = vld [vmem:[#allocation4 + $0x28] sm:$0xff]
    %v2445 = vld [vmem:[#allocation4 + $0x30] sm:$0xff]
    %v2446 = vld [vmem:[#allocation4 + $0x38] sm:$0xff]
    %v2447 = vld [vmem:[#allocation4 + $0x40] sm:$0xff]
    %v2448 = vld [vmem:[#allocation4 + $0x48] sm:$0xff]
    %v2449 = vld [vmem:[#allocation4 + $0x50] sm:$0xff]
    %v2450 = vld [vmem:[#allocation4 + $0x58] sm:$0xff]
    %v2451 = vld [vmem:[#allocation4 + $0x60] sm:$0xff]
    %v2452 = vld [vmem:[#allocation4 + $0x68] sm:$0xff]
    %v2453 = vld [vmem:[#allocation4 + $0x70] sm:$0xff]
    %v2454 = vld [vmem:[#allocation4 + $0x78] sm:$0xff]
    %v2455 = vld [vmem:[#allocation4] sm:$0xfc]
    %v2456 = vld [vmem:[#allocation4 + $0x8] sm:$0xfc]
    %v2457 = vld [vmem:[#allocation4 + $0x80] sm:$0x3]
    %v2458 = vld [vmem:[#allocation4 + $0x88] sm:$0x3]
    %v2477 = vrot.slane %v2455, 2
    %v2478 = vrot.slane %v2441, 2
    %v2479 = vsel %vm1173, %v2477, %v2478
    %v2480 = vrot.slane %v2456, 2
    %v2481 = vrot.slane %v2442, 2
    %v2482 = vsel %vm1173, %v2480, %v2481
    %v2483 = vrot.slane %v2443, 2
    %v2484 = vsel %vm1173, %v2478, %v2483
    %v2485 = vrot.slane %v2444, 2
    %v2486 = vsel %vm1173, %v2481, %v2485
    %v2487 = vrot.slane %v2445, 2
    %v2488 = vsel %vm1173, %v2483, %v2487
    %v2489 = vrot.slane %v2446, 2
    %v2490 = vsel %vm1173, %v2485, %v2489
    %v2491 = vrot.slane %v2447, 2
    %v2492 = vsel %vm1173, %v2487, %v2491
    %v2493 = vrot.slane %v2448, 2
    %v2494 = vsel %vm1173, %v2489, %v2493
    %v2495 = vrot.slane %v2449, 2
    %v2496 = vsel %vm1173, %v2491, %v2495
    %v2497 = vrot.slane %v2450, 2
    %v2498 = vsel %vm1173, %v2493, %v2497
    %v2499 = vrot.slane %v2451, 2
    %v2500 = vsel %vm1173, %v2495, %v2499
    %v2501 = vrot.slane %v2452, 2
    %v2502 = vsel %vm1173, %v2497, %v2501
    %v2503 = vrot.slane %v2453, 2
    %v2504 = vsel %vm1173, %v2499, %v2503
    %v2505 = vrot.slane %v2454, 2
    %v2506 = vsel %vm1173, %v2501, %v2505
    %v2507 = vrot.slane %v2457, 2
    %v2508 = vsel %vm1173, %v2503, %v2507
    %v2509 = vrot.slane %v2458, 2
    %v2510 = vsel %vm1173, %v2505, %v2509
    %v2527 = vmax.f32 %v2439, %v2479
    %v2528 = vmax.f32 %v2440, %v2482
    %v2529 = vmax.f32 %v2441, %v2484
    %v2530 = vmax.f32 %v2442, %v2486
    %v2531 = vmax.f32 %v2443, %v2488
    %v2532 = vmax.f32 %v2444, %v2490
    %v2533 = vmax.f32 %v2445, %v2492
    %v2534 = vmax.f32 %v2446, %v2494
    %v2535 = vmax.f32 %v2447, %v2496
    %v2536 = vmax.f32 %v2448, %v2498
    %v2537 = vmax.f32 %v2449, %v2500
    %v2538 = vmax.f32 %v2450, %v2502
    %v2539 = vmax.f32 %v2451, %v2504
    %v2540 = vmax.f32 %v2452, %v2506
    %v2541 = vmax.f32 %v2453, %v2508
    %v2542 = vmax.f32 %v2454, %v2510
    %2559 = vrot.lane.b32.xlu0 %v2527, 127
    %v2560 = vpop.permute.xlu0 %2559
    %2561 = vrot.lane.b32.xlu0 %v2528, 127
    %v2562 = vpop.permute.xlu0 %2561
    %2563 = vrot.lane.b32.xlu0 %v2529, 127
    %v2564 = vpop.permute.xlu0 %2563
    %2565 = vrot.lane.b32.xlu0 %v2530, 127
    %v2566 = vpop.permute.xlu0 %2565
    %2567 = vrot.lane.b32.xlu0 %v2531, 127
    %v2568 = vpop.permute.xlu0 %2567
    %2569 = vrot.lane.b32.xlu0 %v2532, 127
    %v2570 = vpop.permute.xlu0 %2569
    %2571 = vrot.lane.b32.xlu0 %v2533, 127
    %v2572 = vpop.permute.xlu0 %2571
    %2573 = vrot.lane.b32.xlu0 %v2534, 127
    %v2574 = vpop.permute.xlu0 %2573
    %2575 = vrot.lane.b32.xlu0 %v2535, 127
    %v2576 = vpop.permute.xlu0 %2575
    %2577 = vrot.lane.b32.xlu0 %v2536, 127
    %v2578 = vpop.permute.xlu0 %2577
    %2579 = vrot.lane.b32.xlu0 %v2537, 127
    %v2580 = vpop.permute.xlu0 %2579
    %2581 = vrot.lane.b32.xlu0 %v2538, 127
    %v2582 = vpop.permute.xlu0 %2581
    %2583 = vrot.lane.b32.xlu0 %v2539, 127
    %v2584 = vpop.permute.xlu0 %2583
    %2585 = vrot.lane.b32.xlu0 %v2540, 127
    %v2586 = vpop.permute.xlu0 %2585
    %2587 = vrot.lane.b32.xlu0 %v2541, 127
    %v2588 = vpop.permute.xlu0 %2587
    %2589 = vrot.lane.b32.xlu0 %v2542, 127
    %v2590 = vpop.permute.xlu0 %2589
    %v2591 = vsel %vm984, %v2560, %v2562
    %v2592 = vsel %vm984, %v2564, %v2566
    %v2593 = vsel %vm984, %v2568, %v2570
    %v2594 = vsel %vm984, %v2572, %v2574
    %v2595 = vsel %vm984, %v2576, %v2578
    %v2596 = vsel %vm984, %v2580, %v2582
    %v2597 = vsel %vm984, %v2584, %v2586
    %v2598 = vsel %vm984, %v2588, %v2590
    %vm2615 = vcmask 252928
    %v2616 = vsel %vm2615, %v2562, %v2528
    %v2617 = vsel %vm2615, %v2566, %v2530
    %v2618 = vsel %vm2615, %v2570, %v2532
    %v2619 = vsel %vm2615, %v2574, %v2534
    %v2620 = vsel %vm2615, %v2578, %v2536
    %v2621 = vsel %vm2615, %v2582, %v2538
    %v2622 = vsel %vm2615, %v2586, %v2540
    %v2623 = vsel %vm2615, %v2590, %v2542
    %v2624 = vmax.f32 %v2527, %v2591
    %v2625 = vmax.f32 %v2528, %v2616
    %v2626 = vmax.f32 %v2529, %v2592
    %v2627 = vmax.f32 %v2530, %v2617
    %v2628 = vmax.f32 %v2531, %v2593
    %v2629 = vmax.f32 %v2532, %v2618
    %v2630 = vmax.f32 %v2533, %v2594
    %v2631 = vmax.f32 %v2534, %v2619
    %v2632 = vmax.f32 %v2535, %v2595
    %v2633 = vmax.f32 %v2536, %v2620
    %v2634 = vmax.f32 %v2537, %v2596
    %v2635 = vmax.f32 %v2538, %v2621
    %v2636 = vmax.f32 %v2539, %v2597
    %v2637 = vmax.f32 %v2540, %v2622
    %v2638 = vmax.f32 %v2541, %v2598
    %v2639 = vmax.f32 %v2542, %v2623
    %2640 = vst [vmem:[#allocation5] sm:$0xff] %v2624
    %2641 = vst.msk [vmem:[#allocation5 + $0x8] sm:$0xff] %vm77, %v2625
    %2642 = vst [vmem:[#allocation5 + $0x10] sm:$0xff] %v2626
    %2643 = vst.msk [vmem:[#allocation5 + $0x18] sm:$0xff] %vm77, %v2627
    %2644 = vst [vmem:[#allocation5 + $0x20] sm:$0xff] %v2628
    %2645 = vst.msk [vmem:[#allocation5 + $0x28] sm:$0xff] %vm77, %v2629
    %2646 = vst [vmem:[#allocation5 + $0x30] sm:$0xff] %v2630
    %2647 = vst.msk [vmem:[#allocation5 + $0x38] sm:$0xff] %vm77, %v2631
    %2648 = vst [vmem:[#allocation5 + $0x40] sm:$0xff] %v2632
    %2649 = vst.msk [vmem:[#allocation5 + $0x48] sm:$0xff] %vm77, %v2633
    %2650 = vst [vmem:[#allocation5 + $0x50] sm:$0xff] %v2634
    %2651 = vst.msk [vmem:[#allocation5 + $0x58] sm:$0xff] %vm77, %v2635
    %2652 = vst [vmem:[#allocation5 + $0x60] sm:$0xff] %v2636
    %2653 = vst.msk [vmem:[#allocation5 + $0x68] sm:$0xff] %vm77, %v2637
    %2654 = vst [vmem:[#allocation5 + $0x70] sm:$0xff] %v2638
    %2655 = vst.msk [vmem:[#allocation5 + $0x78] sm:$0xff] %vm77, %v2639
    %v2656 = vld [vmem:[#allocation5] sm:$0xff]
    %v2657 = vld [vmem:[#allocation5 + $0x8] sm:$0xff]
    %v2658 = vld [vmem:[#allocation5 + $0x10] sm:$0xff]
    %v2659 = vld [vmem:[#allocation5 + $0x18] sm:$0xff]
    %v2660 = vld [vmem:[#allocation5 + $0x20] sm:$0xff]
    %v2661 = vld [vmem:[#allocation5 + $0x28] sm:$0xff]
    %v2662 = vld [vmem:[#allocation5 + $0x30] sm:$0xff]
    %v2663 = vld [vmem:[#allocation5 + $0x38] sm:$0xff]
    %v2664 = vld [vmem:[#allocation5 + $0x40] sm:$0xff]
    %v2665 = vld [vmem:[#allocation5 + $0x48] sm:$0xff]
    %v2666 = vld [vmem:[#allocation5 + $0x50] sm:$0xff]
    %v2667 = vld [vmem:[#allocation5 + $0x58] sm:$0xff]
    %v2668 = vld [vmem:[#allocation5 + $0x60] sm:$0xff]
    %v2669 = vld [vmem:[#allocation5 + $0x68] sm:$0xff]
    %v2670 = vld [vmem:[#allocation5 + $0x70] sm:$0xff]
    %v2671 = vld [vmem:[#allocation5 + $0x78] sm:$0xff]
    %v2672 = vld [vmem:[%s5] sm:$0xff]
    %v2673 = vld [vmem:[%s5 + $0x8] sm:$0xff]
    %v2674 = vld [vmem:[%s5 + $0x10] sm:$0xff]
    %v2675 = vld [vmem:[%s5 + $0x18] sm:$0xff]
    %v2676 = vld [vmem:[%s5 + $0x20] sm:$0xff]
    %v2677 = vld [vmem:[%s5 + $0x28] sm:$0xff]
    %v2678 = vld [vmem:[%s5 + $0x30] sm:$0xff]
    %v2679 = vld [vmem:[%s5 + $0x38] sm:$0xff]
    %v2680 = vld [vmem:[%s5 + $0x40] sm:$0xff]
    %v2681 = vld [vmem:[%s5 + $0x48] sm:$0xff]
    %v2682 = vld [vmem:[%s5 + $0x50] sm:$0xff]
    %v2683 = vld [vmem:[%s5 + $0x58] sm:$0xff]
    %v2684 = vld [vmem:[%s5 + $0x60] sm:$0xff]
    %v2685 = vld [vmem:[%s5 + $0x68] sm:$0xff]
    %v2686 = vld [vmem:[%s5 + $0x70] sm:$0xff]
    %v2687 = vld [vmem:[%s5 + $0x78] sm:$0xff]
    %v2688 = vld [vmem:[%s5 + $0x80] sm:$0xff]
    %v2689 = vld [vmem:[%s5 + $0x88] sm:$0xff]
    %v2690 = vld [vmem:[%s5 + $0x90] sm:$0xff]
    %v2691 = vld [vmem:[%s5 + $0x98] sm:$0xff]
    %v2692 = vld [vmem:[#allocation5] sm:$0xf0]
    %v2693 = vld [vmem:[#allocation5 + $0x8] sm:$0xf0]
    %v2694 = vld [vmem:[#allocation5 + $0x80] sm:$0xf]
    %v2695 = vld [vmem:[#allocation5 + $0x88] sm:$0xf]
    %s2696 = scalar_lea.vmem %s5, 160
    %v2697 = vld [vmem:[%s2696] sm:$0xff]
    %v2698 = vld [vmem:[%s2696 + $0x8] sm:$0xff]
    %v2699 = vld [vmem:[%s2696 + $0x10] sm:$0xff]
    %v2700 = vld [vmem:[%s2696 + $0x18] sm:$0xff]
    %v2701 = vld [vmem:[%s2696 + $0x20] sm:$0xff]
    %v2702 = vld [vmem:[%s2696 + $0x28] sm:$0xff]
    %v2703 = vld [vmem:[%s2696 + $0x30] sm:$0xff]
    %v2704 = vld [vmem:[%s2696 + $0x38] sm:$0xff]
    %v2705 = vld [vmem:[%s2696 + $0x40] sm:$0xff]
    %v2706 = vld [vmem:[%s2696 + $0x48] sm:$0xff]
    %v2707 = vld [vmem:[%s2696 + $0x50] sm:$0xff]
    %v2708 = vld [vmem:[%s2696 + $0x58] sm:$0xff]
    %v2709 = vld [vmem:[%s2696 + $0x60] sm:$0xff]
    %v2710 = vld [vmem:[%s2696 + $0x68] sm:$0xff]
    %v2711 = vld [vmem:[%s2696 + $0x70] sm:$0xff]
    %v2712 = vld [vmem:[%s2696 + $0x78] sm:$0xff]
    %v2713 = vld [vmem:[%s2696 + $0x80] sm:$0xff]
    %v2714 = vld [vmem:[%s2696 + $0x88] sm:$0xff]
    %v2715 = vld [vmem:[%s2696 + $0x90] sm:$0xff]
    %v2716 = vld [vmem:[%s2696 + $0x98] sm:$0xff]
    %v2735 = vrot.slane %v2692, 4
    %v2736 = vrot.slane %v2658, 4
    %v2737 = vsel %vm1628, %v2735, %v2736
    %v2738 = vrot.slane %v2693, 4
    %v2739 = vrot.slane %v2659, 4
    %v2740 = vsel %vm1628, %v2738, %v2739
    %v2741 = vrot.slane %v2660, 4
    %v2742 = vsel %vm1628, %v2736, %v2741
    %v2743 = vrot.slane %v2661, 4
    %v2744 = vsel %vm1628, %v2739, %v2743
    %v2745 = vrot.slane %v2662, 4
    %v2746 = vsel %vm1628, %v2741, %v2745
    %v2747 = vrot.slane %v2663, 4
    %v2748 = vsel %vm1628, %v2743, %v2747
    %v2749 = vrot.slane %v2664, 4
    %v2750 = vsel %vm1628, %v2745, %v2749
    %v2751 = vrot.slane %v2665, 4
    %v2752 = vsel %vm1628, %v2747, %v2751
    %v2753 = vrot.slane %v2666, 4
    %v2754 = vsel %vm1628, %v2749, %v2753
    %v2755 = vrot.slane %v2667, 4
    %v2756 = vsel %vm1628, %v2751, %v2755
    %v2757 = vrot.slane %v2668, 4
    %v2758 = vsel %vm1628, %v2753, %v2757
    %v2759 = vrot.slane %v2669, 4
    %v2760 = vsel %vm1628, %v2755, %v2759
    %v2761 = vrot.slane %v2670, 4
    %v2762 = vsel %vm1628, %v2757, %v2761
    %v2763 = vrot.slane %v2671, 4
    %v2764 = vsel %vm1628, %v2759, %v2763
    %v2765 = vrot.slane %v2694, 4
    %v2766 = vsel %vm1628, %v2761, %v2765
    %v2767 = vrot.slane %v2695, 4
    %v2768 = vsel %vm1628, %v2763, %v2767
    %v2777 = vsel %vm77, %v2740, 0
    %v2779 = vsel %vm77, %v2744, 0
    %v2781 = vsel %vm77, %v2748, 0
    %v2783 = vsel %vm77, %v2752, 0
    %v2785 = vsel %vm77, %v2756, 0
    %v2787 = vsel %vm77, %v2760, 0
    %v2789 = vsel %vm77, %v2764, 0
    %v2791 = vsel %vm77, %v2768, 0
    %2793 = vmatpush.msra.mxu0 %v2712
    %2794 = vmatpush.msra.mxu0 %v2711
    %2795 = vmatpush.msra.mxu0 %v2710
    %2796 = vmatpush.msra.mxu0 %v2709
    %2797 = vmatpush.msra.mxu0 %v2708
    %2798 = vmatpush.msra.mxu0 %v2707
    %2799 = vmatpush.msra.mxu0 %v2706
    %2800 = vmatpush.msra.mxu0 %v2705
    %2801 = vmatpush.msra.mxu0 %v2704
    %2802 = vmatpush.msra.mxu0 %v2703
    %2803 = vmatpush.msra.mxu0 %v2702
    %2804 = vmatpush.msra.mxu0 %v2701
    %2805 = vmatpush.msra.mxu0 %v2700
    %2806 = vmatpush.msra.mxu0 %v2699
    %2807 = vmatpush.msra.mxu0 %v2698
    %2808 = vmatpush.msra.mxu0 %v2697
    %2809 = vmatmul.f32.gmra.mxu0 %v2737
    %v2810 = vpop.f32.mrf.mxu0
    %v2811 = vadd.f32 0.0, %v2810
    %2812 = vmatmul.f32.gmra.mxu0 %v2742
    %v2813 = vpop.f32.mrf.mxu0
    %v2814 = vadd.f32 0.0, %v2813
    %2815 = vmatmul.f32.gmra.mxu0 %v2746
    %v2816 = vpop.f32.mrf.mxu0
    %v2817 = vadd.f32 0.0, %v2816
    %2818 = vmatmul.f32.gmra.mxu0 %v2750
    %v2819 = vpop.f32.mrf.mxu0
    %v2820 = vadd.f32 0.0, %v2819
    %2821 = vmatmul.f32.gmra.mxu0 %v2754
    %v2822 = vpop.f32.mrf.mxu0
    %v2823 = vadd.f32 0.0, %v2822
    %2824 = vmatmul.f32.gmra.mxu0 %v2758
    %v2825 = vpop.f32.mrf.mxu0
    %v2826 = vadd.f32 0.0, %v2825
    %2827 = vmatmul.f32.gmra.mxu0 %v2762
    %v2828 = vpop.f32.mrf.mxu0
    %v2829 = vadd.f32 0.0, %v2828
    %2830 = vmatmul.f32.gmra.mxu0 %v2766
    %v2831 = vpop.f32.mrf.mxu0
    %v2832 = vadd.f32 0.0, %v2831
    %2833 = vdwg.mxu0
    %2834 = vmatpush.msra.mxu0 0.0
    %2835 = vmatpush.msra.mxu0 0.0
    %2836 = vmatpush.msra.mxu0 0.0
    %2837 = vmatpush.msra.mxu0 0.0
    %2838 = vmatpush.msra.mxu0 0.0
    %2839 = vmatpush.msra.mxu0 0.0
    %2840 = vmatpush.msra.mxu0 0.0
    %2841 = vmatpush.msra.mxu0 0.0
    %2842 = vmatpush.msra.mxu0 0.0
    %2843 = vmatpush.msra.mxu0 0.0
    %2844 = vmatpush.msra.mxu0 0.0
    %2845 = vmatpush.msra.mxu0 0.0
    %2846 = vmatpush.msra.mxu0 %v2716
    %2847 = vmatpush.msra.mxu0 %v2715
    %2848 = vmatpush.msra.mxu0 %v2714
    %2849 = vmatpush.msra.mxu0 %v2713
    %2850 = vmatmul.f32.gmra.mxu0 %v2777
    %v2851 = vpop.f32.mrf.mxu0
    %v2852 = vadd.f32 %v2811, %v2851
    %2853 = vmatmul.f32.gmra.mxu0 %v2779
    %v2854 = vpop.f32.mrf.mxu0
    %v2855 = vadd.f32 %v2814, %v2854
    %2856 = vmatmul.f32.gmra.mxu0 %v2781
    %v2857 = vpop.f32.mrf.mxu0
    %v2858 = vadd.f32 %v2817, %v2857
    %2859 = vmatmul.f32.gmra.mxu0 %v2783
    %v2860 = vpop.f32.mrf.mxu0
    %v2861 = vadd.f32 %v2820, %v2860
    %2862 = vmatmul.f32.gmra.mxu0 %v2785
    %v2863 = vpop.f32.mrf.mxu0
    %v2864 = vadd.f32 %v2823, %v2863
    %2865 = vmatmul.f32.gmra.mxu0 %v2787
    %v2866 = vpop.f32.mrf.mxu0
    %v2867 = vadd.f32 %v2826, %v2866
    %2868 = vmatmul.f32.gmra.mxu0 %v2789
    %v2869 = vpop.f32.mrf.mxu0
    %v2870 = vadd.f32 %v2829, %v2869
    %2871 = vmatmul.f32.gmra.mxu0 %v2791
    %v2872 = vpop.f32.mrf.mxu0
    %v2873 = vadd.f32 %v2832, %v2872
    %2874 = vdwg.mxu0
    %v2876 = vsel %vm77, %v2657, 0
    %v2878 = vsel %vm77, %v2659, 0
    %v2880 = vsel %vm77, %v2661, 0
    %v2882 = vsel %vm77, %v2663, 0
    %v2884 = vsel %vm77, %v2665, 0
    %v2886 = vsel %vm77, %v2667, 0
    %v2888 = vsel %vm77, %v2669, 0
    %v2890 = vsel %vm77, %v2671, 0
    %2892 = vmatpush.msra.mxu0 %v2687
    %2893 = vmatpush.msra.mxu0 %v2686
    %2894 = vmatpush.msra.mxu0 %v2685
    %2895 = vmatpush.msra.mxu0 %v2684
    %2896 = vmatpush.msra.mxu0 %v2683
    %2897 = vmatpush.msra.mxu0 %v2682
    %2898 = vmatpush.msra.mxu0 %v2681
    %2899 = vmatpush.msra.mxu0 %v2680
    %2900 = vmatpush.msra.mxu0 %v2679
    %2901 = vmatpush.msra.mxu0 %v2678
    %2902 = vmatpush.msra.mxu0 %v2677
    %2903 = vmatpush.msra.mxu0 %v2676
    %2904 = vmatpush.msra.mxu0 %v2675
    %2905 = vmatpush.msra.mxu0 %v2674
    %2906 = vmatpush.msra.mxu0 %v2673
    %2907 = vmatpush.msra.mxu0 %v2672
    %2908 = vmatmul.f32.gmra.mxu0 %v2656
    %v2909 = vpop.f32.mrf.mxu0
    %v2910 = vadd.f32 %v2852, %v2909
    %2911 = vmatmul.f32.gmra.mxu0 %v2658
    %v2912 = vpop.f32.mrf.mxu0
    %v2913 = vadd.f32 %v2855, %v2912
    %2914 = vmatmul.f32.gmra.mxu0 %v2660
    %v2915 = vpop.f32.mrf.mxu0
    %v2916 = vadd.f32 %v2858, %v2915
    %2917 = vmatmul.f32.gmra.mxu0 %v2662
    %v2918 = vpop.f32.mrf.mxu0
    %v2919 = vadd.f32 %v2861, %v2918
    %2920 = vmatmul.f32.gmra.mxu0 %v2664
    %v2921 = vpop.f32.mrf.mxu0
    %v2922 = vadd.f32 %v2864, %v2921
    %2923 = vmatmul.f32.gmra.mxu0 %v2666
    %v2924 = vpop.f32.mrf.mxu0
    %v2925 = vadd.f32 %v2867, %v2924
    %2926 = vmatmul.f32.gmra.mxu0 %v2668
    %v2927 = vpop.f32.mrf.mxu0
    %v2928 = vadd.f32 %v2870, %v2927
    %2929 = vmatmul.f32.gmra.mxu0 %v2670
    %v2930 = vpop.f32.mrf.mxu0
    %v2931 = vadd.f32 %v2873, %v2930
    %2932 = vdwg.mxu0
    %2933 = vmatpush.msra.mxu0 0.0
    %2934 = vmatpush.msra.mxu0 0.0
    %2935 = vmatpush.msra.mxu0 0.0
    %2936 = vmatpush.msra.mxu0 0.0
    %2937 = vmatpush.msra.mxu0 0.0
    %2938 = vmatpush.msra.mxu0 0.0
    %2939 = vmatpush.msra.mxu0 0.0
    %2940 = vmatpush.msra.mxu0 0.0
    %2941 = vmatpush.msra.mxu0 0.0
    %2942 = vmatpush.msra.mxu0 0.0
    %2943 = vmatpush.msra.mxu0 0.0
    %2944 = vmatpush.msra.mxu0 0.0
    %2945 = vmatpush.msra.mxu0 %v2691
    %2946 = vmatpush.msra.mxu0 %v2690
    %2947 = vmatpush.msra.mxu0 %v2689
    %2948 = vmatpush.msra.mxu0 %v2688
    %2949 = vmatmul.f32.gmra.mxu0 %v2876
    %v2950 = vpop.f32.mrf.mxu0
    %v2951 = vadd.f32 %v2910, %v2950
    %2952 = vmatmul.f32.gmra.mxu0 %v2878
    %v2953 = vpop.f32.mrf.mxu0
    %v2954 = vadd.f32 %v2913, %v2953
    %2955 = vmatmul.f32.gmra.mxu0 %v2880
    %v2956 = vpop.f32.mrf.mxu0
    %v2957 = vadd.f32 %v2916, %v2956
    %2958 = vmatmul.f32.gmra.mxu0 %v2882
    %v2959 = vpop.f32.mrf.mxu0
    %v2960 = vadd.f32 %v2919, %v2959
    %2961 = vmatmul.f32.gmra.mxu0 %v2884
    %v2962 = vpop.f32.mrf.mxu0
    %v2963 = vadd.f32 %v2922, %v2962
    %2964 = vmatmul.f32.gmra.mxu0 %v2886
    %v2965 = vpop.f32.mrf.mxu0
    %v2966 = vadd.f32 %v2925, %v2965
    %2967 = vmatmul.f32.gmra.mxu0 %v2888
    %v2968 = vpop.f32.mrf.mxu0
    %v2969 = vadd.f32 %v2928, %v2968
    %2970 = vmatmul.f32.gmra.mxu0 %v2890
    %v2971 = vpop.f32.mrf.mxu0
    %v2972 = vadd.f32 %v2931, %v2971
    %2973 = vdwg.mxu0
    %v2974 = vld [vmem:[#allocation5 + $0x80] sm:$0xff]
    %v2975 = vld [vmem:[#allocation5 + $0x88] sm:$0xff]
    %s2976 = scalar_lea.vmem %s5, 320
    %v2977 = vld [vmem:[%s2976] sm:$0xff]
    %v2978 = vld [vmem:[%s2976 + $0x8] sm:$0xff]
    %v2979 = vld [vmem:[%s2976 + $0x10] sm:$0xff]
    %v2980 = vld [vmem:[%s2976 + $0x18] sm:$0xff]
    %v2981 = vld [vmem:[%s2976 + $0x20] sm:$0xff]
    %v2982 = vld [vmem:[%s2976 + $0x28] sm:$0xff]
    %v2983 = vld [vmem:[%s2976 + $0x30] sm:$0xff]
    %v2984 = vld [vmem:[%s2976 + $0x38] sm:$0xff]
    %v2985 = vld [vmem:[%s2976 + $0x40] sm:$0xff]
    %v2986 = vld [vmem:[%s2976 + $0x48] sm:$0xff]
    %v2987 = vld [vmem:[%s2976 + $0x50] sm:$0xff]
    %v2988 = vld [vmem:[%s2976 + $0x58] sm:$0xff]
    %v2989 = vld [vmem:[%s2976 + $0x60] sm:$0xff]
    %v2990 = vld [vmem:[%s2976 + $0x68] sm:$0xff]
    %v2991 = vld [vmem:[%s2976 + $0x70] sm:$0xff]
    %v2992 = vld [vmem:[%s2976 + $0x78] sm:$0xff]
    %v2993 = vld [vmem:[%s2976 + $0x80] sm:$0xff]
    %v2994 = vld [vmem:[%s2976 + $0x88] sm:$0xff]
    %v2995 = vld [vmem:[%s2976 + $0x90] sm:$0xff]
    %v2996 = vld [vmem:[%s2976 + $0x98] sm:$0xff]
    %v2998 = vsel %vm77, %v2975, 0
    %3000 = vmatpush.msra.mxu0 %v2992
    %3001 = vmatpush.msra.mxu0 %v2991
    %3002 = vmatpush.msra.mxu0 %v2990
    %3003 = vmatpush.msra.mxu0 %v2989
    %3004 = vmatpush.msra.mxu0 %v2988
    %3005 = vmatpush.msra.mxu0 %v2987
    %3006 = vmatpush.msra.mxu0 %v2986
    %3007 = vmatpush.msra.mxu0 %v2985
    %3008 = vmatpush.msra.mxu0 %v2984
    %3009 = vmatpush.msra.mxu0 %v2983
    %3010 = vmatpush.msra.mxu0 %v2982
    %3011 = vmatpush.msra.mxu0 %v2981
    %3012 = vmatpush.msra.mxu0 %v2980
    %3013 = vmatpush.msra.mxu0 %v2979
    %3014 = vmatpush.msra.mxu0 %v2978
    %3015 = vmatpush.msra.mxu0 %v2977
    %3016 = vmatmul.f32.gmra.mxu0 %v2658
    %v3017 = vpop.f32.mrf.mxu0
    %v3018 = vadd.f32 0.0, %v3017
    %3019 = vmatmul.f32.gmra.mxu0 %v2660
    %v3020 = vpop.f32.mrf.mxu0
    %v3021 = vadd.f32 0.0, %v3020
    %3022 = vmatmul.f32.gmra.mxu0 %v2662
    %v3023 = vpop.f32.mrf.mxu0
    %v3024 = vadd.f32 0.0, %v3023
    %3025 = vmatmul.f32.gmra.mxu0 %v2664
    %v3026 = vpop.f32.mrf.mxu0
    %v3027 = vadd.f32 0.0, %v3026
    %3028 = vmatmul.f32.gmra.mxu0 %v2666
    %v3029 = vpop.f32.mrf.mxu0
    %v3030 = vadd.f32 0.0, %v3029
    %3031 = vmatmul.f32.gmra.mxu0 %v2668
    %v3032 = vpop.f32.mrf.mxu0
    %v3033 = vadd.f32 0.0, %v3032
    %3034 = vmatmul.f32.gmra.mxu0 %v2670
    %v3035 = vpop.f32.mrf.mxu0
    %v3036 = vadd.f32 0.0, %v3035
    %3037 = vmatmul.f32.gmra.mxu0 %v2974
    %v3038 = vpop.f32.mrf.mxu0
    %v3039 = vadd.f32 0.0, %v3038
    %3040 = vdwg.mxu0
    %3041 = vmatpush.msra.mxu0 0.0
    %3042 = vmatpush.msra.mxu0 0.0
    %3043 = vmatpush.msra.mxu0 0.0
    %3044 = vmatpush.msra.mxu0 0.0
    %3045 = vmatpush.msra.mxu0 0.0
    %3046 = vmatpush.msra.mxu0 0.0
    %3047 = vmatpush.msra.mxu0 0.0
    %3048 = vmatpush.msra.mxu0 0.0
    %3049 = vmatpush.msra.mxu0 0.0
    %3050 = vmatpush.msra.mxu0 0.0
    %3051 = vmatpush.msra.mxu0 0.0
    %3052 = vmatpush.msra.mxu0 0.0
    %3053 = vmatpush.msra.mxu0 %v2996
    %3054 = vmatpush.msra.mxu0 %v2995
    %3055 = vmatpush.msra.mxu0 %v2994
    %3056 = vmatpush.msra.mxu0 %v2993
    %3057 = vmatmul.f32.gmra.mxu0 %v2878
    %v3058 = vpop.f32.mrf.mxu0
    %v3059 = vadd.f32 %v3018, %v3058
    %3060 = vmatmul.f32.gmra.mxu0 %v2880
    %v3061 = vpop.f32.mrf.mxu0
    %v3062 = vadd.f32 %v3021, %v3061
    %3063 = vmatmul.f32.gmra.mxu0 %v2882
    %v3064 = vpop.f32.mrf.mxu0
    %v3065 = vadd.f32 %v3024, %v3064
    %3066 = vmatmul.f32.gmra.mxu0 %v2884
    %v3067 = vpop.f32.mrf.mxu0
    %v3068 = vadd.f32 %v3027, %v3067
    %3069 = vmatmul.f32.gmra.mxu0 %v2886
    %v3070 = vpop.f32.mrf.mxu0
    %v3071 = vadd.f32 %v3030, %v3070
    %3072 = vmatmul.f32.gmra.mxu0 %v2888
    %v3073 = vpop.f32.mrf.mxu0
    %v3074 = vadd.f32 %v3033, %v3073
    %3075 = vmatmul.f32.gmra.mxu0 %v2890
    %v3076 = vpop.f32.mrf.mxu0
    %v3077 = vadd.f32 %v3036, %v3076
    %3078 = vmatmul.f32.gmra.mxu0 %v2998
    %v3079 = vpop.f32.mrf.mxu0
    %v3080 = vadd.f32 %v3039, %v3079
    %3081 = vdwg.mxu0
    %v3082 = vadd.f32 %v2951, %v3059
    %v3083 = vadd.f32 %v2954, %v3062
    %v3084 = vadd.f32 %v2957, %v3065
    %v3085 = vadd.f32 %v2960, %v3068
    %v3086 = vadd.f32 %v2963, %v3071
    %v3087 = vadd.f32 %v2966, %v3074
    %v3088 = vadd.f32 %v2969, %v3077
    %v3089 = vadd.f32 %v2972, %v3080
    %v3090 = vld [vmem:[#allocation5 + $0x10] sm:$0xf0]
    %v3091 = vld [vmem:[#allocation5 + $0x18] sm:$0xf0]
    %v3092 = vld [vmem:[#allocation5 + $0x20] sm:$0xff]
    %v3093 = vld [vmem:[#allocation5 + $0x28] sm:$0xff]
    %v3094 = vld [vmem:[#allocation5 + $0x30] sm:$0xff]
    %v3095 = vld [vmem:[#allocation5 + $0x38] sm:$0xff]
    %v3096 = vld [vmem:[#allocation5 + $0x40] sm:$0xff]
    %v3097 = vld [vmem:[#allocation5 + $0x48] sm:$0xff]
    %v3098 = vld [vmem:[#allocation5 + $0x50] sm:$0xff]
    %v3099 = vld [vmem:[#allocation5 + $0x58] sm:$0xff]
    %v3100 = vld [vmem:[#allocation5 + $0x60] sm:$0xff]
    %v3101 = vld [vmem:[#allocation5 + $0x68] sm:$0xff]
    %v3102 = vld [vmem:[#allocation5 + $0x70] sm:$0xff]
    %v3103 = vld [vmem:[#allocation5 + $0x78] sm:$0xff]
    %v3104 = vld [vmem:[#allocation5 + $0x80] sm:$0xff]
    %v3105 = vld [vmem:[#allocation5 + $0x88] sm:$0xff]
    %v3106 = vld [vmem:[#allocation5 + $0x90] sm:$0xf]
    %v3107 = vld [vmem:[#allocation5 + $0x98] sm:$0xf]
    %s3108 = scalar_lea.vmem %s5, 480
    %v3109 = vld [vmem:[%s3108] sm:$0xff]
    %v3110 = vld [vmem:[%s3108 + $0x8] sm:$0xff]
    %v3111 = vld [vmem:[%s3108 + $0x10] sm:$0xff]
    %v3112 = vld [vmem:[%s3108 + $0x18] sm:$0xff]
    %v3113 = vld [vmem:[%s3108 + $0x20] sm:$0xff]
    %v3114 = vld [vmem:[%s3108 + $0x28] sm:$0xff]
    %v3115 = vld [vmem:[%s3108 + $0x30] sm:$0xff]
    %v3116 = vld [vmem:[%s3108 + $0x38] sm:$0xff]
    %v3117 = vld [vmem:[%s3108 + $0x40] sm:$0xff]
    %v3118 = vld [vmem:[%s3108 + $0x48] sm:$0xff]
    %v3119 = vld [vmem:[%s3108 + $0x50] sm:$0xff]
    %v3120 = vld [vmem:[%s3108 + $0x58] sm:$0xff]
    %v3121 = vld [vmem:[%s3108 + $0x60] sm:$0xff]
    %v3122 = vld [vmem:[%s3108 + $0x68] sm:$0xff]
    %v3123 = vld [vmem:[%s3108 + $0x70] sm:$0xff]
    %v3124 = vld [vmem:[%s3108 + $0x78] sm:$0xff]
    %v3125 = vld [vmem:[%s3108 + $0x80] sm:$0xff]
    %v3126 = vld [vmem:[%s3108 + $0x88] sm:$0xff]
    %v3127 = vld [vmem:[%s3108 + $0x90] sm:$0xff]
    %v3128 = vld [vmem:[%s3108 + $0x98] sm:$0xff]
    %v3147 = vrot.slane %v3090, 4
    %v3148 = vrot.slane %v3092, 4
    %v3149 = vsel %vm1628, %v3147, %v3148
    %v3150 = vrot.slane %v3091, 4
    %v3151 = vrot.slane %v3093, 4
    %v3152 = vsel %vm1628, %v3150, %v3151
    %v3153 = vrot.slane %v3094, 4
    %v3154 = vsel %vm1628, %v3148, %v3153
    %v3155 = vrot.slane %v3095, 4
    %v3156 = vsel %vm1628, %v3151, %v3155
    %v3157 = vrot.slane %v3096, 4
    %v3158 = vsel %vm1628, %v3153, %v3157
    %v3159 = vrot.slane %v3097, 4
    %v3160 = vsel %vm1628, %v3155, %v3159
    %v3161 = vrot.slane %v3098, 4
    %v3162 = vsel %vm1628, %v3157, %v3161
    %v3163 = vrot.slane %v3099, 4
    %v3164 = vsel %vm1628, %v3159, %v3163
    %v3165 = vrot.slane %v3100, 4
    %v3166 = vsel %vm1628, %v3161, %v3165
    %v3167 = vrot.slane %v3101, 4
    %v3168 = vsel %vm1628, %v3163, %v3167
    %v3169 = vrot.slane %v3102, 4
    %v3170 = vsel %vm1628, %v3165, %v3169
    %v3171 = vrot.slane %v3103, 4
    %v3172 = vsel %vm1628, %v3167, %v3171
    %v3173 = vrot.slane %v3104, 4
    %v3174 = vsel %vm1628, %v3169, %v3173
    %v3175 = vrot.slane %v3105, 4
    %v3176 = vsel %vm1628, %v3171, %v3175
    %v3177 = vrot.slane %v3106, 4
    %v3178 = vsel %vm1628, %v3173, %v3177
    %v3179 = vrot.slane %v3107, 4
    %v3180 = vsel %vm1628, %v3175, %v3179
    %v3189 = vsel %vm77, %v3152, 0
    %v3191 = vsel %vm77, %v3156, 0
    %v3193 = vsel %vm77, %v3160, 0
    %v3195 = vsel %vm77, %v3164, 0
    %v3197 = vsel %vm77, %v3168, 0
    %v3199 = vsel %vm77, %v3172, 0
    %v3201 = vsel %vm77, %v3176, 0
    %v3203 = vsel %vm77, %v3180, 0
    %3205 = vmatpush.msra.mxu0 %v3124
    %3206 = vmatpush.msra.mxu0 %v3123
    %3207 = vmatpush.msra.mxu0 %v3122
    %3208 = vmatpush.msra.mxu0 %v3121
    %3209 = vmatpush.msra.mxu0 %v3120
    %3210 = vmatpush.msra.mxu0 %v3119
    %3211 = vmatpush.msra.mxu0 %v3118
    %3212 = vmatpush.msra.mxu0 %v3117
    %3213 = vmatpush.msra.mxu0 %v3116
    %3214 = vmatpush.msra.mxu0 %v3115
    %3215 = vmatpush.msra.mxu0 %v3114
    %3216 = vmatpush.msra.mxu0 %v3113
    %3217 = vmatpush.msra.mxu0 %v3112
    %3218 = vmatpush.msra.mxu0 %v3111
    %3219 = vmatpush.msra.mxu0 %v3110
    %3220 = vmatpush.msra.mxu0 %v3109
    %3221 = vmatmul.f32.gmra.mxu0 %v3149
    %v3222 = vpop.f32.mrf.mxu0
    %v3223 = vadd.f32 0.0, %v3222
    %3224 = vmatmul.f32.gmra.mxu0 %v3154
    %v3225 = vpop.f32.mrf.mxu0
    %v3226 = vadd.f32 0.0, %v3225
    %3227 = vmatmul.f32.gmra.mxu0 %v3158
    %v3228 = vpop.f32.mrf.mxu0
    %v3229 = vadd.f32 0.0, %v3228
    %3230 = vmatmul.f32.gmra.mxu0 %v3162
    %v3231 = vpop.f32.mrf.mxu0
    %v3232 = vadd.f32 0.0, %v3231
    %3233 = vmatmul.f32.gmra.mxu0 %v3166
    %v3234 = vpop.f32.mrf.mxu0
    %v3235 = vadd.f32 0.0, %v3234
    %3236 = vmatmul.f32.gmra.mxu0 %v3170
    %v3237 = vpop.f32.mrf.mxu0
    %v3238 = vadd.f32 0.0, %v3237
    %3239 = vmatmul.f32.gmra.mxu0 %v3174
    %v3240 = vpop.f32.mrf.mxu0
    %v3241 = vadd.f32 0.0, %v3240
    %3242 = vmatmul.f32.gmra.mxu0 %v3178
    %v3243 = vpop.f32.mrf.mxu0
    %v3244 = vadd.f32 0.0, %v3243
    %3245 = vdwg.mxu0
    %3246 = vmatpush.msra.mxu0 0.0
    %3247 = vmatpush.msra.mxu0 0.0
    %3248 = vmatpush.msra.mxu0 0.0
    %3249 = vmatpush.msra.mxu0 0.0
    %3250 = vmatpush.msra.mxu0 0.0
    %3251 = vmatpush.msra.mxu0 0.0
    %3252 = vmatpush.msra.mxu0 0.0
    %3253 = vmatpush.msra.mxu0 0.0
    %3254 = vmatpush.msra.mxu0 0.0
    %3255 = vmatpush.msra.mxu0 0.0
    %3256 = vmatpush.msra.mxu0 0.0
    %3257 = vmatpush.msra.mxu0 0.0
    %3258 = vmatpush.msra.mxu0 %v3128
    %3259 = vmatpush.msra.mxu0 %v3127
    %3260 = vmatpush.msra.mxu0 %v3126
    %3261 = vmatpush.msra.mxu0 %v3125
    %3262 = vmatmul.f32.gmra.mxu0 %v3189
    %v3263 = vpop.f32.mrf.mxu0
    %v3264 = vadd.f32 %v3223, %v3263
    %3265 = vmatmul.f32.gmra.mxu0 %v3191
    %v3266 = vpop.f32.mrf.mxu0
    %v3267 = vadd.f32 %v3226, %v3266
    %3268 = vmatmul.f32.gmra.mxu0 %v3193
    %v3269 = vpop.f32.mrf.mxu0
    %v3270 = vadd.f32 %v3229, %v3269
    %3271 = vmatmul.f32.gmra.mxu0 %v3195
    %v3272 = vpop.f32.mrf.mxu0
    %v3273 = vadd.f32 %v3232, %v3272
    %3274 = vmatmul.f32.gmra.mxu0 %v3197
    %v3275 = vpop.f32.mrf.mxu0
    %v3276 = vadd.f32 %v3235, %v3275
    %3277 = vmatmul.f32.gmra.mxu0 %v3199
    %v3278 = vpop.f32.mrf.mxu0
    %v3279 = vadd.f32 %v3238, %v3278
    %3280 = vmatmul.f32.gmra.mxu0 %v3201
    %v3281 = vpop.f32.mrf.mxu0
    %v3282 = vadd.f32 %v3241, %v3281
    %3283 = vmatmul.f32.gmra.mxu0 %v3203
    %v3284 = vpop.f32.mrf.mxu0
    %v3285 = vadd.f32 %v3244, %v3284
    %3286 = vdwg.mxu0
    %v3287 = vadd.f32 %v3082, %v3264
    %v3288 = vadd.f32 %v3083, %v3267
    %v3289 = vadd.f32 %v3084, %v3270
    %v3290 = vadd.f32 %v3085, %v3273
    %v3291 = vadd.f32 %v3086, %v3276
    %v3292 = vadd.f32 %v3087, %v3279
    %v3293 = vadd.f32 %v3088, %v3282
    %v3294 = vadd.f32 %v3089, %v3285
    %v3295 = vld [vmem:[#allocation5 + $0x90] sm:$0xff]
    %v3296 = vld [vmem:[#allocation5 + $0x98] sm:$0xff]
    %s3297 = scalar_lea.vmem %s5, 640
    %v3298 = vld [vmem:[%s3297] sm:$0xff]
    %v3299 = vld [vmem:[%s3297 + $0x8] sm:$0xff]
    %v3300 = vld [vmem:[%s3297 + $0x10] sm:$0xff]
    %v3301 = vld [vmem:[%s3297 + $0x18] sm:$0xff]
    %v3302 = vld [vmem:[%s3297 + $0x20] sm:$0xff]
    %v3303 = vld [vmem:[%s3297 + $0x28] sm:$0xff]
    %v3304 = vld [vmem:[%s3297 + $0x30] sm:$0xff]
    %v3305 = vld [vmem:[%s3297 + $0x38] sm:$0xff]
    %v3306 = vld [vmem:[%s3297 + $0x40] sm:$0xff]
    %v3307 = vld [vmem:[%s3297 + $0x48] sm:$0xff]
    %v3308 = vld [vmem:[%s3297 + $0x50] sm:$0xff]
    %v3309 = vld [vmem:[%s3297 + $0x58] sm:$0xff]
    %v3310 = vld [vmem:[%s3297 + $0x60] sm:$0xff]
    %v3311 = vld [vmem:[%s3297 + $0x68] sm:$0xff]
    %v3312 = vld [vmem:[%s3297 + $0x70] sm:$0xff]
    %v3313 = vld [vmem:[%s3297 + $0x78] sm:$0xff]
    %v3314 = vld [vmem:[%s3297 + $0x80] sm:$0xff]
    %v3315 = vld [vmem:[%s3297 + $0x88] sm:$0xff]
    %v3316 = vld [vmem:[%s3297 + $0x90] sm:$0xff]
    %v3317 = vld [vmem:[%s3297 + $0x98] sm:$0xff]
    %v3318 = vsel %vm77, %v3093, 0
    %v3320 = vsel %vm77, %v3095, 0
    %v3322 = vsel %vm77, %v3097, 0
    %v3324 = vsel %vm77, %v3099, 0
    %v3326 = vsel %vm77, %v3101, 0
    %v3328 = vsel %vm77, %v3103, 0
    %v3330 = vsel %vm77, %v3105, 0
    %v3333 = vsel %vm77, %v3296, 0
    %3335 = vmatpush.msra.mxu0 %v3313
    %3336 = vmatpush.msra.mxu0 %v3312
    %3337 = vmatpush.msra.mxu0 %v3311
    %3338 = vmatpush.msra.mxu0 %v3310
    %3339 = vmatpush.msra.mxu0 %v3309
    %3340 = vmatpush.msra.mxu0 %v3308
    %3341 = vmatpush.msra.mxu0 %v3307
    %3342 = vmatpush.msra.mxu0 %v3306
    %3343 = vmatpush.msra.mxu0 %v3305
    %3344 = vmatpush.msra.mxu0 %v3304
    %3345 = vmatpush.msra.mxu0 %v3303
    %3346 = vmatpush.msra.mxu0 %v3302
    %3347 = vmatpush.msra.mxu0 %v3301
    %3348 = vmatpush.msra.mxu0 %v3300
    %3349 = vmatpush.msra.mxu0 %v3299
    %3350 = vmatpush.msra.mxu0 %v3298
    %3351 = vmatmul.f32.gmra.mxu0 %v3092
    %v3352 = vpop.f32.mrf.mxu0
    %v3353 = vadd.f32 0.0, %v3352
    %3354 = vmatmul.f32.gmra.mxu0 %v3094
    %v3355 = vpop.f32.mrf.mxu0
    %v3356 = vadd.f32 0.0, %v3355
    %3357 = vmatmul.f32.gmra.mxu0 %v3096
    %v3358 = vpop.f32.mrf.mxu0
    %v3359 = vadd.f32 0.0, %v3358
    %3360 = vmatmul.f32.gmra.mxu0 %v3098
    %v3361 = vpop.f32.mrf.mxu0
    %v3362 = vadd.f32 0.0, %v3361
    %3363 = vmatmul.f32.gmra.mxu0 %v3100
    %v3364 = vpop.f32.mrf.mxu0
    %v3365 = vadd.f32 0.0, %v3364
    %3366 = vmatmul.f32.gmra.mxu0 %v3102
    %v3367 = vpop.f32.mrf.mxu0
    %v3368 = vadd.f32 0.0, %v3367
    %3369 = vmatmul.f32.gmra.mxu0 %v3104
    %v3370 = vpop.f32.mrf.mxu0
    %v3371 = vadd.f32 0.0, %v3370
    %3372 = vmatmul.f32.gmra.mxu0 %v3295
    %v3373 = vpop.f32.mrf.mxu0
    %v3374 = vadd.f32 0.0, %v3373
    %3375 = vdwg.mxu0
    %3376 = vmatpush.msra.mxu0 0.0
    %3377 = vmatpush.msra.mxu0 0.0
    %3378 = vmatpush.msra.mxu0 0.0
    %3379 = vmatpush.msra.mxu0 0.0
    %3380 = vmatpush.msra.mxu0 0.0
    %3381 = vmatpush.msra.mxu0 0.0
    %3382 = vmatpush.msra.mxu0 0.0
    %3383 = vmatpush.msra.mxu0 0.0
    %3384 = vmatpush.msra.mxu0 0.0
    %3385 = vmatpush.msra.mxu0 0.0
    %3386 = vmatpush.msra.mxu0 0.0
    %3387 = vmatpush.msra.mxu0 0.0
    %3388 = vmatpush.msra.mxu0 %v3317
    %3389 = vmatpush.msra.mxu0 %v3316
    %3390 = vmatpush.msra.mxu0 %v3315
    %3391 = vmatpush.msra.mxu0 %v3314
    %3392 = vmatmul.f32.gmra.mxu0 %v3318
    %v3393 = vpop.f32.mrf.mxu0
    %v3394 = vadd.f32 %v3353, %v3393
    %3395 = vmatmul.f32.gmra.mxu0 %v3320
    %v3396 = vpop.f32.mrf.mxu0
    %v3397 = vadd.f32 %v3356, %v3396
    %3398 = vmatmul.f32.gmra.mxu0 %v3322
    %v3399 = vpop.f32.mrf.mxu0
    %v3400 = vadd.f32 %v3359, %v3399
    %3401 = vmatmul.f32.gmra.mxu0 %v3324
    %v3402 = vpop.f32.mrf.mxu0
    %v3403 = vadd.f32 %v3362, %v3402
    %3404 = vmatmul.f32.gmra.mxu0 %v3326
    %v3405 = vpop.f32.mrf.mxu0
    %v3406 = vadd.f32 %v3365, %v3405
    %3407 = vmatmul.f32.gmra.mxu0 %v3328
    %v3408 = vpop.f32.mrf.mxu0
    %v3409 = vadd.f32 %v3368, %v3408
    %3410 = vmatmul.f32.gmra.mxu0 %v3330
    %v3411 = vpop.f32.mrf.mxu0
    %v3412 = vadd.f32 %v3371, %v3411
    %3413 = vmatmul.f32.gmra.mxu0 %v3333
    %v3414 = vpop.f32.mrf.mxu0
    %v3415 = vadd.f32 %v3374, %v3414
    %3416 = vdwg.mxu0
    %v3417 = vadd.f32 %v3287, %v3394
    %v3418 = vadd.f32 %v3288, %v3397
    %v3419 = vadd.f32 %v3289, %v3400
    %v3420 = vadd.f32 %v3290, %v3403
    %v3421 = vadd.f32 %v3291, %v3406
    %v3422 = vadd.f32 %v3292, %v3409
    %v3423 = vadd.f32 %v3293, %v3412
    %v3424 = vadd.f32 %v3294, %v3415
    %v3425 = vld [vmem:[%s6] sm:$0x1]
    %v3427 = vperm.slane %v3425, 0
    %v3429 = vadd.f32 %v3417, %v3427
    %v3430 = vadd.f32 %v3418, %v3427
    %v3431 = vadd.f32 %v3419, %v3427
    %v3432 = vadd.f32 %v3420, %v3427
    %v3433 = vadd.f32 %v3421, %v3427
    %v3434 = vadd.f32 %v3422, %v3427
    %v3435 = vadd.f32 %v3423, %v3427
    %v3436 = vadd.f32 %v3424, %v3427
    %v3437 = vmax.f32 %v3429, 0.0
    %v3438 = vmax.f32 %v3430, 0.0
    %v3439 = vmax.f32 %v3431, 0.0
    %v3440 = vmax.f32 %v3432, 0.0
    %v3441 = vmax.f32 %v3433, 0.0
    %v3442 = vmax.f32 %v3434, 0.0
    %v3443 = vmax.f32 %v3435, 0.0
    %v3444 = vmax.f32 %v3436, 0.0
    %v3445 = vld [vmem:[%s7] sm:$0xff]
    %v3446 = vld [vmem:[%s7 + $0x8] sm:$0xff]
    %v3447 = vld [vmem:[%s7 + $0x10] sm:$0xff]
    %v3448 = vld [vmem:[%s7 + $0x18] sm:$0xff]
    %v3449 = vld [vmem:[%s7 + $0x20] sm:$0xff]
    %v3450 = vld [vmem:[%s7 + $0x28] sm:$0xff]
    %v3451 = vld [vmem:[%s7 + $0x30] sm:$0xff]
    %v3452 = vld [vmem:[%s7 + $0x38] sm:$0xff]
    %v3453 = vld [vmem:[%s7 + $0x40] sm:$0xff]
    %v3454 = vld [vmem:[%s7 + $0x48] sm:$0xff]
    %v3455 = vld [vmem:[%s7 + $0x50] sm:$0xff]
    %v3456 = vld [vmem:[%s7 + $0x58] sm:$0xff]
    %v3457 = vld [vmem:[%s7 + $0x60] sm:$0xff]
    %v3458 = vld [vmem:[%s7 + $0x68] sm:$0xff]
    %v3459 = vld [vmem:[%s7 + $0x70] sm:$0xff]
    %v3460 = vld [vmem:[%s8] sm:$0x1]
    %v3462 = vperm.slane %v3460, 0
    %vm3464 = vcmask 982016
    %v3466 = vsel %vm3464, %v3437, 0
    %v3469 = vsel %vm3464, %v3438, 0
    %v3472 = vsel %vm3464, %v3439, 0
    %v3475 = vsel %vm3464, %v3440, 0
    %v3478 = vsel %vm3464, %v3441, 0
    %v3481 = vsel %vm3464, %v3442, 0
    %v3484 = vsel %vm3464, %v3443, 0
    %v3487 = vsel %vm3464, %v3444, 0
    %3489 = vmatpush.msra.mxu0 0.0
    %3490 = vmatpush.msra.mxu0 %v3459
    %3491 = vmatpush.msra.mxu0 %v3458
    %3492 = vmatpush.msra.mxu0 %v3457
    %3493 = vmatpush.msra.mxu0 %v3456
    %3494 = vmatpush.msra.mxu0 %v3455
    %3495 = vmatpush.msra.mxu0 %v3454
    %3496 = vmatpush.msra.mxu0 %v3453
    %3497 = vmatpush.msra.mxu0 %v3452
    %3498 = vmatpush.msra.mxu0 %v3451
    %3499 = vmatpush.msra.mxu0 %v3450
    %3500 = vmatpush.msra.mxu0 %v3449
    %3501 = vmatpush.msra.mxu0 %v3448
    %3502 = vmatpush.msra.mxu0 %v3447
    %3503 = vmatpush.msra.mxu0 %v3446
    %3504 = vmatpush.msra.mxu0 %v3445
    %3505 = vmatmul.f32.gmra.mxu0 %v3466
    %v3506 = vpop.f32.mrf.mxu0
    %v3507 = vadd.f32 %v3462, %v3506
    %3508 = vmatmul.f32.gmra.mxu0 %v3469
    %v3509 = vpop.f32.mrf.mxu0
    %v3510 = vadd.f32 %v3462, %v3509
    %3511 = vmatmul.f32.gmra.mxu0 %v3472
    %v3512 = vpop.f32.mrf.mxu0
    %v3513 = vadd.f32 %v3462, %v3512
    %3514 = vmatmul.f32.gmra.mxu0 %v3475
    %v3515 = vpop.f32.mrf.mxu0
    %v3516 = vadd.f32 %v3462, %v3515
    %3517 = vmatmul.f32.gmra.mxu0 %v3478
    %v3518 = vpop.f32.mrf.mxu0
    %v3519 = vadd.f32 %v3462, %v3518
    %3520 = vmatmul.f32.gmra.mxu0 %v3481
    %v3521 = vpop.f32.mrf.mxu0
    %v3522 = vadd.f32 %v3462, %v3521
    %3523 = vmatmul.f32.gmra.mxu0 %v3484
    %v3524 = vpop.f32.mrf.mxu0
    %v3525 = vadd.f32 %v3462, %v3524
    %3526 = vmatmul.f32.gmra.mxu0 %v3487
    %v3527 = vpop.f32.mrf.mxu0
    %v3528 = vadd.f32 %v3462, %v3527
    %3529 = vdwg.mxu0
    %v3530 = vmax.f32 %v3507, 0.0
    %v3531 = vmax.f32 %v3510, 0.0
    %v3532 = vmax.f32 %v3513, 0.0
    %v3533 = vmax.f32 %v3516, 0.0
    %v3534 = vmax.f32 %v3519, 0.0
    %v3535 = vmax.f32 %v3522, 0.0
    %v3536 = vmax.f32 %v3525, 0.0
    %v3537 = vmax.f32 %v3528, 0.0
    %v3538 = vld [vmem:[%s9] sm:$0xff]
    %v3539 = vld [vmem:[%s9 + $0x8] sm:$0xff]
    %v3540 = vld [vmem:[%s9 + $0x10] sm:$0xff]
    %v3541 = vld [vmem:[%s9 + $0x18] sm:$0xff]
    %v3542 = vld [vmem:[%s9 + $0x20] sm:$0xff]
    %v3543 = vld [vmem:[%s9 + $0x28] sm:$0xff]
    %v3544 = vld [vmem:[%s9 + $0x30] sm:$0xff]
    %v3545 = vld [vmem:[%s9 + $0x38] sm:$0xff]
    %v3546 = vld [vmem:[%s9 + $0x40] sm:$0xff]
    %v3547 = vld [vmem:[%s9 + $0x48] sm:$0xff]
    %v3548 = vld [vmem:[%s9 + $0x50] sm:$0xf]
    %v3549 = vld [vmem:[%s10] sm:$0x1]
    %v3551 = vperm.slane %v3549, 0
    %vm3553 = vcmask 687104
    %v3555 = vsel %vm3553, %v3530, 0
    %v3558 = vsel %vm3553, %v3531, 0
    %v3561 = vsel %vm3553, %v3532, 0
    %v3564 = vsel %vm3553, %v3533, 0
    %v3567 = vsel %vm3553, %v3534, 0
    %v3570 = vsel %vm3553, %v3535, 0
    %v3573 = vsel %vm3553, %v3536, 0
    %v3576 = vsel %vm3553, %v3537, 0
    %v3579 = vsel %vm1628, %v3548, 0
    %3581 = vmatpush.msra.mxu0 0.0
    %3582 = vmatpush.msra.mxu0 0.0
    %3583 = vmatpush.msra.mxu0 0.0
    %3584 = vmatpush.msra.mxu0 0.0
    %3585 = vmatpush.msra.mxu0 0.0
    %3586 = vmatpush.msra.mxu0 %v3579
    %3587 = vmatpush.msra.mxu0 %v3547
    %3588 = vmatpush.msra.mxu0 %v3546
    %3589 = vmatpush.msra.mxu0 %v3545
    %3590 = vmatpush.msra.mxu0 %v3544
    %3591 = vmatpush.msra.mxu0 %v3543
    %3592 = vmatpush.msra.mxu0 %v3542
    %3593 = vmatpush.msra.mxu0 %v3541
    %3594 = vmatpush.msra.mxu0 %v3540
    %3595 = vmatpush.msra.mxu0 %v3539
    %3596 = vmatpush.msra.mxu0 %v3538
    %3597 = vmatmul.f32.gmra.mxu0 %v3555
    %v3598 = vpop.f32.mrf.mxu0
    %v3599 = vadd.f32 %v3551, %v3598
    %3600 = vmatmul.f32.gmra.mxu0 %v3558
    %v3601 = vpop.f32.mrf.mxu0
    %3602 = vmatmul.f32.gmra.mxu0 %v3561
    %v3603 = vpop.f32.mrf.mxu0
    %3604 = vmatmul.f32.gmra.mxu0 %v3564
    %v3605 = vpop.f32.mrf.mxu0
    %3606 = vmatmul.f32.gmra.mxu0 %v3567
    %v3607 = vpop.f32.mrf.mxu0
    %v3608 = vadd.f32 %v3551, %v3607
    %3609 = vmatmul.f32.gmra.mxu0 %v3570
    %v3610 = vpop.f32.mrf.mxu0
    %3611 = vmatmul.f32.gmra.mxu0 %v3573
    %v3612 = vpop.f32.mrf.mxu0
    %3613 = vmatmul.f32.gmra.mxu0 %v3576
    %v3614 = vpop.f32.mrf.mxu0
    %3615 = vdwg.mxu0
    %3616 = vst [vmem:[#allocation6] sm:$0x1] %v3599
    %3617 = vst [vmem:[#allocation6 + $0x1] sm:$0x1] %v3608
    // Predicated region
    $region46: #{lenet5_forward.1} parent=1 // pred_check
      _
    $region47: #{lenet5_forward.1} parent=1 // pred_check_branch
      %3619 = sbr.rel (0) target = $region49
    $region48: #{lenet5_forward.1} parent=1 // pred_region
      %3621 = vsyncadd [#allocation7], 0
      %s3623 = sshll.u32 [#allocation6], 4
      %s3624 = int_to_ptr.vmem [resolvable:$true] %s3623
      %s3625 = sshll.u32 %s11, 4
      %s3626 = int_to_ptr.hbm [resolvable:$true] %s3625
      %3628 = dma.vmem_to_hbm [thread:$0]  %s3624, 32, %s3626, [#allocation7]
    $region49: #{lenet5_forward.1} parent=1 // pred_fallthru
      _
    // Predicated region
    $region50: #{lenet5_forward.1} parent=1 // pred_check
      _
    $region51: #{lenet5_forward.1} parent=1 // pred_check_branch
      %3630 = sbr.rel (0) target = $region53
    $region52: #{lenet5_forward.1} parent=1 // pred_region
      %3632 = dma.done [#allocation7], 32
    $region53: #{lenet5_forward.1} parent=1 // pred_fallthru
      _
    %3633 = vsyncpa [#allocation7], 1

</llo_original>
